<compile_context>
chip_gen: v5e
topology: v5e:2x2
jax: 0.10.0
libtpu: 0.0.40
codegen_flags: <defaults>
</compile_context>

<pallas_src>
import functools

import jax
import jax.numpy as jnp
from jax.experimental import pallas as pl
from jax.experimental.pallas import tpu as pltpu

# ----------------------------- model hyper-params (scaled down) ---------------
B = 2            # batch
T = 8            # text sequence length
VOCAB = 128      # decoder num_tokens (orig 50304) -- 128 keeps the logits store lane-dense
D = 32           # decoder model dim (orig 2048)
HEADS = 2        # decoder heads (orig 8)
DH = 16          # decoder dim_head (orig 128)
DEPTH = 2        # decoder depth (orig 16)
FF = 4 * D       # decoder ff inner

D_IMG = 16       # perceiver dim (orig 1024)
N_IMG_TOK = 8    # image tokens per "frame" (orig 1024)
TIMES = 3        # reference views the resized image as (B, 3, S, S)
L = 4            # perceiver num_latents (orig 64)
P_HEADS = 2      # perceiver heads
P_DH = 8         # perceiver dim_head (orig 8)
P_DEPTH = 2      # perceiver depth (orig 2)
NUM_MEDIA = 8    # perceiver num_media_embeds (orig 257)

IMG_H = IMG_W = 8
IMG_IN = 1 * IMG_H * IMG_W                  # orig 224*224
IMG_RESIZE_OUT = TIMES * N_IMG_TOK * D_IMG  # orig 1024*1024 analogue (self-consistent)

EPS = 1e-5
NEG_BIG = -1e30  # finite causal-mask value (kept in f32)


# ------------------------------- small helpers ----------------------------------
def _ln(x, g, b, eps):
    mu = jnp.mean(x, axis=-1, keepdims=True)
    var = jnp.mean((x - mu) ** 2, axis=-1, keepdims=True)
    return (x - mu) * jax.lax.rsqrt(var + eps) * g + b


# ------------------------------- Pallas kernels ----------------------------------
def _linear_bias_kernel(x_ref, w_ref, b_ref, o_ref):
    """Whole-array x @ w + b (image_resize)."""
    o_ref[...] = jnp.dot(x_ref[...], w_ref[...],
                         preferred_element_type=jnp.float32) + b_ref[...]


def _decoder_stack_kernel(x0_ref, cos_ref, sin_ref,
                          lng_ref, lnb_ref, wf_ref, wo_ref, wd_ref,
                          fng_ref, fnb_ref, wlog_ref,
                          o_ref, x_scr,
                          *, batch, seq, heads, dim_head, ff, eps):
    """grid=(DEPTH,): one PaLM parallel block per grid step, activations resident in
    VMEM scratch; final LayerNorm + logits head fused into the last step."""
    layer = pl.program_id(0)
    last = pl.num_programs(0) - 1
    bt = batch * seq
    inner = heads * dim_head
    half = dim_head // 2
    dm = x0_ref.shape[-1]

    @pl.when(layer == 0)
    def _():
        x_scr[...] = x0_ref[...]

    x = x_scr[...]
    h = _ln(x, lng_ref[...], lnb_ref[...], eps)

    # Fused [gate | up | q | k | v] projection (bf16 weights, f32 accumulation).
    fused = jnp.dot(h.astype(jnp.bfloat16), wf_ref[...],
                    preferred_element_type=jnp.float32)
    g = fused[:, :ff]
    u = fused[:, ff:2 * ff]
    q = fused[:, 2 * ff:2 * ff + inner]
    k = fused[:, 2 * ff + inner:2 * ff + 2 * inner]
    v = fused[:, 2 * ff + 2 * inner:]

    # RoPE: cos/sin tables come in as (seq, inner); broadcast over batch once here.
    cos = jnp.concatenate([cos_ref[...]] * batch, axis=0)     # (bt, inner)
    sin = jnp.concatenate([sin_ref[...]] * batch, axis=0)
    lane = jax.lax.broadcasted_iota(jnp.int32, (bt, inner), 1)
    upper = (lane % dim_head) >= half

    def rope(t):
        # per-head rotate-half via two XLU lane rotations + a select (no MXU work).
        rot = jnp.where(upper,
                        pltpu.roll(t, half, axis=1),
                        pltpu.roll(t, inner - half, axis=1))
        return t * cos + rot * sin

    q = rope(q)
    k = rope(k)

    q3 = q.reshape(batch, seq, inner)       # minor-dim-preserving reshapes only
    k3 = k.reshape(batch, seq, inner)
    v3 = v.reshape(batch, seq, inner)

    qi = jax.lax.broadcasted_iota(jnp.int32, (1, seq, seq), 1)
    ki = jax.lax.broadcasted_iota(jnp.int32, (1, seq, seq), 2)
    causal = ki <= qi

    scale = dim_head ** -0.5
    wo = wo_ref[...]
    attn = jnp.zeros((bt, dm), jnp.float32)
    # TODO(synk): at original scale (HEADS=8, DH=128) merge (batch, head) into the
    # einsum batch dim instead of this static unroll; Mosaic dot_general as used here
    # supports a single batch dimension, so heads stay unrolled at toy size.
    for hh in range(heads):
        lo, hi = hh * dim_head, (hh + 1) * dim_head
        s = jnp.einsum('bqd,bkd->bqk', q3[:, :, lo:hi], k3[:, :, lo:hi],
                       preferred_element_type=jnp.float32) * scale
        s = jnp.where(causal, s, NEG_BIG)
        m = jnp.max(s, axis=-1, keepdims=True)
        p = jnp.exp(s - m)
        den = jnp.sum(p, axis=-1, keepdims=True)
        oh = jnp.einsum('bqk,bkd->bqd', p, v3[:, :, lo:hi],
                        preferred_element_type=jnp.float32)
        oh = oh * pl.reciprocal(den, approx=True)
        # concat(o_h) @ Wo == sum_h o_h @ Wo[h] -> no lane concat materialized.
        attn = attn + jnp.dot(oh.reshape(bt, dim_head).astype(jnp.bfloat16),
                              wo[lo:hi, :], preferred_element_type=jnp.float32)

    hidden = jax.nn.silu(g) * u                                # SwiGLU (f32)
    ff_out = jnp.dot(hidden.astype(jnp.bfloat16), wd_ref[...],
                     preferred_element_type=jnp.float32)

    x_new = x + attn + ff_out
    x_scr[...] = x_new

    @pl.when(layer == last)
    def _():
        hf = _ln(x_new, fng_ref[...], fnb_ref[...], eps)
        o_ref[...] = jnp.dot(hf.astype(jnp.bfloat16), wlog_ref[...],
                             preferred_element_type=jnp.float32)


def _perceiver_stack_kernel(x_ref, lat0_ref,
                            lnxg_ref, lnxb_ref, lnlg_ref, lnlb_ref,
                            wq_ref, wkv_ref, wo_ref,
                            ffg_ref, ffb_ref, w1_ref, b1_ref, w2_ref, b2_ref,
                            png_ref, pnb_ref, wproj_ref,
                            o_ref, lat_scr,
                            *, groups, n_media, n_lat, heads, dim_head, eps):
    """grid=(P_DEPTH,): one Perceiver layer per step (cross-attn over [media;latents]
    with a joint two-block softmax, then FF), latents resident in VMEM scratch;
    final LayerNorm + image_proj fused into the last step."""
    layer = pl.program_id(0)
    last = pl.num_programs(0) - 1
    inner = heads * dim_head
    d = x_ref.shape[-1]

    @pl.when(layer == 0)
    def _():
        lat_scr[...] = lat0_ref[...]

    lat = lat_scr[...]
    xn = _ln(x_ref[...], lnxg_ref[...], lnxb_ref[...], eps)
    lnl = _ln(lat, lnlg_ref[...], lnlb_ref[...], eps)

    q = jnp.dot(lnl.astype(jnp.bfloat16), wq_ref[...],
                preferred_element_type=jnp.float32)                     # (M*L, inner)
    kv_x = jnp.dot(xn.astype(jnp.bfloat16), wkv_ref[...],
                   preferred_element_type=jnp.float32)                  # (M*n, 2*inner)
    kv_l = jnp.dot(lnl.astype(jnp.bfloat16), wkv_ref[...],
                   preferred_element_type=jnp.float32)                  # (M*L, 2*inner)

    q3 = q.reshape(groups, n_lat, inner)
    kx3 = kv_x[:, :inner].reshape(groups, n_media, inner)
    vx3 = kv_x[:, inner:].reshape(groups, n_media, inner)
    kl3 = kv_l[:, :inner].reshape(groups, n_lat, inner)
    vl3 = kv_l[:, inner:].reshape(groups, n_lat, inner)

    scale = dim_head ** -0.5
    wo = wo_ref[...]
    attn = jnp.zeros((groups * n_lat, d), jnp.float32)
    for hh in range(heads):                                            # tiny static unroll
        lo, hi = hh * dim_head, (hh + 1) * dim_head
        qh = q3[:, :, lo:hi]
        s_x = jnp.einsum('mqd,mkd->mqk', qh, kx3[:, :, lo:hi],
                         preferred_element_type=jnp.float32) * scale
        s_l = jnp.einsum('mqd,mkd->mqk', qh, kl3[:, :, lo:hi],
                         preferred_element_type=jnp.float32) * scale
        mx = jnp.maximum(jnp.max(s_x, axis=-1, keepdims=True),
                         jnp.max(s_l, axis=-1, keepdims=True))
        p_x = jnp.exp(s_x - mx)
        p_l = jnp.exp(s_l - mx)
        den = (jnp.sum(p_x, axis=-1, keepdims=True)
               + jnp.sum(p_l, axis=-1, keepdims=True))
        oh = (jnp.einsum('mqk,mkd->mqd', p_x, vx3[:, :, lo:hi],
                         preferred_element_type=jnp.float32)
              + jnp.einsum('mqk,mkd->mqd', p_l, vl3[:, :, lo:hi],
                           preferred_element_type=jnp.float32))
        oh = oh * pl.reciprocal(den, approx=True)
        attn = attn + jnp.dot(oh.reshape(groups * n_lat, dim_head).astype(jnp.bfloat16),
                              wo[lo:hi, :], preferred_element_type=jnp.float32)

    lat = lat + attn                                                    # residual

    hf = _ln(lat, ffg_ref[...], ffb_ref[...], eps)
    hf = jax.nn.gelu(jnp.dot(hf.astype(jnp.bfloat16), w1_ref[...],
                             preferred_element_type=jnp.float32) + b1_ref[...])
    lat = lat + jnp.dot(hf.astype(jnp.bfloat16), w2_ref[...],
                        preferred_element_type=jnp.float32) + b2_ref[...]
    lat_scr[...] = lat

    @pl.when(layer == last)
    def _():
        pn = _ln(lat, png_ref[...], pnb_ref[...], eps)
        o_ref[...] = jnp.dot(pn.astype(jnp.bfloat16), wproj_ref[...],
                             preferred_element_type=jnp.float32)        # (M*L, D)


# ------------------------------- kernel wrappers --------------------------------
def image_resize(x, w, b):
    return pl.pallas_call(
        _linear_bias_kernel,
        out_shape=jax.ShapeDtypeStruct((x.shape[0], w.shape[1]), jnp.float32),
    )(x, w, b)


def rope_tables(seq):
    """cos/sin tables for rotate-half RoPE, shape (seq, HEADS*DH); the rotate-half
    sign is folded into sin so the kernel only needs muls/adds + two rolls."""
    half = DH // 2
    inv_freq = 1.0 / (10000.0 ** (jnp.arange(half, dtype=jnp.float32) / half))
    freqs = jnp.arange(seq, dtype=jnp.float32)[:, None] * inv_freq[None, :]  # (T, half)
    cos_h = jnp.concatenate([jnp.cos(freqs), jnp.cos(freqs)], axis=-1)       # (T, DH)
    sin_h = jnp.concatenate([-jnp.sin(freqs), jnp.sin(freqs)], axis=-1)      # (T, DH)
    cos_t = jnp.tile(cos_h, (1, HEADS))                                      # (T, inner)
    sin_t = jnp.tile(sin_h, (1, HEADS))
    return cos_t, sin_t


def palm_forward(dec, tokens):
    """PaLM decoder: all DEPTH layers + final norm + logits head in one pallas_call."""
    Bb, Tt = tokens.shape
    bt = Bb * Tt
    inner = HEADS * DH
    wf_cols = 2 * FF + 3 * inner
    x0 = dec["emb"][tokens].reshape(bt, D)            # glue: embedding gather
    cos_t, sin_t = rope_tables(Tt)

    grid_spec = pltpu.PrefetchScalarGridSpec(
        num_scalar_prefetch=0,
        grid=(DEPTH,),
        in_specs=[
            pl.BlockSpec((bt, D), lambda l: (0, 0)),               # x0 (resident)
            pl.BlockSpec((Tt, inner), lambda l: (0, 0)),           # cos
            pl.BlockSpec((Tt, inner), lambda l: (0, 0)),           # sin
            pl.BlockSpec((None, 1, D), lambda l: (l, 0, 0)),       # ln_g[l]
            pl.BlockSpec((None, 1, D), lambda l: (l, 0, 0)),       # ln_b[l]
            pl.BlockSpec((None, D, wf_cols), lambda l: (l, 0, 0)),  # w_guqkv[l]
            pl.BlockSpec((None, inner, D), lambda l: (l, 0, 0)),   # wo[l]
            pl.BlockSpec((None, FF, D), lambda l: (l, 0, 0)),      # wd[l]
            pl.BlockSpec((1, D), lambda l: (0, 0)),                # final norm g
            pl.BlockSpec((1, D), lambda l: (0, 0)),                # final norm b
            pl.BlockSpec((D, VOCAB), lambda l: (0, 0)),            # logits head
        ],
        out_specs=pl.BlockSpec((bt, VOCAB), lambda l: (0, 0)),
        scratch_shapes=[pltpu.VMEM((bt, D), jnp.float32)],         # resident activations
    )
    logits = pl.pallas_call(
        functools.partial(_decoder_stack_kernel, batch=Bb, seq=Tt, heads=HEADS,
                          dim_head=DH, ff=FF, eps=EPS),
        grid_spec=grid_spec,
        out_shape=jax.ShapeDtypeStruct((bt, VOCAB), jnp.float32),
        compiler_params=pltpu.CompilerParams(dimension_semantics=("arbitrary",)),
    )(x0, cos_t, sin_t, dec["ln_g"], dec["ln_b"], dec["w_guqkv"], dec["wo"],
      dec["wd"], dec["fn_g"], dec["fn_b"], dec["w_logits"])
    return logits.reshape(Bb, Tt, VOCAB)


def perceiver_project(perc, x, image_proj_w):
    """PerceiverResampler (all layers) + final norm + image_proj in one pallas_call.
    Returns the flattened image features (B, TIMES*L*D)."""
    Bb, Tt, n, d = x.shape
    x = x + perc["media_pos"][:Tt][None, :, None, :]               # glue: pos-embed add
    m = Bb * Tt
    inner = P_HEADS * P_DH
    x2 = x.reshape(m * n, d)
    lat0 = jnp.tile(perc["latents"], (m, 1))                       # (m*L, d)

    grid_spec = pltpu.PrefetchScalarGridSpec(
        num_scalar_prefetch=0,
        grid=(P_DEPTH,),
        in_specs=[
            pl.BlockSpec((m * n, d), lambda l: (0, 0)),            # media (resident)
            pl.BlockSpec((m * L, d), lambda l: (0, 0)),            # latents init
            pl.BlockSpec((None, 1, d), lambda l: (l, 0, 0)),       # ln_x g
            pl.BlockSpec((None, 1, d), lambda l: (l, 0, 0)),       # ln_x b
            pl.BlockSpec((None, 1, d), lambda l: (l, 0, 0)),       # ln_lat g
            pl.BlockSpec((None, 1, d), lambda l: (l, 0, 0)),       # ln_lat b
            pl.BlockSpec((None, d, inner), lambda l: (l, 0, 0)),   # wq
            pl.BlockSpec((None, d, 2 * inner), lambda l: (l, 0, 0)),  # wkv
            pl.BlockSpec((None, inner, d), lambda l: (l, 0, 0)),   # wo
            pl.BlockSpec((None, 1, d), lambda l: (l, 0, 0)),       # ff ln g
            pl.BlockSpec((None, 1, d), lambda l: (l, 0, 0)),       # ff ln b
            pl.BlockSpec((None, d, 4 * d), lambda l: (l, 0, 0)),   # w1
            pl.BlockSpec((None, 1, 4 * d), lambda l: (l, 0, 0)),   # b1
            pl.BlockSpec((None, 4 * d, d), lambda l: (l, 0, 0)),   # w2
            pl.BlockSpec((None, 1, d), lambda l: (l, 0, 0)),       # b2
            pl.BlockSpec((1, d), lambda l: (0, 0)),                # final norm g
            pl.BlockSpec((1, d), lambda l: (0, 0)),                # final norm b
            pl.BlockSpec((d, D), lambda l: (0, 0)),                # image_proj_w
        ],
        out_specs=pl.BlockSpec((m * L, D), lambda l: (0, 0)),
        scratch_shapes=[pltpu.VMEM((m * L, d), jnp.float32)],      # resident latents
    )
    proj = pl.pallas_call(
        functools.partial(_perceiver_stack_kernel, groups=m, n_media=n, n_lat=L,
                          heads=P_HEADS, dim_head=P_DH, eps=EPS),
        grid_spec=grid_spec,
        out_shape=jax.ShapeDtypeStruct((m * L, D), jnp.float32),
        compiler_params=pltpu.CompilerParams(dimension_semantics=("arbitrary",)),
    )(x2, lat0,
      perc["ln_x_g"], perc["ln_x_b"], perc["ln_l_g"], perc["ln_l_b"],
      perc["wq"], perc["wkv"], perc["wo"],
      perc["ff_g"], perc["ff_b"], perc["w1"], perc["b1"], perc["w2"], perc["b2"],
      perc["norm_g"], perc["norm_b"], image_proj_w)
    return proj.reshape(Bb, Tt * L * D)                            # images.view(B, -1)


# ------------------------------- PALME.forward ----------------------------------
def palme_forward(params, text_tokens, images):
    Bb = images.shape[0]
    imgs = images.reshape(Bb, -1)                                          # images.view(B, -1)
    imgs = image_resize(imgs, params["img_resize_w"], params["img_resize_b"])  # self.image_resize
    imgs = imgs.reshape(Bb, TIMES, N_IMG_TOK, D_IMG)                       # .view(B, 3, ., .)
    # self.perceive(images) -> final LayerNorm -> self.image_proj, fused; the reference
    # .squeeze(1) is a no-op because TIMES == 3.
    images_flattened = perceiver_project(params["perceive"], imgs, params["image_proj_w"])
    model_input = palm_forward(params["decoder"], text_tokens)             # self.decoder(text_tokens)
    # TODO(synk): the reference then concatenates decoder logits with the flattened image
    # features along dim=-1 with mismatched batch/seq dims and re-feeds float tensors into a
    # token-id decoder (decoder(model_input, tokens_mask=None) / passed_x=...); that path
    # raises in PyTorch (forward returns None), so it is not reproduced here.
    return model_input, images_flattened


# ------------------------------- params -----------------------------------------
def init_palme_params(key):
    keys = iter(jax.random.split(key, 160))

    def nrm(shape, std):
        return jax.random.normal(next(keys), shape, jnp.float32) * std

    params = {
        "img_resize_w": nrm((IMG_IN, IMG_RESIZE_OUT), IMG_IN ** -0.5),
        "img_resize_b": jnp.zeros((1, IMG_RESIZE_OUT), jnp.float32),
        "image_proj_w": nrm((D_IMG, D), D ** -0.5).astype(jnp.bfloat16),  # no bias
    }

    inner_p = P_HEADS * P_DH
    perc = {
        "media_pos": nrm((NUM_MEDIA, D_IMG), 0.02),
        "latents": nrm((L, D_IMG), 0.02),
        "norm_g": jnp.ones((1, D_IMG), jnp.float32),
        "norm_b": jnp.zeros((1, D_IMG), jnp.float32),
        "ln_x_g": jnp.ones((P_DEPTH, 1, D_IMG), jnp.float32),
        "ln_x_b": jnp.zeros((P_DEPTH, 1, D_IMG), jnp.float32),
        "ln_l_g": jnp.ones((P_DEPTH, 1, D_IMG), jnp.float32),
        "ln_l_b": jnp.zeros((P_DEPTH, 1, D_IMG), jnp.float32),
        "wq": jnp.stack([nrm((D_IMG, inner_p), D_IMG ** -0.5)
                         for _ in range(P_DEPTH)]).astype(jnp.bfloat16),
        "wkv": jnp.stack([jnp.concatenate(
            [nrm((D_IMG, inner_p), D_IMG ** -0.5),
             nrm((D_IMG, inner_p), D_IMG ** -0.5)], axis=1)
            for _ in range(P_DEPTH)]).astype(jnp.bfloat16),
        "wo": jnp.stack([nrm((inner_p, D_IMG), inner_p ** -0.5)
                         for _ in range(P_DEPTH)]).astype(jnp.bfloat16),
        "ff_g": jnp.ones((P_DEPTH, 1, D_IMG), jnp.float32),
        "ff_b": jnp.zeros((P_DEPTH, 1, D_IMG), jnp.float32),
        "w1": jnp.stack([nrm((D_IMG, 4 * D_IMG), D_IMG ** -0.5)
                         for _ in range(P_DEPTH)]).astype(jnp.bfloat16),
        "b1": jnp.zeros((P_DEPTH, 1, 4 * D_IMG), jnp.float32),
        "w2": jnp.stack([nrm((4 * D_IMG, D_IMG), (4 * D_IMG) ** -0.5)
                         for _ in range(P_DEPTH)]).astype(jnp.bfloat16),
        "b2": jnp.zeros((P_DEPTH, 1, D_IMG), jnp.float32),
    }
    params["perceive"] = perc

    inner_d = HEADS * DH
    dec = {
        "emb": nrm((VOCAB, D), 0.02),
        "ln_g": jnp.ones((DEPTH, 1, D), jnp.float32),
        "ln_b": jnp.zeros((DEPTH, 1, D), jnp.float32),
        # fused projection per layer, layout [gate | up | q | k | v]
        "w_guqkv": jnp.stack([jnp.concatenate(
            [nrm((D, FF), D ** -0.5), nrm((D, FF), D ** -0.5),
             nrm((D, inner_d), D ** -0.5), nrm((D, inner_d), D ** -0.5),
             nrm((D, inner_d), D ** -0.5)], axis=1)
            for _ in range(DEPTH)]).astype(jnp.bfloat16),
        "wo": jnp.stack([nrm((inner_d, D), inner_d ** -0.5)
                         for _ in range(DEPTH)]).astype(jnp.bfloat16),
        "wd": jnp.stack([nrm((FF, D), FF ** -0.5)
                         for _ in range(DEPTH)]).astype(jnp.bfloat16),
        "fn_g": jnp.ones((1, D), jnp.float32),
        "fn_b": jnp.zeros((1, D), jnp.float32),
        "w_logits": nrm((D, VOCAB), D ** -0.5).astype(jnp.bfloat16),
    }
    params["decoder"] = dec
    # Note: CLIP ViT, bitsandbytes Embedding, PositionalEmbedding and output_projection are
    # constructed in PALME.__init__ but never used in forward; they are omitted here.
    return params


# ------------------------------- main --------------------------------------------
if __name__ == "__main__":
    key = jax.random.PRNGKey(0)
    k_params, k_tok, k_img = jax.random.split(key, 3)
    params = init_palme_params(k_params)

    text_tokens = jax.random.randint(k_tok, (B, T), 0, VOCAB, dtype=jnp.int32)
    images = jax.random.normal(k_img, (B, 1, IMG_H, IMG_W), jnp.float32)  # NCHW

    fwd = jax.jit(palme_forward)
    logits, img_flat = fwd(params, text_tokens, images)
    jax.block_until_ready((logits, img_flat))
    assert logits.shape == (B, T, VOCAB)
    assert img_flat.shape == (B, TIMES * L * D)
    print("KERNEL_OK")
</pallas_src>

<mosaic_0001>
module attributes {stable_mosaic.version = 11 : i64} {
  func.func @_decoder_stack_kernel(%arg0: i32, %arg1: memref<16x32xf32, #tpu.memory_space<vmem>>, %arg2: memref<8x32xf32, #tpu.memory_space<vmem>>, %arg3: memref<8x32xf32, #tpu.memory_space<vmem>>, %arg4: memref<1x1x32xf32, #tpu.memory_space<vmem>>, %arg5: memref<1x1x32xf32, #tpu.memory_space<vmem>>, %arg6: memref<1x32x352xbf16, #tpu.memory_space<vmem>>, %arg7: memref<1x32x32xbf16, #tpu.memory_space<vmem>>, %arg8: memref<1x128x32xbf16, #tpu.memory_space<vmem>>, %arg9: memref<1x32xf32, #tpu.memory_space<vmem>>, %arg10: memref<1x32xf32, #tpu.memory_space<vmem>>, %arg11: memref<32x128xbf16, #tpu.memory_space<vmem>>, %arg12: memref<16x128xf32, #tpu.memory_space<vmem>>, %arg13: memref<16x32xf32, #tpu.memory_space<vmem>>) attributes {dimension_semantics = [#tpu.dimension_semantics<arbitrary>], iteration_bounds = array<i64: 2>, scalar_prefetch = 0 : i64, scratch_operands = 1 : i64, tpu.core_type = #tpu.core_type<tc>, window_params = [{pipeline_mode = #tpu.pipeline_mode<synchronous>, transform_indices = @transform_0, window_bounds = array<i64: 16, 32>}, {pipeline_mode = #tpu.pipeline_mode<synchronous>, transform_indices = @transform_1, window_bounds = array<i64: 8, 32>}, {pipeline_mode = #tpu.pipeline_mode<synchronous>, transform_indices = @transform_2, window_bounds = array<i64: 8, 32>}, {transform_indices = @transform_3, window_bounds = array<i64: 1, 1, 32>}, {transform_indices = @transform_4, window_bounds = array<i64: 1, 1, 32>}, {transform_indices = @transform_5, window_bounds = array<i64: 1, 32, 352>}, {transform_indices = @transform_6, window_bounds = array<i64: 1, 32, 32>}, {transform_indices = @transform_7, window_bounds = array<i64: 1, 128, 32>}, {pipeline_mode = #tpu.pipeline_mode<synchronous>, transform_indices = @transform_8, window_bounds = array<i64: 1, 32>}, {pipeline_mode = #tpu.pipeline_mode<synchronous>, transform_indices = @transform_9, window_bounds = array<i64: 1, 32>}, {pipeline_mode = #tpu.pipeline_mode<synchronous>, transform_indices = @transform_10, window_bounds = array<i64: 32, 128>}, {pipeline_mode = #tpu.pipeline_mode<synchronous>, transform_indices = @transform_11, window_bounds = array<i64: 16, 128>}]} {
    %c0_i32 = arith.constant 0 : i32
    %0 = arith.cmpi eq, %arg0, %c0_i32 : i32
    %1 = arith.extui %0 : i1 to i32
    %c0_i32_0 = arith.constant 0 : i32
    %2 = arith.cmpi ne, %1, %c0_i32_0 : i32
    scf.if %2 {
      %c0_54 = arith.constant 0 : index
      %c0_55 = arith.constant 0 : index
      %152 = vector.load %arg1[%c0_54, %c0_55] : memref<16x32xf32, #tpu.memory_space<vmem>>, vector<16x32xf32>
      %c0_56 = arith.constant 0 : index
      %c0_57 = arith.constant 0 : index
      %153 = vector.load %arg13[%c0_56, %c0_57] : memref<16x32xf32, #tpu.memory_space<vmem>>, vector<16x32xf32>
      tpu.vector_store %arg13[%c0_56, %c0_57], %152 {strides = array<i32>} : memref<16x32xf32, #tpu.memory_space<vmem>>, vector<16x32xf32>,
    } else {
    }
    %c0 = arith.constant 0 : index
    %c0_1 = arith.constant 0 : index
    %3 = vector.load %arg13[%c0, %c0_1] : memref<16x32xf32, #tpu.memory_space<vmem>>, vector<16x32xf32>
    %c0_2 = arith.constant 0 : index
    %c0_3 = arith.constant 0 : index
    %c0_4 = arith.constant 0 : index
    %4 = vector.load %arg4[%c0_2, %c0_3, %c0_4] : memref<1x1x32xf32, #tpu.memory_space<vmem>>, vector<1x1x32xf32>
    %5 = vector.shape_cast %4 : vector<1x1x32xf32> to vector<1x32xf32>
    %c0_5 = arith.constant 0 : index
    %c0_6 = arith.constant 0 : index
    %c0_7 = arith.constant 0 : index
    %6 = vector.load %arg5[%c0_5, %c0_6, %c0_7] : memref<1x1x32xf32, #tpu.memory_space<vmem>>, vector<1x1x32xf32>
    %7 = vector.shape_cast %6 : vector<1x1x32xf32> to vector<1x32xf32>
    %cst = arith.constant dense<0.000000e+00> : vector<16xf32>
    %8 = vector.multi_reduction <add>, %3, %cst [1] : vector<16x32xf32> to vector<16xf32>
    %9 = vector.shape_cast %8 : vector<16xf32> to vector<16x1xf32>
    %cst_8 = arith.constant 3.200000e+01 : f32
    %10 = vector.broadcast %cst_8 : f32 to vector<16x1xf32>
    %11 = arith.divf %9, %10 : vector<16x1xf32>
    %12 = vector.broadcast %11 : vector<16x1xf32> to vector<16x32xf32>
    %13 = arith.subf %3, %12 : vector<16x32xf32>
    %14 = arith.mulf %13, %13 : vector<16x32xf32>
    %cst_9 = arith.constant dense<0.000000e+00> : vector<16xf32>
    %15 = vector.multi_reduction <add>, %14, %cst_9 [1] : vector<16x32xf32> to vector<16xf32>
    %16 = vector.shape_cast %15 : vector<16xf32> to vector<16x1xf32>
    %cst_10 = arith.constant 3.200000e+01 : f32
    %17 = vector.broadcast %cst_10 : f32 to vector<16x1xf32>
    %18 = arith.divf %16, %17 : vector<16x1xf32>
    %19 = vector.broadcast %11 : vector<16x1xf32> to vector<16x32xf32>
    %20 = arith.subf %3, %19 : vector<16x32xf32>
    %cst_11 = arith.constant 9.99999974E-6 : f32
    %21 = vector.broadcast %cst_11 : f32 to vector<16x1xf32>
    %22 = arith.addf %18, %21 : vector<16x1xf32>
    %23 = math.rsqrt %22 : vector<16x1xf32>
    %24 = vector.broadcast %23 : vector<16x1xf32> to vector<16x32xf32>
    %25 = arith.mulf %20, %24 : vector<16x32xf32>
    %26 = vector.broadcast %5 : vector<1x32xf32> to vector<16x32xf32>
    %27 = arith.mulf %25, %26 : vector<16x32xf32>
    %28 = vector.broadcast %7 : vector<1x32xf32> to vector<16x32xf32>
    %29 = arith.addf %27, %28 : vector<16x32xf32>
    %30 = arith.truncf %29 : vector<16x32xf32> to vector<16x32xbf16>
    %c0_12 = arith.constant 0 : index
    %c0_13 = arith.constant 0 : index
    %c0_14 = arith.constant 0 : index
    %31 = vector.load %arg6[%c0_12, %c0_13, %c0_14] : memref<1x32x352xbf16, #tpu.memory_space<vmem>>, vector<1x32x352xbf16>
    %32 = vector.shape_cast %31 : vector<1x32x352xbf16> to vector<32x352xbf16>
    %cst_15 = arith.constant dense<0.000000e+00> : vector<16x352xf32>
    %33 = tpu.matmul %30, %32, %cst_15 {dimension_numbers = #tpu.dot_dimension_numbers<[1], [0], [0], [1], [0, 0, 1, 1], [], []>} : vector<16x32xbf16>, vector<32x352xbf16>, vector<16x352xf32> -> vector<16x352xf32>
    %34 = vector.extract_strided_slice %33 {offsets = [0, 0], sizes = [16, 128], strides = [1, 1]} : vector<16x352xf32> to vector<16x128xf32>
    %35 = vector.extract_strided_slice %33 {offsets = [0, 128], sizes = [16, 128], strides = [1, 1]} : vector<16x352xf32> to vector<16x128xf32>
    %36 = vector.extract_strided_slice %33 {offsets = [0, 256], sizes = [16, 32], strides = [1, 1]} : vector<16x352xf32> to vector<16x32xf32>
    %37 = vector.extract_strided_slice %33 {offsets = [0, 288], sizes = [16, 32], strides = [1, 1]} : vector<16x352xf32> to vector<16x32xf32>
    %38 = vector.extract_strided_slice %33 {offsets = [0, 320], sizes = [16, 32], strides = [1, 1]} : vector<16x352xf32> to vector<16x32xf32>
    %c0_16 = arith.constant 0 : index
    %c0_17 = arith.constant 0 : index
    %39 = vector.load %arg2[%c0_16, %c0_17] : memref<8x32xf32, #tpu.memory_space<vmem>>, vector<8x32xf32>
    %40 = tpu.concatenate %39, %39 in 0 : vector<8x32xf32>, vector<8x32xf32> -> vector<16x32xf32>
    %c0_18 = arith.constant 0 : index
    %c0_19 = arith.constant 0 : index
    %41 = vector.load %arg3[%c0_18, %c0_19] : memref<8x32xf32, #tpu.memory_space<vmem>>, vector<8x32xf32>
    %42 = tpu.concatenate %41, %41 in 0 : vector<8x32xf32>, vector<8x32xf32> -> vector<16x32xf32>
    %43 = tpu.iota {dimensions = array<i32: 1>} : vector<16x32xi32>
    %c16_i32 = arith.constant 16 : i32
    %c0_i32_20 = arith.constant 0 : i32
    %44 = arith.cmpi eq, %c16_i32, %c0_i32_20 : i32
    %c1_i32 = arith.constant 1 : i32
    %45 = arith.select %44, %c1_i32, %c16_i32 : i32
    %46 = vector.broadcast %45 : i32 to vector<16x32xi32>
    %47 = arith.remsi %43, %46 : vector<16x32xi32>
    %c0_i32_21 = arith.constant 0 : i32
    %48 = vector.broadcast %c0_i32_21 : i32 to vector<16x32xi32>
    %49 = arith.cmpi ne, %47, %48 : vector<16x32xi32>
    %c0_i32_22 = arith.constant 0 : i32
    %50 = vector.broadcast %c0_i32_22 : i32 to vector<16x32xi32>
    %51 = arith.cmpi slt, %47, %50 : vector<16x32xi32>
    %c0_i32_23 = arith.constant 0 : i32
    %52 = arith.cmpi slt, %45, %c0_i32_23 : i32
    %53 = vector.broadcast %52 : i1 to vector<16x32xi1>
    %54 = vector.broadcast %53 : vector<16x32xi1> to vector<16x32xi1>
    %55 = arith.xori %51, %54 : vector<16x32xi1>
    %56 = arith.andi %55, %49 : vector<16x32xi1>
    %57 = vector.broadcast %45 : i32 to vector<16x32xi32>
    %58 = arith.addi %47, %57 : vector<16x32xi32>
    %59 = arith.select %56, %58, %47 : vector<16x32xi1>, vector<16x32xi32>
    %c8_i32 = arith.constant 8 : i32
    %60 = vector.broadcast %c8_i32 : i32 to vector<16x32xi32>
    %61 = arith.cmpi sge, %59, %60 : vector<16x32xi32>
    %c8_i32_24 = arith.constant 8 : i32
    %62 = tpu.dynamic_rotate %36 by %c8_i32_24 dim 1 : vector<16x32xf32>, i32 -> vector<16x32xf32>
    %c24_i32 = arith.constant 24 : i32
    %63 = tpu.dynamic_rotate %36 by %c24_i32 dim 1 : vector<16x32xf32>, i32 -> vector<16x32xf32>
    %64 = arith.select %61, %62, %63 : vector<16x32xi1>, vector<16x32xf32>
    %65 = arith.mulf %36, %40 : vector<16x32xf32>
    %66 = arith.mulf %64, %42 : vector<16x32xf32>
    %67 = arith.addf %65, %66 : vector<16x32xf32>
    %c8_i32_25 = arith.constant 8 : i32
    %68 = tpu.dynamic_rotate %37 by %c8_i32_25 dim 1 : vector<16x32xf32>, i32 -> vector<16x32xf32>
    %c24_i32_26 = arith.constant 24 : i32
    %69 = tpu.dynamic_rotate %37 by %c24_i32_26 dim 1 : vector<16x32xf32>, i32 -> vector<16x32xf32>
    %70 = arith.select %61, %68, %69 : vector<16x32xi1>, vector<16x32xf32>
    %71 = arith.mulf %37, %40 : vector<16x32xf32>
    %72 = arith.mulf %70, %42 : vector<16x32xf32>
    %73 = arith.addf %71, %72 : vector<16x32xf32>
    %74 = vector.shape_cast %67 : vector<16x32xf32> to vector<2x8x32xf32>
    %75 = vector.shape_cast %73 : vector<16x32xf32> to vector<2x8x32xf32>
    %76 = vector.shape_cast %38 : vector<16x32xf32> to vector<2x8x32xf32>
    %77 = tpu.iota {dimensions = array<i32: 1>} : vector<1x8x8xi32>
    %78 = tpu.iota {dimensions = array<i32: 2>} : vector<1x8x8xi32>
    %79 = arith.cmpi sle, %78, %77 : vector<1x8x8xi32>
    %c0_27 = arith.constant 0 : index
    %c0_28 = arith.constant 0 : index
    %c0_29 = arith.constant 0 : index
    %80 = vector.load %arg7[%c0_27, %c0_28, %c0_29] : memref<1x32x32xbf16, #tpu.memory_space<vmem>>, vector<1x32x32xbf16>
    %81 = vector.shape_cast %80 : vector<1x32x32xbf16> to vector<32x32xbf16>
    %cst_30 = arith.constant 0.000000e+00 : f32
    %82 = vector.broadcast %cst_30 : f32 to vector<16x32xf32>
    %83 = vector.extract_strided_slice %74 {offsets = [0, 0, 0], sizes = [2, 8, 16], strides = [1, 1, 1]} : vector<2x8x32xf32> to vector<2x8x16xf32>
    %84 = vector.extract_strided_slice %75 {offsets = [0, 0, 0], sizes = [2, 8, 16], strides = [1, 1, 1]} : vector<2x8x32xf32> to vector<2x8x16xf32>
    "tpu.trace_start"() <{level = 10 : i32, message = "bqd,bkd->bqk"}> : () -> ()
    %cst_31 = arith.constant dense<0.000000e+00> : vector<2x8x8xf32>
    %85 = tpu.matmul %83, %84, %cst_31 {dimension_numbers = #tpu.dot_dimension_numbers<[2], [2], [1], [1], [0, 0, 0, 1, 1, 1], [0], [0]>} : vector<2x8x16xf32>, vector<2x8x16xf32>, vector<2x8x8xf32> -> vector<2x8x8xf32>
    "tpu.trace_stop"() : () -> ()
    %cst_32 = arith.constant 2.500000e-01 : f32
    %86 = vector.broadcast %cst_32 : f32 to vector<2x8x8xf32>
    %87 = arith.mulf %85, %86 : vector<2x8x8xf32>
    %cst_33 = arith.constant -1.000000e+30 : f32
    %88 = vector.shape_cast %79 : vector<1x8x8xi1> to vector<1x8x8xi1>
    %89 = vector.broadcast %88 : vector<1x8x8xi1> to vector<2x8x8xi1>
    %90 = vector.broadcast %cst_33 : f32 to vector<2x8x8xf32>
    %91 = arith.select %89, %87, %90 : vector<2x8x8xi1>, vector<2x8x8xf32>
    %cst_34 = arith.constant dense<0xFF800000> : vector<2x8xf32>
    %92 = vector.multi_reduction <maximumf>, %91, %cst_34 [2] : vector<2x8x8xf32> to vector<2x8xf32>
    %93 = vector.shape_cast %92 : vector<2x8xf32> to vector<2x8x1xf32>
    %94 = vector.broadcast %93 : vector<2x8x1xf32> to vector<2x8x8xf32>
    %95 = arith.subf %91, %94 : vector<2x8x8xf32>
    %96 = math.exp %95 : vector<2x8x8xf32>
    %cst_35 = arith.constant dense<0.000000e+00> : vector<2x8xf32>
    %97 = vector.multi_reduction <add>, %96, %cst_35 [2] : vector<2x8x8xf32> to vector<2x8xf32>
    %98 = vector.shape_cast %97 : vector<2x8xf32> to vector<2x8x1xf32>
    %99 = vector.extract_strided_slice %76 {offsets = [0, 0, 0], sizes = [2, 8, 16], strides = [1, 1, 1]} : vector<2x8x32xf32> to vector<2x8x16xf32>
    "tpu.trace_start"() <{level = 10 : i32, message = "bqk,bkd->bqd"}> : () -> ()
    %cst_36 = arith.constant dense<0.000000e+00> : vector<2x8x16xf32>
    %100 = tpu.matmul %96, %99, %cst_36 {dimension_numbers = #tpu.dot_dimension_numbers<[2], [1], [1], [2], [0, 0, 0, 1, 1, 2], [0], [0]>} : vector<2x8x8xf32>, vector<2x8x16xf32>, vector<2x8x16xf32> -> vector<2x8x16xf32>
    "tpu.trace_stop"() : () -> ()
    %101 = tpu.reciprocal %98 {approx = true} : vector<2x8x1xf32> -> vector<2x8x1xf32>
    %102 = vector.broadcast %101 : vector<2x8x1xf32> to vector<2x8x16xf32>
    %103 = arith.mulf %100, %102 : vector<2x8x16xf32>
    %104 = vector.shape_cast %103 : vector<2x8x16xf32> to vector<16x16xf32>
    %105 = arith.truncf %104 : vector<16x16xf32> to vector<16x16xbf16>
    %106 = vector.extract_strided_slice %81 {offsets = [0, 0], sizes = [16, 32], strides = [1, 1]} : vector<32x32xbf16> to vector<16x32xbf16>
    %cst_37 = arith.constant dense<0.000000e+00> : vector<16x32xf32>
    %107 = tpu.matmul %105, %106, %cst_37 {dimension_numbers = #tpu.dot_dimension_numbers<[1], [0], [0], [1], [0, 0, 1, 1], [], []>} : vector<16x16xbf16>, vector<16x32xbf16>, vector<16x32xf32> -> vector<16x32xf32>
    %108 = arith.addf %82, %107 : vector<16x32xf32>
    %109 = vector.extract_strided_slice %74 {offsets = [0, 0, 16], sizes = [2, 8, 16], strides = [1, 1, 1]} : vector<2x8x32xf32> to vector<2x8x16xf32>
    %110 = vector.extract_strided_slice %75 {offsets = [0, 0, 16], sizes = [2, 8, 16], strides = [1, 1, 1]} : vector<2x8x32xf32> to vector<2x8x16xf32>
    "tpu.trace_start"() <{level = 10 : i32, message = "bqd,bkd->bqk"}> : () -> ()
    %cst_38 = arith.constant dense<0.000000e+00> : vector<2x8x8xf32>
    %111 = tpu.matmul %109, %110, %cst_38 {dimension_numbers = #tpu.dot_dimension_numbers<[2], [2], [1], [1], [0, 0, 0, 1, 1, 1], [0], [0]>} : vector<2x8x16xf32>, vector<2x8x16xf32>, vector<2x8x8xf32> -> vector<2x8x8xf32>
    "tpu.trace_stop"() : () -> ()
    %cst_39 = arith.constant 2.500000e-01 : f32
    %112 = vector.broadcast %cst_39 : f32 to vector<2x8x8xf32>
    %113 = arith.mulf %111, %112 : vector<2x8x8xf32>
    %cst_40 = arith.constant -1.000000e+30 : f32
    %114 = vector.shape_cast %79 : vector<1x8x8xi1> to vector<1x8x8xi1>
    %115 = vector.broadcast %114 : vector<1x8x8xi1> to vector<2x8x8xi1>
    %116 = vector.broadcast %cst_40 : f32 to vector<2x8x8xf32>
    %117 = arith.select %115, %113, %116 : vector<2x8x8xi1>, vector<2x8x8xf32>
    %cst_41 = arith.constant dense<0xFF800000> : vector<2x8xf32>
    %118 = vector.multi_reduction <maximumf>, %117, %cst_41 [2] : vector<2x8x8xf32> to vector<2x8xf32>
    %119 = vector.shape_cast %118 : vector<2x8xf32> to vector<2x8x1xf32>
    %120 = vector.broadcast %119 : vector<2x8x1xf32> to vector<2x8x8xf32>
    %121 = arith.subf %117, %120 : vector<2x8x8xf32>
    %122 = math.exp %121 : vector<2x8x8xf32>
    %cst_42 = arith.constant dense<0.000000e+00> : vector<2x8xf32>
    %123 = vector.multi_reduction <add>, %122, %cst_42 [2] : vector<2x8x8xf32> to vector<2x8xf32>
    %124 = vector.shape_cast %123 : vector<2x8xf32> to vector<2x8x1xf32>
    %125 = vector.extract_strided_slice %76 {offsets = [0, 0, 16], sizes = [2, 8, 16], strides = [1, 1, 1]} : vector<2x8x32xf32> to vector<2x8x16xf32>
    "tpu.trace_start"() <{level = 10 : i32, message = "bqk,bkd->bqd"}> : () -> ()
    %cst_43 = arith.constant dense<0.000000e+00> : vector<2x8x16xf32>
    %126 = tpu.matmul %122, %125, %cst_43 {dimension_numbers = #tpu.dot_dimension_numbers<[2], [1], [1], [2], [0, 0, 0, 1, 1, 2], [0], [0]>} : vector<2x8x8xf32>, vector<2x8x16xf32>, vector<2x8x16xf32> -> vector<2x8x16xf32>
    "tpu.trace_stop"() : () -> ()
    %127 = tpu.reciprocal %124 {approx = true} : vector<2x8x1xf32> -> vector<2x8x1xf32>
    %128 = vector.broadcast %127 : vector<2x8x1xf32> to vector<2x8x16xf32>
    %129 = arith.mulf %126, %128 : vector<2x8x16xf32>
    %130 = vector.shape_cast %129 : vector<2x8x16xf32> to vector<16x16xf32>
    %131 = arith.truncf %130 : vector<16x16xf32> to vector<16x16xbf16>
    %132 = vector.extract_strided_slice %81 {offsets = [16, 0], sizes = [16, 32], strides = [1, 1]} : vector<32x32xbf16> to vector<16x32xbf16>
    %cst_44 = arith.constant dense<0.000000e+00> : vector<16x32xf32>
    %133 = tpu.matmul %131, %132, %cst_44 {dimension_numbers = #tpu.dot_dimension_numbers<[1], [0], [0], [1], [0, 0, 1, 1], [], []>} : vector<16x16xbf16>, vector<16x32xbf16>, vector<16x32xf32> -> vector<16x32xf32>
    %134 = arith.addf %108, %133 : vector<16x32xf32>
    %135 = arith.negf %34 : vector<16x128xf32>
    %136 = math.exp %135 : vector<16x128xf32>
    %cst_45 = arith.constant 1.000000e+00 : f32
    %137 = vector.broadcast %cst_45 : f32 to vector<16x128xf32>
    %138 = arith.addf %137, %136 : vector<16x128xf32>
    %139 = arith.divf %137, %138 : vector<16x128xf32>
    %140 = arith.mulf %34, %139 : vector<16x128xf32>
    %141 = arith.mulf %140, %35 : vector<16x128xf32>
    %142 = arith.truncf %141 : vector<16x128xf32> to vector<16x128xbf16>
    %c0_46 = arith.constant 0 : index
    %c0_47 = arith.constant 0 : index
    %c0_48 = arith.constant 0 : index
    %143 = vector.load %arg8[%c0_46, %c0_47, %c0_48] : memref<1x128x32xbf16, #tpu.memory_space<vmem>>, vector<1x128x32xbf16>
    %144 = vector.shape_cast %143 : vector<1x128x32xbf16> to vector<128x32xbf16>
    %cst_49 = arith.constant dense<0.000000e+00> : vector<16x32xf32>
    %145 = tpu.matmul %142, %144, %cst_49 {dimension_numbers = #tpu.dot_dimension_numbers<[1], [0], [0], [1], [0, 0, 1, 1], [], []>} : vector<16x128xbf16>, vector<128x32xbf16>, vector<16x32xf32> -> vector<16x32xf32>
    %146 = arith.addf %3, %134 : vector<16x32xf32>
    %147 = arith.addf %146, %145 : vector<16x32xf32>
    %c0_50 = arith.constant 0 : index
    %c0_51 = arith.constant 0 : index
    %148 = vector.load %arg13[%c0_50, %c0_51] : memref<16x32xf32, #tpu.memory_space<vmem>>, vector<16x32xf32>
    tpu.vector_store %arg13[%c0_50, %c0_51], %147 {strides = array<i32>} : memref<16x32xf32, #tpu.memory_space<vmem>>, vector<16x32xf32>,
    %c1_i32_52 = arith.constant 1 : i32
    %149 = arith.cmpi eq, %arg0, %c1_i32_52 : i32
    %150 = arith.extui %149 : i1 to i32
    %c0_i32_53 = arith.constant 0 : i32
    %151 = arith.cmpi ne, %150, %c0_i32_53 : i32
    scf.if %151 {
      %c0_54 = arith.constant 0 : index
      %c0_55 = arith.constant 0 : index
      %152 = vector.load %arg9[%c0_54, %c0_55] : memref<1x32xf32, #tpu.memory_space<vmem>>, vector<1x32xf32>
      %c0_56 = arith.constant 0 : index
      %c0_57 = arith.constant 0 : index
      %153 = vector.load %arg10[%c0_56, %c0_57] : memref<1x32xf32, #tpu.memory_space<vmem>>, vector<1x32xf32>
      %cst_58 = arith.constant dense<0.000000e+00> : vector<16xf32>
      %154 = vector.multi_reduction <add>, %147, %cst_58 [1] : vector<16x32xf32> to vector<16xf32>
      %155 = vector.shape_cast %154 : vector<16xf32> to vector<16x1xf32>
      %cst_59 = arith.constant 3.200000e+01 : f32
      %156 = vector.broadcast %cst_59 : f32 to vector<16x1xf32>
      %157 = arith.divf %155, %156 : vector<16x1xf32>
      %158 = vector.broadcast %157 : vector<16x1xf32> to vector<16x32xf32>
      %159 = arith.subf %147, %158 : vector<16x32xf32>
      %160 = arith.mulf %159, %159 : vector<16x32xf32>
      %cst_60 = arith.constant dense<0.000000e+00> : vector<16xf32>
      %161 = vector.multi_reduction <add>, %160, %cst_60 [1] : vector<16x32xf32> to vector<16xf32>
      %162 = vector.shape_cast %161 : vector<16xf32> to vector<16x1xf32>
      %cst_61 = arith.constant 3.200000e+01 : f32
      %163 = vector.broadcast %cst_61 : f32 to vector<16x1xf32>
      %164 = arith.divf %162, %163 : vector<16x1xf32>
      %165 = vector.broadcast %157 : vector<16x1xf32> to vector<16x32xf32>
      %166 = arith.subf %147, %165 : vector<16x32xf32>
      %cst_62 = arith.constant 9.99999974E-6 : f32
      %167 = vector.broadcast %cst_62 : f32 to vector<16x1xf32>
      %168 = arith.addf %164, %167 : vector<16x1xf32>
      %169 = math.rsqrt %168 : vector<16x1xf32>
      %170 = vector.broadcast %169 : vector<16x1xf32> to vector<16x32xf32>
      %171 = arith.mulf %166, %170 : vector<16x32xf32>
      %172 = vector.broadcast %152 : vector<1x32xf32> to vector<16x32xf32>
      %173 = arith.mulf %171, %172 : vector<16x32xf32>
      %174 = vector.broadcast %153 : vector<1x32xf32> to vector<16x32xf32>
      %175 = arith.addf %173, %174 : vector<16x32xf32>
      %176 = arith.truncf %175 : vector<16x32xf32> to vector<16x32xbf16>
      %c0_63 = arith.constant 0 : index
      %c0_64 = arith.constant 0 : index
      %177 = vector.load %arg11[%c0_63, %c0_64] : memref<32x128xbf16, #tpu.memory_space<vmem>>, vector<32x128xbf16>
      %cst_65 = arith.constant dense<0.000000e+00> : vector<16x128xf32>
      %178 = tpu.matmul %176, %177, %cst_65 {dimension_numbers = #tpu.dot_dimension_numbers<[1], [0], [0], [1], [0, 0, 1, 1], [], []>} : vector<16x32xbf16>, vector<32x128xbf16>, vector<16x128xf32> -> vector<16x128xf32>
      %c0_66 = arith.constant 0 : index
      %c0_67 = arith.constant 0 : index
      %179 = vector.load %arg12[%c0_66, %c0_67] : memref<16x128xf32, #tpu.memory_space<vmem>>, vector<16x128xf32>
      tpu.vector_store %arg12[%c0_66, %c0_67], %178 {strides = array<i32>} : memref<16x128xf32, #tpu.memory_space<vmem>>, vector<16x128xf32>,
    } else {
    }
    return
  }
  func.func @transform_0(%arg0: i32) -> (i32, i32) {
    %c0_i32 = arith.constant 0 : i32
    %c0_i32_0 = arith.constant 0 : i32
    %c0_i32_1 = arith.constant 0 : i32
    return %c0_i32, %c0_i32_0 : i32, i32
  }
  func.func @transform_1(%arg0: i32) -> (i32, i32) {
    %c0_i32 = arith.constant 0 : i32
    %c0_i32_0 = arith.constant 0 : i32
    %c0_i32_1 = arith.constant 0 : i32
    return %c0_i32, %c0_i32_0 : i32, i32
  }
  func.func @transform_2(%arg0: i32) -> (i32, i32) {
    %c0_i32 = arith.constant 0 : i32
    %c0_i32_0 = arith.constant 0 : i32
    %c0_i32_1 = arith.constant 0 : i32
    return %c0_i32, %c0_i32_0 : i32, i32
  }
  func.func @transform_3(%arg0: i32) -> (i32, i32, i32) {
    %c0_i32 = arith.constant 0 : i32
    %c0_i32_0 = arith.constant 0 : i32
    %c0_i32_1 = arith.constant 0 : i32
    return %arg0, %c0_i32, %c0_i32_0 : i32, i32, i32
  }
  func.func @transform_4(%arg0: i32) -> (i32, i32, i32) {
    %c0_i32 = arith.constant 0 : i32
    %c0_i32_0 = arith.constant 0 : i32
    %c0_i32_1 = arith.constant 0 : i32
    return %arg0, %c0_i32, %c0_i32_0 : i32, i32, i32
  }
  func.func @transform_5(%arg0: i32) -> (i32, i32, i32) {
    %c0_i32 = arith.constant 0 : i32
    %c0_i32_0 = arith.constant 0 : i32
    %c0_i32_1 = arith.constant 0 : i32
    return %arg0, %c0_i32, %c0_i32_0 : i32, i32, i32
  }
  func.func @transform_6(%arg0: i32) -> (i32, i32, i32) {
    %c0_i32 = arith.constant 0 : i32
    %c0_i32_0 = arith.constant 0 : i32
    %c0_i32_1 = arith.constant 0 : i32
    return %arg0, %c0_i32, %c0_i32_0 : i32, i32, i32
  }
  func.func @transform_7(%arg0: i32) -> (i32, i32, i32) {
    %c0_i32 = arith.constant 0 : i32
    %c0_i32_0 = arith.constant 0 : i32
    %c0_i32_1 = arith.constant 0 : i32
    return %arg0, %c0_i32, %c0_i32_0 : i32, i32, i32
  }
  func.func @transform_8(%arg0: i32) -> (i32, i32) {
    %c0_i32 = arith.constant 0 : i32
    %c0_i32_0 = arith.constant 0 : i32
    %c0_i32_1 = arith.constant 0 : i32
    return %c0_i32, %c0_i32_0 : i32, i32
  }
  func.func @transform_9(%arg0: i32) -> (i32, i32) {
    %c0_i32 = arith.constant 0 : i32
    %c0_i32_0 = arith.constant 0 : i32
    %c0_i32_1 = arith.constant 0 : i32
    return %c0_i32, %c0_i32_0 : i32, i32
  }
  func.func @transform_10(%arg0: i32) -> (i32, i32) {
    %c0_i32 = arith.constant 0 : i32
    %c0_i32_0 = arith.constant 0 : i32
    %c0_i32_1 = arith.constant 0 : i32
    return %c0_i32, %c0_i32_0 : i32, i32
  }
  func.func @transform_11(%arg0: i32) -> (i32, i32) {
    %c0_i32 = arith.constant 0 : i32
    %c0_i32_0 = arith.constant 0 : i32
    %c0_i32_1 = arith.constant 0 : i32
    return %c0_i32, %c0_i32_0 : i32, i32
  }
}

module attributes {stable_mosaic.version = 11 : i64} {
  func.func @_linear_bias_kernel(%arg0: memref<2x64xf32, #tpu.memory_space<vmem>>, %arg1: memref<64x384xf32, #tpu.memory_space<vmem>>, %arg2: memref<1x384xf32, #tpu.memory_space<vmem>>, %arg3: memref<2x384xf32, #tpu.memory_space<vmem>>) attributes {dimension_semantics = [], scalar_prefetch = 0 : i64, scratch_operands = 0 : i64, tpu.core_type = #tpu.core_type<tc>} {
    %c0 = arith.constant 0 : index
    %c0_0 = arith.constant 0 : index
    %0 = vector.load %arg0[%c0, %c0_0] : memref<2x64xf32, #tpu.memory_space<vmem>>, vector<2x64xf32>
    %c0_1 = arith.constant 0 : index
    %c0_2 = arith.constant 0 : index
    %1 = vector.load %arg1[%c0_1, %c0_2] : memref<64x384xf32, #tpu.memory_space<vmem>>, vector<64x384xf32>
    %cst = arith.constant dense<0.000000e+00> : vector<2x384xf32>
    %2 = tpu.matmul %0, %1, %cst {dimension_numbers = #tpu.dot_dimension_numbers<[1], [0], [0], [1], [0, 0, 1, 1], [], []>} : vector<2x64xf32>, vector<64x384xf32>, vector<2x384xf32> -> vector<2x384xf32>
    %c0_3 = arith.constant 0 : index
    %c0_4 = arith.constant 0 : index
    %3 = vector.load %arg2[%c0_3, %c0_4] : memref<1x384xf32, #tpu.memory_space<vmem>>, vector<1x384xf32>
    %4 = vector.broadcast %3 : vector<1x384xf32> to vector<2x384xf32>
    %5 = arith.addf %2, %4 : vector<2x384xf32>
    %c0_5 = arith.constant 0 : index
    %c0_6 = arith.constant 0 : index
    %6 = vector.load %arg3[%c0_5, %c0_6] : memref<2x384xf32, #tpu.memory_space<vmem>>, vector<2x384xf32>
    tpu.vector_store %arg3[%c0_5, %c0_6], %5 {strides = array<i32>} : memref<2x384xf32, #tpu.memory_space<vmem>>, vector<2x384xf32>,
    return
  }
}

module attributes {stable_mosaic.version = 11 : i64} {
  func.func @_perceiver_stack_kernel(%arg0: i32, %arg1: memref<48x16xf32, #tpu.memory_space<vmem>>, %arg2: memref<24x16xf32, #tpu.memory_space<vmem>>, %arg3: memref<1x1x16xf32, #tpu.memory_space<vmem>>, %arg4: memref<1x1x16xf32, #tpu.memory_space<vmem>>, %arg5: memref<1x1x16xf32, #tpu.memory_space<vmem>>, %arg6: memref<1x1x16xf32, #tpu.memory_space<vmem>>, %arg7: memref<1x16x16xbf16, #tpu.memory_space<vmem>>, %arg8: memref<1x16x32xbf16, #tpu.memory_space<vmem>>, %arg9: memref<1x16x16xbf16, #tpu.memory_space<vmem>>, %arg10: memref<1x1x16xf32, #tpu.memory_space<vmem>>, %arg11: memref<1x1x16xf32, #tpu.memory_space<vmem>>, %arg12: memref<1x16x64xbf16, #tpu.memory_space<vmem>>, %arg13: memref<1x1x64xf32, #tpu.memory_space<vmem>>, %arg14: memref<1x64x16xbf16, #tpu.memory_space<vmem>>, %arg15: memref<1x1x16xf32, #tpu.memory_space<vmem>>, %arg16: memref<1x16xf32, #tpu.memory_space<vmem>>, %arg17: memref<1x16xf32, #tpu.memory_space<vmem>>, %arg18: memref<16x32xbf16, #tpu.memory_space<vmem>>, %arg19: memref<24x32xf32, #tpu.memory_space<vmem>>, %arg20: memref<24x16xf32, #tpu.memory_space<vmem>>) attributes {dimension_semantics = [#tpu.dimension_semantics<arbitrary>], iteration_bounds = array<i64: 2>, scalar_prefetch = 0 : i64, scratch_operands = 1 : i64, tpu.core_type = #tpu.core_type<tc>, window_params = [{pipeline_mode = #tpu.pipeline_mode<synchronous>, transform_indices = @transform_0, window_bounds = array<i64: 48, 16>}, {pipeline_mode = #tpu.pipeline_mode<synchronous>, transform_indices = @transform_1, window_bounds = array<i64: 24, 16>}, {transform_indices = @transform_2, window_bounds = array<i64: 1, 1, 16>}, {transform_indices = @transform_3, window_bounds = array<i64: 1, 1, 16>}, {transform_indices = @transform_4, window_bounds = array<i64: 1, 1, 16>}, {transform_indices = @transform_5, window_bounds = array<i64: 1, 1, 16>}, {transform_indices = @transform_6, window_bounds = array<i64: 1, 16, 16>}, {transform_indices = @transform_7, window_bounds = array<i64: 1, 16, 32>}, {transform_indices = @transform_8, window_bounds = array<i64: 1, 16, 16>}, {transform_indices = @transform_9, window_bounds = array<i64: 1, 1, 16>}, {transform_indices = @transform_10, window_bounds = array<i64: 1, 1, 16>}, {transform_indices = @transform_11, window_bounds = array<i64: 1, 16, 64>}, {transform_indices = @transform_12, window_bounds = array<i64: 1, 1, 64>}, {transform_indices = @transform_13, window_bounds = array<i64: 1, 64, 16>}, {transform_indices = @transform_14, window_bounds = array<i64: 1, 1, 16>}, {pipeline_mode = #tpu.pipeline_mode<synchronous>, transform_indices = @transform_15, window_bounds = array<i64: 1, 16>}, {pipeline_mode = #tpu.pipeline_mode<synchronous>, transform_indices = @transform_16, window_bounds = array<i64: 1, 16>}, {pipeline_mode = #tpu.pipeline_mode<synchronous>, transform_indices = @transform_17, window_bounds = array<i64: 16, 32>}, {pipeline_mode = #tpu.pipeline_mode<synchronous>, transform_indices = @transform_18, window_bounds = array<i64: 24, 32>}]} {
    %c0_i32 = arith.constant 0 : i32
    %0 = arith.cmpi eq, %arg0, %c0_i32 : i32
    %1 = arith.extui %0 : i1 to i32
    %c0_i32_0 = arith.constant 0 : i32
    %2 = arith.cmpi ne, %1, %c0_i32_0 : i32
    scf.if %2 {
      %c0_95 = arith.constant 0 : index
      %c0_96 = arith.constant 0 : index
      %218 = vector.load %arg2[%c0_95, %c0_96] : memref<24x16xf32, #tpu.memory_space<vmem>>, vector<24x16xf32>
      %c0_97 = arith.constant 0 : index
      %c0_98 = arith.constant 0 : index
      %219 = vector.load %arg20[%c0_97, %c0_98] : memref<24x16xf32, #tpu.memory_space<vmem>>, vector<24x16xf32>
      tpu.vector_store %arg20[%c0_97, %c0_98], %218 {strides = array<i32>} : memref<24x16xf32, #tpu.memory_space<vmem>>, vector<24x16xf32>,
    } else {
    }
    %c0 = arith.constant 0 : index
    %c0_1 = arith.constant 0 : index
    %3 = vector.load %arg20[%c0, %c0_1] : memref<24x16xf32, #tpu.memory_space<vmem>>, vector<24x16xf32>
    %c0_2 = arith.constant 0 : index
    %c0_3 = arith.constant 0 : index
    %4 = vector.load %arg1[%c0_2, %c0_3] : memref<48x16xf32, #tpu.memory_space<vmem>>, vector<48x16xf32>
    %c0_4 = arith.constant 0 : index
    %c0_5 = arith.constant 0 : index
    %c0_6 = arith.constant 0 : index
    %5 = vector.load %arg3[%c0_4, %c0_5, %c0_6] : memref<1x1x16xf32, #tpu.memory_space<vmem>>, vector<1x1x16xf32>
    %6 = vector.shape_cast %5 : vector<1x1x16xf32> to vector<1x16xf32>
    %c0_7 = arith.constant 0 : index
    %c0_8 = arith.constant 0 : index
    %c0_9 = arith.constant 0 : index
    %7 = vector.load %arg4[%c0_7, %c0_8, %c0_9] : memref<1x1x16xf32, #tpu.memory_space<vmem>>, vector<1x1x16xf32>
    %8 = vector.shape_cast %7 : vector<1x1x16xf32> to vector<1x16xf32>
    %cst = arith.constant dense<0.000000e+00> : vector<48xf32>
    %9 = vector.multi_reduction <add>, %4, %cst [1] : vector<48x16xf32> to vector<48xf32>
    %10 = vector.shape_cast %9 : vector<48xf32> to vector<48x1xf32>
    %cst_10 = arith.constant 1.600000e+01 : f32
    %11 = vector.broadcast %cst_10 : f32 to vector<48x1xf32>
    %12 = arith.divf %10, %11 : vector<48x1xf32>
    %13 = vector.broadcast %12 : vector<48x1xf32> to vector<48x16xf32>
    %14 = arith.subf %4, %13 : vector<48x16xf32>
    %15 = arith.mulf %14, %14 : vector<48x16xf32>
    %cst_11 = arith.constant dense<0.000000e+00> : vector<48xf32>
    %16 = vector.multi_reduction <add>, %15, %cst_11 [1] : vector<48x16xf32> to vector<48xf32>
    %17 = vector.shape_cast %16 : vector<48xf32> to vector<48x1xf32>
    %cst_12 = arith.constant 1.600000e+01 : f32
    %18 = vector.broadcast %cst_12 : f32 to vector<48x1xf32>
    %19 = arith.divf %17, %18 : vector<48x1xf32>
    %20 = vector.broadcast %12 : vector<48x1xf32> to vector<48x16xf32>
    %21 = arith.subf %4, %20 : vector<48x16xf32>
    %cst_13 = arith.constant 9.99999974E-6 : f32
    %22 = vector.broadcast %cst_13 : f32 to vector<48x1xf32>
    %23 = arith.addf %19, %22 : vector<48x1xf32>
    %24 = math.rsqrt %23 : vector<48x1xf32>
    %25 = vector.broadcast %24 : vector<48x1xf32> to vector<48x16xf32>
    %26 = arith.mulf %21, %25 : vector<48x16xf32>
    %27 = vector.broadcast %6 : vector<1x16xf32> to vector<48x16xf32>
    %28 = arith.mulf %26, %27 : vector<48x16xf32>
    %29 = vector.broadcast %8 : vector<1x16xf32> to vector<48x16xf32>
    %30 = arith.addf %28, %29 : vector<48x16xf32>
    %c0_14 = arith.constant 0 : index
    %c0_15 = arith.constant 0 : index
    %c0_16 = arith.constant 0 : index
    %31 = vector.load %arg5[%c0_14, %c0_15, %c0_16] : memref<1x1x16xf32, #tpu.memory_space<vmem>>, vector<1x1x16xf32>
    %32 = vector.shape_cast %31 : vector<1x1x16xf32> to vector<1x16xf32>
    %c0_17 = arith.constant 0 : index
    %c0_18 = arith.constant 0 : index
    %c0_19 = arith.constant 0 : index
    %33 = vector.load %arg6[%c0_17, %c0_18, %c0_19] : memref<1x1x16xf32, #tpu.memory_space<vmem>>, vector<1x1x16xf32>
    %34 = vector.shape_cast %33 : vector<1x1x16xf32> to vector<1x16xf32>
    %cst_20 = arith.constant dense<0.000000e+00> : vector<24xf32>
    %35 = vector.multi_reduction <add>, %3, %cst_20 [1] : vector<24x16xf32> to vector<24xf32>
    %36 = vector.shape_cast %35 : vector<24xf32> to vector<24x1xf32>
    %cst_21 = arith.constant 1.600000e+01 : f32
    %37 = vector.broadcast %cst_21 : f32 to vector<24x1xf32>
    %38 = arith.divf %36, %37 : vector<24x1xf32>
    %39 = vector.broadcast %38 : vector<24x1xf32> to vector<24x16xf32>
    %40 = arith.subf %3, %39 : vector<24x16xf32>
    %41 = arith.mulf %40, %40 : vector<24x16xf32>
    %cst_22 = arith.constant dense<0.000000e+00> : vector<24xf32>
    %42 = vector.multi_reduction <add>, %41, %cst_22 [1] : vector<24x16xf32> to vector<24xf32>
    %43 = vector.shape_cast %42 : vector<24xf32> to vector<24x1xf32>
    %cst_23 = arith.constant 1.600000e+01 : f32
    %44 = vector.broadcast %cst_23 : f32 to vector<24x1xf32>
    %45 = arith.divf %43, %44 : vector<24x1xf32>
    %46 = vector.broadcast %38 : vector<24x1xf32> to vector<24x16xf32>
    %47 = arith.subf %3, %46 : vector<24x16xf32>
    %cst_24 = arith.constant 9.99999974E-6 : f32
    %48 = vector.broadcast %cst_24 : f32 to vector<24x1xf32>
    %49 = arith.addf %45, %48 : vector<24x1xf32>
    %50 = math.rsqrt %49 : vector<24x1xf32>
    %51 = vector.broadcast %50 : vector<24x1xf32> to vector<24x16xf32>
    %52 = arith.mulf %47, %51 : vector<24x16xf32>
    %53 = vector.broadcast %32 : vector<1x16xf32> to vector<24x16xf32>
    %54 = arith.mulf %52, %53 : vector<24x16xf32>
    %55 = vector.broadcast %34 : vector<1x16xf32> to vector<24x16xf32>
    %56 = arith.addf %54, %55 : vector<24x16xf32>
    %57 = arith.truncf %56 : vector<24x16xf32> to vector<24x16xbf16>
    %c0_25 = arith.constant 0 : index
    %c0_26 = arith.constant 0 : index
    %c0_27 = arith.constant 0 : index
    %58 = vector.load %arg7[%c0_25, %c0_26, %c0_27] : memref<1x16x16xbf16, #tpu.memory_space<vmem>>, vector<1x16x16xbf16>
    %59 = vector.shape_cast %58 : vector<1x16x16xbf16> to vector<16x16xbf16>
    %cst_28 = arith.constant dense<0.000000e+00> : vector<24x16xf32>
    %60 = tpu.matmul %57, %59, %cst_28 {dimension_numbers = #tpu.dot_dimension_numbers<[1], [0], [0], [1], [0, 0, 1, 1], [], []>} : vector<24x16xbf16>, vector<16x16xbf16>, vector<24x16xf32> -> vector<24x16xf32>
    %61 = arith.truncf %30 : vector<48x16xf32> to vector<48x16xbf16>
    %c0_29 = arith.constant 0 : index
    %c0_30 = arith.constant 0 : index
    %c0_31 = arith.constant 0 : index
    %62 = vector.load %arg8[%c0_29, %c0_30, %c0_31] : memref<1x16x32xbf16, #tpu.memory_space<vmem>>, vector<1x16x32xbf16>
    %63 = vector.shape_cast %62 : vector<1x16x32xbf16> to vector<16x32xbf16>
    %cst_32 = arith.constant dense<0.000000e+00> : vector<48x32xf32>
    %64 = tpu.matmul %61, %63, %cst_32 {dimension_numbers = #tpu.dot_dimension_numbers<[1], [0], [0], [1], [0, 0, 1, 1], [], []>} : vector<48x16xbf16>, vector<16x32xbf16>, vector<48x32xf32> -> vector<48x32xf32>
    %65 = arith.truncf %56 : vector<24x16xf32> to vector<24x16xbf16>
    %c0_33 = arith.constant 0 : index
    %c0_34 = arith.constant 0 : index
    %c0_35 = arith.constant 0 : index
    %66 = vector.load %arg8[%c0_33, %c0_34, %c0_35] : memref<1x16x32xbf16, #tpu.memory_space<vmem>>, vector<1x16x32xbf16>
    %67 = vector.shape_cast %66 : vector<1x16x32xbf16> to vector<16x32xbf16>
    %cst_36 = arith.constant dense<0.000000e+00> : vector<24x32xf32>
    %68 = tpu.matmul %65, %67, %cst_36 {dimension_numbers = #tpu.dot_dimension_numbers<[1], [0], [0], [1], [0, 0, 1, 1], [], []>} : vector<24x16xbf16>, vector<16x32xbf16>, vector<24x32xf32> -> vector<24x32xf32>
    %69 = vector.shape_cast %60 : vector<24x16xf32> to vector<6x4x16xf32>
    %70 = vector.extract_strided_slice %64 {offsets = [0, 0], sizes = [48, 16], strides = [1, 1]} : vector<48x32xf32> to vector<48x16xf32>
    %71 = vector.shape_cast %70 : vector<48x16xf32> to vector<6x8x16xf32>
    %72 = vector.extract_strided_slice %64 {offsets = [0, 16], sizes = [48, 16], strides = [1, 1]} : vector<48x32xf32> to vector<48x16xf32>
    %73 = vector.shape_cast %72 : vector<48x16xf32> to vector<6x8x16xf32>
    %74 = vector.extract_strided_slice %68 {offsets = [0, 0], sizes = [24, 16], strides = [1, 1]} : vector<24x32xf32> to vector<24x16xf32>
    %75 = vector.shape_cast %74 : vector<24x16xf32> to vector<6x4x16xf32>
    %76 = vector.extract_strided_slice %68 {offsets = [0, 16], sizes = [24, 16], strides = [1, 1]} : vector<24x32xf32> to vector<24x16xf32>
    %77 = vector.shape_cast %76 : vector<24x16xf32> to vector<6x4x16xf32>
    %c0_37 = arith.constant 0 : index
    %c0_38 = arith.constant 0 : index
    %c0_39 = arith.constant 0 : index
    %78 = vector.load %arg9[%c0_37, %c0_38, %c0_39] : memref<1x16x16xbf16, #tpu.memory_space<vmem>>, vector<1x16x16xbf16>
    %79 = vector.shape_cast %78 : vector<1x16x16xbf16> to vector<16x16xbf16>
    %cst_40 = arith.constant 0.000000e+00 : f32
    %80 = vector.broadcast %cst_40 : f32 to vector<24x16xf32>
    %81 = vector.extract_strided_slice %69 {offsets = [0, 0, 0], sizes = [6, 4, 8], strides = [1, 1, 1]} : vector<6x4x16xf32> to vector<6x4x8xf32>
    %82 = vector.extract_strided_slice %71 {offsets = [0, 0, 0], sizes = [6, 8, 8], strides = [1, 1, 1]} : vector<6x8x16xf32> to vector<6x8x8xf32>
    "tpu.trace_start"() <{level = 10 : i32, message = "mqd,mkd->mqk"}> : () -> ()
    %cst_41 = arith.constant dense<0.000000e+00> : vector<6x4x8xf32>
    %83 = tpu.matmul %81, %82, %cst_41 {dimension_numbers = #tpu.dot_dimension_numbers<[2], [2], [1], [1], [0, 0, 0, 1, 1, 1], [0], [0]>} : vector<6x4x8xf32>, vector<6x8x8xf32>, vector<6x4x8xf32> -> vector<6x4x8xf32>
    "tpu.trace_stop"() : () -> ()
    %cst_42 = arith.constant 0.353553385 : f32
    %84 = vector.broadcast %cst_42 : f32 to vector<6x4x8xf32>
    %85 = arith.mulf %83, %84 : vector<6x4x8xf32>
    %86 = vector.extract_strided_slice %75 {offsets = [0, 0, 0], sizes = [6, 4, 8], strides = [1, 1, 1]} : vector<6x4x16xf32> to vector<6x4x8xf32>
    "tpu.trace_start"() <{level = 10 : i32, message = "mqd,mkd->mqk"}> : () -> ()
    %cst_43 = arith.constant dense<0.000000e+00> : vector<6x4x4xf32>
    %87 = tpu.matmul %81, %86, %cst_43 {dimension_numbers = #tpu.dot_dimension_numbers<[2], [2], [1], [1], [0, 0, 0, 1, 1, 1], [0], [0]>} : vector<6x4x8xf32>, vector<6x4x8xf32>, vector<6x4x4xf32> -> vector<6x4x4xf32>
    "tpu.trace_stop"() : () -> ()
    %cst_44 = arith.constant 0.353553385 : f32
    %88 = vector.broadcast %cst_44 : f32 to vector<6x4x4xf32>
    %89 = arith.mulf %87, %88 : vector<6x4x4xf32>
    %cst_45 = arith.constant dense<0xFF800000> : vector<6x4xf32>
    %90 = vector.multi_reduction <maximumf>, %85, %cst_45 [2] : vector<6x4x8xf32> to vector<6x4xf32>
    %91 = vector.shape_cast %90 : vector<6x4xf32> to vector<6x4x1xf32>
    %cst_46 = arith.constant dense<0xFF800000> : vector<6x4xf32>
    %92 = vector.multi_reduction <maximumf>, %89, %cst_46 [2] : vector<6x4x4xf32> to vector<6x4xf32>
    %93 = vector.shape_cast %92 : vector<6x4xf32> to vector<6x4x1xf32>
    %94 = arith.maximumf %91, %93 : vector<6x4x1xf32>
    %95 = vector.broadcast %94 : vector<6x4x1xf32> to vector<6x4x8xf32>
    %96 = arith.subf %85, %95 : vector<6x4x8xf32>
    %97 = math.exp %96 : vector<6x4x8xf32>
    %98 = vector.broadcast %94 : vector<6x4x1xf32> to vector<6x4x4xf32>
    %99 = arith.subf %89, %98 : vector<6x4x4xf32>
    %100 = math.exp %99 : vector<6x4x4xf32>
    %cst_47 = arith.constant dense<0.000000e+00> : vector<6x4xf32>
    %101 = vector.multi_reduction <add>, %97, %cst_47 [2] : vector<6x4x8xf32> to vector<6x4xf32>
    %102 = vector.shape_cast %101 : vector<6x4xf32> to vector<6x4x1xf32>
    %cst_48 = arith.constant dense<0.000000e+00> : vector<6x4xf32>
    %103 = vector.multi_reduction <add>, %100, %cst_48 [2] : vector<6x4x4xf32> to vector<6x4xf32>
    %104 = vector.shape_cast %103 : vector<6x4xf32> to vector<6x4x1xf32>
    %105 = arith.addf %102, %104 : vector<6x4x1xf32>
    %106 = vector.extract_strided_slice %73 {offsets = [0, 0, 0], sizes = [6, 8, 8], strides = [1, 1, 1]} : vector<6x8x16xf32> to vector<6x8x8xf32>
    "tpu.trace_start"() <{level = 10 : i32, message = "mqk,mkd->mqd"}> : () -> ()
    %cst_49 = arith.constant dense<0.000000e+00> : vector<6x4x8xf32>
    %107 = tpu.matmul %97, %106, %cst_49 {dimension_numbers = #tpu.dot_dimension_numbers<[2], [1], [1], [2], [0, 0, 0, 1, 1, 2], [0], [0]>} : vector<6x4x8xf32>, vector<6x8x8xf32>, vector<6x4x8xf32> -> vector<6x4x8xf32>
    "tpu.trace_stop"() : () -> ()
    %108 = vector.extract_strided_slice %77 {offsets = [0, 0, 0], sizes = [6, 4, 8], strides = [1, 1, 1]} : vector<6x4x16xf32> to vector<6x4x8xf32>
    "tpu.trace_start"() <{level = 10 : i32, message = "mqk,mkd->mqd"}> : () -> ()
    %cst_50 = arith.constant dense<0.000000e+00> : vector<6x4x8xf32>
    %109 = tpu.matmul %100, %108, %cst_50 {dimension_numbers = #tpu.dot_dimension_numbers<[2], [1], [1], [2], [0, 0, 0, 1, 1, 2], [0], [0]>} : vector<6x4x4xf32>, vector<6x4x8xf32>, vector<6x4x8xf32> -> vector<6x4x8xf32>
    "tpu.trace_stop"() : () -> ()
    %110 = arith.addf %107, %109 : vector<6x4x8xf32>
    %111 = tpu.reciprocal %105 {approx = true} : vector<6x4x1xf32> -> vector<6x4x1xf32>
    %112 = vector.broadcast %111 : vector<6x4x1xf32> to vector<6x4x8xf32>
    %113 = arith.mulf %110, %112 : vector<6x4x8xf32>
    %114 = vector.shape_cast %113 : vector<6x4x8xf32> to vector<24x8xf32>
    %115 = arith.truncf %114 : vector<24x8xf32> to vector<24x8xbf16>
    %116 = vector.extract_strided_slice %79 {offsets = [0, 0], sizes = [8, 16], strides = [1, 1]} : vector<16x16xbf16> to vector<8x16xbf16>
    %cst_51 = arith.constant dense<0.000000e+00> : vector<24x16xf32>
    %117 = tpu.matmul %115, %116, %cst_51 {dimension_numbers = #tpu.dot_dimension_numbers<[1], [0], [0], [1], [0, 0, 1, 1], [], []>} : vector<24x8xbf16>, vector<8x16xbf16>, vector<24x16xf32> -> vector<24x16xf32>
    %118 = arith.addf %80, %117 : vector<24x16xf32>
    %119 = vector.extract_strided_slice %69 {offsets = [0, 0, 8], sizes = [6, 4, 8], strides = [1, 1, 1]} : vector<6x4x16xf32> to vector<6x4x8xf32>
    %120 = vector.extract_strided_slice %71 {offsets = [0, 0, 8], sizes = [6, 8, 8], strides = [1, 1, 1]} : vector<6x8x16xf32> to vector<6x8x8xf32>
    "tpu.trace_start"() <{level = 10 : i32, message = "mqd,mkd->mqk"}> : () -> ()
    %cst_52 = arith.constant dense<0.000000e+00> : vector<6x4x8xf32>
    %121 = tpu.matmul %119, %120, %cst_52 {dimension_numbers = #tpu.dot_dimension_numbers<[2], [2], [1], [1], [0, 0, 0, 1, 1, 1], [0], [0]>} : vector<6x4x8xf32>, vector<6x8x8xf32>, vector<6x4x8xf32> -> vector<6x4x8xf32>
    "tpu.trace_stop"() : () -> ()
    %cst_53 = arith.constant 0.353553385 : f32
    %122 = vector.broadcast %cst_53 : f32 to vector<6x4x8xf32>
    %123 = arith.mulf %121, %122 : vector<6x4x8xf32>
    %124 = vector.extract_strided_slice %75 {offsets = [0, 0, 8], sizes = [6, 4, 8], strides = [1, 1, 1]} : vector<6x4x16xf32> to vector<6x4x8xf32>
    "tpu.trace_start"() <{level = 10 : i32, message = "mqd,mkd->mqk"}> : () -> ()
    %cst_54 = arith.constant dense<0.000000e+00> : vector<6x4x4xf32>
    %125 = tpu.matmul %119, %124, %cst_54 {dimension_numbers = #tpu.dot_dimension_numbers<[2], [2], [1], [1], [0, 0, 0, 1, 1, 1], [0], [0]>} : vector<6x4x8xf32>, vector<6x4x8xf32>, vector<6x4x4xf32> -> vector<6x4x4xf32>
    "tpu.trace_stop"() : () -> ()
    %cst_55 = arith.constant 0.353553385 : f32
    %126 = vector.broadcast %cst_55 : f32 to vector<6x4x4xf32>
    %127 = arith.mulf %125, %126 : vector<6x4x4xf32>
    %cst_56 = arith.constant dense<0xFF800000> : vector<6x4xf32>
    %128 = vector.multi_reduction <maximumf>, %123, %cst_56 [2] : vector<6x4x8xf32> to vector<6x4xf32>
    %129 = vector.shape_cast %128 : vector<6x4xf32> to vector<6x4x1xf32>
    %cst_57 = arith.constant dense<0xFF800000> : vector<6x4xf32>
    %130 = vector.multi_reduction <maximumf>, %127, %cst_57 [2] : vector<6x4x4xf32> to vector<6x4xf32>
    %131 = vector.shape_cast %130 : vector<6x4xf32> to vector<6x4x1xf32>
    %132 = arith.maximumf %129, %131 : vector<6x4x1xf32>
    %133 = vector.broadcast %132 : vector<6x4x1xf32> to vector<6x4x8xf32>
    %134 = arith.subf %123, %133 : vector<6x4x8xf32>
    %135 = math.exp %134 : vector<6x4x8xf32>
    %136 = vector.broadcast %132 : vector<6x4x1xf32> to vector<6x4x4xf32>
    %137 = arith.subf %127, %136 : vector<6x4x4xf32>
    %138 = math.exp %137 : vector<6x4x4xf32>
    %cst_58 = arith.constant dense<0.000000e+00> : vector<6x4xf32>
    %139 = vector.multi_reduction <add>, %135, %cst_58 [2] : vector<6x4x8xf32> to vector<6x4xf32>
    %140 = vector.shape_cast %139 : vector<6x4xf32> to vector<6x4x1xf32>
    %cst_59 = arith.constant dense<0.000000e+00> : vector<6x4xf32>
    %141 = vector.multi_reduction <add>, %138, %cst_59 [2] : vector<6x4x4xf32> to vector<6x4xf32>
    %142 = vector.shape_cast %141 : vector<6x4xf32> to vector<6x4x1xf32>
    %143 = arith.addf %140, %142 : vector<6x4x1xf32>
    %144 = vector.extract_strided_slice %73 {offsets = [0, 0, 8], sizes = [6, 8, 8], strides = [1, 1, 1]} : vector<6x8x16xf32> to vector<6x8x8xf32>
    "tpu.trace_start"() <{level = 10 : i32, message = "mqk,mkd->mqd"}> : () -> ()
    %cst_60 = arith.constant dense<0.000000e+00> : vector<6x4x8xf32>
    %145 = tpu.matmul %135, %144, %cst_60 {dimension_numbers = #tpu.dot_dimension_numbers<[2], [1], [1], [2], [0, 0, 0, 1, 1, 2], [0], [0]>} : vector<6x4x8xf32>, vector<6x8x8xf32>, vector<6x4x8xf32> -> vector<6x4x8xf32>
    "tpu.trace_stop"() : () -> ()
    %146 = vector.extract_strided_slice %77 {offsets = [0, 0, 8], sizes = [6, 4, 8], strides = [1, 1, 1]} : vector<6x4x16xf32> to vector<6x4x8xf32>
    "tpu.trace_start"() <{level = 10 : i32, message = "mqk,mkd->mqd"}> : () -> ()
    %cst_61 = arith.constant dense<0.000000e+00> : vector<6x4x8xf32>
    %147 = tpu.matmul %138, %146, %cst_61 {dimension_numbers = #tpu.dot_dimension_numbers<[2], [1], [1], [2], [0, 0, 0, 1, 1, 2], [0], [0]>} : vector<6x4x4xf32>, vector<6x4x8xf32>, vector<6x4x8xf32> -> vector<6x4x8xf32>
    "tpu.trace_stop"() : () -> ()
    %148 = arith.addf %145, %147 : vector<6x4x8xf32>
    %149 = tpu.reciprocal %143 {approx = true} : vector<6x4x1xf32> -> vector<6x4x1xf32>
    %150 = vector.broadcast %149 : vector<6x4x1xf32> to vector<6x4x8xf32>
    %151 = arith.mulf %148, %150 : vector<6x4x8xf32>
    %152 = vector.shape_cast %151 : vector<6x4x8xf32> to vector<24x8xf32>
    %153 = arith.truncf %152 : vector<24x8xf32> to vector<24x8xbf16>
    %154 = vector.extract_strided_slice %79 {offsets = [8, 0], sizes = [8, 16], strides = [1, 1]} : vector<16x16xbf16> to vector<8x16xbf16>
    %cst_62 = arith.constant dense<0.000000e+00> : vector<24x16xf32>
    %155 = tpu.matmul %153, %154, %cst_62 {dimension_numbers = #tpu.dot_dimension_numbers<[1], [0], [0], [1], [0, 0, 1, 1], [], []>} : vector<24x8xbf16>, vector<8x16xbf16>, vector<24x16xf32> -> vector<24x16xf32>
    %156 = arith.addf %118, %155 : vector<24x16xf32>
    %157 = arith.addf %3, %156 : vector<24x16xf32>
    %c0_63 = arith.constant 0 : index
    %c0_64 = arith.constant 0 : index
    %c0_65 = arith.constant 0 : index
    %158 = vector.load %arg10[%c0_63, %c0_64, %c0_65] : memref<1x1x16xf32, #tpu.memory_space<vmem>>, vector<1x1x16xf32>
    %159 = vector.shape_cast %158 : vector<1x1x16xf32> to vector<1x16xf32>
    %c0_66 = arith.constant 0 : index
    %c0_67 = arith.constant 0 : index
    %c0_68 = arith.constant 0 : index
    %160 = vector.load %arg11[%c0_66, %c0_67, %c0_68] : memref<1x1x16xf32, #tpu.memory_space<vmem>>, vector<1x1x16xf32>
    %161 = vector.shape_cast %160 : vector<1x1x16xf32> to vector<1x16xf32>
    %cst_69 = arith.constant dense<0.000000e+00> : vector<24xf32>
    %162 = vector.multi_reduction <add>, %157, %cst_69 [1] : vector<24x16xf32> to vector<24xf32>
    %163 = vector.shape_cast %162 : vector<24xf32> to vector<24x1xf32>
    %cst_70 = arith.constant 1.600000e+01 : f32
    %164 = vector.broadcast %cst_70 : f32 to vector<24x1xf32>
    %165 = arith.divf %163, %164 : vector<24x1xf32>
    %166 = vector.broadcast %165 : vector<24x1xf32> to vector<24x16xf32>
    %167 = arith.subf %157, %166 : vector<24x16xf32>
    %168 = arith.mulf %167, %167 : vector<24x16xf32>
    %cst_71 = arith.constant dense<0.000000e+00> : vector<24xf32>
    %169 = vector.multi_reduction <add>, %168, %cst_71 [1] : vector<24x16xf32> to vector<24xf32>
    %170 = vector.shape_cast %169 : vector<24xf32> to vector<24x1xf32>
    %cst_72 = arith.constant 1.600000e+01 : f32
    %171 = vector.broadcast %cst_72 : f32 to vector<24x1xf32>
    %172 = arith.divf %170, %171 : vector<24x1xf32>
    %173 = vector.broadcast %165 : vector<24x1xf32> to vector<24x16xf32>
    %174 = arith.subf %157, %173 : vector<24x16xf32>
    %cst_73 = arith.constant 9.99999974E-6 : f32
    %175 = vector.broadcast %cst_73 : f32 to vector<24x1xf32>
    %176 = arith.addf %172, %175 : vector<24x1xf32>
    %177 = math.rsqrt %176 : vector<24x1xf32>
    %178 = vector.broadcast %177 : vector<24x1xf32> to vector<24x16xf32>
    %179 = arith.mulf %174, %178 : vector<24x16xf32>
    %180 = vector.broadcast %159 : vector<1x16xf32> to vector<24x16xf32>
    %181 = arith.mulf %179, %180 : vector<24x16xf32>
    %182 = vector.broadcast %161 : vector<1x16xf32> to vector<24x16xf32>
    %183 = arith.addf %181, %182 : vector<24x16xf32>
    %184 = arith.truncf %183 : vector<24x16xf32> to vector<24x16xbf16>
    %c0_74 = arith.constant 0 : index
    %c0_75 = arith.constant 0 : index
    %c0_76 = arith.constant 0 : index
    %185 = vector.load %arg12[%c0_74, %c0_75, %c0_76] : memref<1x16x64xbf16, #tpu.memory_space<vmem>>, vector<1x16x64xbf16>
    %186 = vector.shape_cast %185 : vector<1x16x64xbf16> to vector<16x64xbf16>
    %cst_77 = arith.constant dense<0.000000e+00> : vector<24x64xf32>
    %187 = tpu.matmul %184, %186, %cst_77 {dimension_numbers = #tpu.dot_dimension_numbers<[1], [0], [0], [1], [0, 0, 1, 1], [], []>} : vector<24x16xbf16>, vector<16x64xbf16>, vector<24x64xf32> -> vector<24x64xf32>
    %c0_78 = arith.constant 0 : index
    %c0_79 = arith.constant 0 : index
    %c0_80 = arith.constant 0 : index
    %188 = vector.load %arg13[%c0_78, %c0_79, %c0_80] : memref<1x1x64xf32, #tpu.memory_space<vmem>>, vector<1x1x64xf32>
    %189 = vector.shape_cast %188 : vector<1x1x64xf32> to vector<1x64xf32>
    %190 = vector.broadcast %189 : vector<1x64xf32> to vector<24x64xf32>
    %191 = arith.addf %187, %190 : vector<24x64xf32>
    %192 = arith.mulf %191, %191 : vector<24x64xf32>
    %193 = arith.mulf %191, %192 : vector<24x64xf32>
    %cst_81 = arith.constant 4.471500e-02 : f32
    %194 = vector.broadcast %cst_81 : f32 to vector<24x64xf32>
    %195 = arith.mulf %194, %193 : vector<24x64xf32>
    %196 = arith.addf %191, %195 : vector<24x64xf32>
    %cst_82 = arith.constant 0.797884583 : f32
    %197 = vector.broadcast %cst_82 : f32 to vector<24x64xf32>
    %198 = arith.mulf %197, %196 : vector<24x64xf32>
    %199 = math.tanh %198 : vector<24x64xf32>
    %cst_83 = arith.constant 1.000000e+00 : f32
    %200 = vector.broadcast %cst_83 : f32 to vector<24x64xf32>
    %201 = arith.addf %200, %199 : vector<24x64xf32>
    %cst_84 = arith.constant 5.000000e-01 : f32
    %202 = vector.broadcast %cst_84 : f32 to vector<24x64xf32>
    %203 = arith.mulf %202, %201 : vector<24x64xf32>
    %204 = arith.mulf %191, %203 : vector<24x64xf32>
    %205 = arith.truncf %204 : vector<24x64xf32> to vector<24x64xbf16>
    %c0_85 = arith.constant 0 : index
    %c0_86 = arith.constant 0 : index
    %c0_87 = arith.constant 0 : index
    %206 = vector.load %arg14[%c0_85, %c0_86, %c0_87] : memref<1x64x16xbf16, #tpu.memory_space<vmem>>, vector<1x64x16xbf16>
    %207 = vector.shape_cast %206 : vector<1x64x16xbf16> to vector<64x16xbf16>
    %cst_88 = arith.constant dense<0.000000e+00> : vector<24x16xf32>
    %208 = tpu.matmul %205, %207, %cst_88 {dimension_numbers = #tpu.dot_dimension_numbers<[1], [0], [0], [1], [0, 0, 1, 1], [], []>} : vector<24x64xbf16>, vector<64x16xbf16>, vector<24x16xf32> -> vector<24x16xf32>
    %209 = arith.addf %157, %208 : vector<24x16xf32>
    %c0_89 = arith.constant 0 : index
    %c0_90 = arith.constant 0 : index
    %c0_91 = arith.constant 0 : index
    %210 = vector.load %arg15[%c0_89, %c0_90, %c0_91] : memref<1x1x16xf32, #tpu.memory_space<vmem>>, vector<1x1x16xf32>
    %211 = vector.shape_cast %210 : vector<1x1x16xf32> to vector<1x16xf32>
    %212 = vector.broadcast %211 : vector<1x16xf32> to vector<24x16xf32>
    %213 = arith.addf %209, %212 : vector<24x16xf32>
    %c0_92 = arith.constant 0 : index
    %c0_93 = arith.constant 0 : index
    %214 = vector.load %arg20[%c0_92, %c0_93] : memref<24x16xf32, #tpu.memory_space<vmem>>, vector<24x16xf32>
    tpu.vector_store %arg20[%c0_92, %c0_93], %213 {strides = array<i32>} : memref<24x16xf32, #tpu.memory_space<vmem>>, vector<24x16xf32>,
    %c1_i32 = arith.constant 1 : i32
    %215 = arith.cmpi eq, %arg0, %c1_i32 : i32
    %216 = arith.extui %215 : i1 to i32
    %c0_i32_94 = arith.constant 0 : i32
    %217 = arith.cmpi ne, %216, %c0_i32_94 : i32
    scf.if %217 {
      %c0_95 = arith.constant 0 : index
      %c0_96 = arith.constant 0 : index
      %218 = vector.load %arg16[%c0_95, %c0_96] : memref<1x16xf32, #tpu.memory_space<vmem>>, vector<1x16xf32>
      %c0_97 = arith.constant 0 : index
      %c0_98 = arith.constant 0 : index
      %219 = vector.load %arg17[%c0_97, %c0_98] : memref<1x16xf32, #tpu.memory_space<vmem>>, vector<1x16xf32>
      %cst_99 = arith.constant dense<0.000000e+00> : vector<24xf32>
      %220 = vector.multi_reduction <add>, %213, %cst_99 [1] : vector<24x16xf32> to vector<24xf32>
      %221 = vector.shape_cast %220 : vector<24xf32> to vector<24x1xf32>
      %cst_100 = arith.constant 1.600000e+01 : f32
      %222 = vector.broadcast %cst_100 : f32 to vector<24x1xf32>
      %223 = arith.divf %221, %222 : vector<24x1xf32>
      %224 = vector.broadcast %223 : vector<24x1xf32> to vector<24x16xf32>
      %225 = arith.subf %213, %224 : vector<24x16xf32>
      %226 = arith.mulf %225, %225 : vector<24x16xf32>
      %cst_101 = arith.constant dense<0.000000e+00> : vector<24xf32>
      %227 = vector.multi_reduction <add>, %226, %cst_101 [1] : vector<24x16xf32> to vector<24xf32>
      %228 = vector.shape_cast %227 : vector<24xf32> to vector<24x1xf32>
      %cst_102 = arith.constant 1.600000e+01 : f32
      %229 = vector.broadcast %cst_102 : f32 to vector<24x1xf32>
      %230 = arith.divf %228, %229 : vector<24x1xf32>
      %231 = vector.broadcast %223 : vector<24x1xf32> to vector<24x16xf32>
      %232 = arith.subf %213, %231 : vector<24x16xf32>
      %cst_103 = arith.constant 9.99999974E-6 : f32
      %233 = vector.broadcast %cst_103 : f32 to vector<24x1xf32>
      %234 = arith.addf %230, %233 : vector<24x1xf32>
      %235 = math.rsqrt %234 : vector<24x1xf32>
      %236 = vector.broadcast %235 : vector<24x1xf32> to vector<24x16xf32>
      %237 = arith.mulf %232, %236 : vector<24x16xf32>
      %238 = vector.broadcast %218 : vector<1x16xf32> to vector<24x16xf32>
      %239 = arith.mulf %237, %238 : vector<24x16xf32>
      %240 = vector.broadcast %219 : vector<1x16xf32> to vector<24x16xf32>
      %241 = arith.addf %239, %240 : vector<24x16xf32>
      %242 = arith.truncf %241 : vector<24x16xf32> to vector<24x16xbf16>
      %c0_104 = arith.constant 0 : index
      %c0_105 = arith.constant 0 : index
      %243 = vector.load %arg18[%c0_104, %c0_105] : memref<16x32xbf16, #tpu.memory_space<vmem>>, vector<16x32xbf16>
      %cst_106 = arith.constant dense<0.000000e+00> : vector<24x32xf32>
      %244 = tpu.matmul %242, %243, %cst_106 {dimension_numbers = #tpu.dot_dimension_numbers<[1], [0], [0], [1], [0, 0, 1, 1], [], []>} : vector<24x16xbf16>, vector<16x32xbf16>, vector<24x32xf32> -> vector<24x32xf32>
      %c0_107 = arith.constant 0 : index
      %c0_108 = arith.constant 0 : index
      %245 = vector.load %arg19[%c0_107, %c0_108] : memref<24x32xf32, #tpu.memory_space<vmem>>, vector<24x32xf32>
      tpu.vector_store %arg19[%c0_107, %c0_108], %244 {strides = array<i32>} : memref<24x32xf32, #tpu.memory_space<vmem>>, vector<24x32xf32>,
    } else {
    }
    return
  }
  func.func @transform_0(%arg0: i32) -> (i32, i32) {
    %c0_i32 = arith.constant 0 : i32
    %c0_i32_0 = arith.constant 0 : i32
    %c0_i32_1 = arith.constant 0 : i32
    return %c0_i32, %c0_i32_0 : i32, i32
  }
  func.func @transform_1(%arg0: i32) -> (i32, i32) {
    %c0_i32 = arith.constant 0 : i32
    %c0_i32_0 = arith.constant 0 : i32
    %c0_i32_1 = arith.constant 0 : i32
    return %c0_i32, %c0_i32_0 : i32, i32
  }
  func.func @transform_2(%arg0: i32) -> (i32, i32, i32) {
    %c0_i32 = arith.constant 0 : i32
    %c0_i32_0 = arith.constant 0 : i32
    %c0_i32_1 = arith.constant 0 : i32
    return %arg0, %c0_i32, %c0_i32_0 : i32, i32, i32
  }
  func.func @transform_3(%arg0: i32) -> (i32, i32, i32) {
    %c0_i32 = arith.constant 0 : i32
    %c0_i32_0 = arith.constant 0 : i32
    %c0_i32_1 = arith.constant 0 : i32
    return %arg0, %c0_i32, %c0_i32_0 : i32, i32, i32
  }
  func.func @transform_4(%arg0: i32) -> (i32, i32, i32) {
    %c0_i32 = arith.constant 0 : i32
    %c0_i32_0 = arith.constant 0 : i32
    %c0_i32_1 = arith.constant 0 : i32
    return %arg0, %c0_i32, %c0_i32_0 : i32, i32, i32
  }
  func.func @transform_5(%arg0: i32) -> (i32, i32, i32) {
    %c0_i32 = arith.constant 0 : i32
    %c0_i32_0 = arith.constant 0 : i32
    %c0_i32_1 = arith.constant 0 : i32
    return %arg0, %c0_i32, %c0_i32_0 : i32, i32, i32
  }
  func.func @transform_6(%arg0: i32) -> (i32, i32, i32) {
    %c0_i32 = arith.constant 0 : i32
    %c0_i32_0 = arith.constant 0 : i32
    %c0_i32_1 = arith.constant 0 : i32
    return %arg0, %c0_i32, %c0_i32_0 : i32, i32, i32
  }
  func.func @transform_7(%arg0: i32) -> (i32, i32, i32) {
    %c0_i32 = arith.constant 0 : i32
    %c0_i32_0 = arith.constant 0 : i32
    %c0_i32_1 = arith.constant 0 : i32
    return %arg0, %c0_i32, %c0_i32_0 : i32, i32, i32
  }
  func.func @transform_8(%arg0: i32) -> (i32, i32, i32) {
    %c0_i32 = arith.constant 0 : i32
    %c0_i32_0 = arith.constant 0 : i32
    %c0_i32_1 = arith.constant 0 : i32
    return %arg0, %c0_i32, %c0_i32_0 : i32, i32, i32
  }
  func.func @transform_9(%arg0: i32) -> (i32, i32, i32) {
    %c0_i32 = arith.constant 0 : i32
    %c0_i32_0 = arith.constant 0 : i32
    %c0_i32_1 = arith.constant 0 : i32
    return %arg0, %c0_i32, %c0_i32_0 : i32, i32, i32
  }
  func.func @transform_10(%arg0: i32) -> (i32, i32, i32) {
    %c0_i32 = arith.constant 0 : i32
    %c0_i32_0 = arith.constant 0 : i32
    %c0_i32_1 = arith.constant 0 : i32
    return %arg0, %c0_i32, %c0_i32_0 : i32, i32, i32
  }
  func.func @transform_11(%arg0: i32) -> (i32, i32, i32) {
    %c0_i32 = arith.constant 0 : i32
    %c0_i32_0 = arith.constant 0 : i32
    %c0_i32_1 = arith.constant 0 : i32
    return %arg0, %c0_i32, %c0_i32_0 : i32, i32, i32
  }
  func.func @transform_12(%arg0: i32) -> (i32, i32, i32) {
    %c0_i32 = arith.constant 0 : i32
    %c0_i32_0 = arith.constant 0 : i32
    %c0_i32_1 = arith.constant 0 : i32
    return %arg0, %c0_i32, %c0_i32_0 : i32, i32, i32
  }
  func.func @transform_13(%arg0: i32) -> (i32, i32, i32) {
    %c0_i32 = arith.constant 0 : i32
    %c0_i32_0 = arith.constant 0 : i32
    %c0_i32_1 = arith.constant 0 : i32
    return %arg0, %c0_i32, %c0_i32_0 : i32, i32, i32
  }
  func.func @transform_14(%arg0: i32) -> (i32, i32, i32) {
    %c0_i32 = arith.constant 0 : i32
    %c0_i32_0 = arith.constant 0 : i32
    %c0_i32_1 = arith.constant 0 : i32
    return %arg0, %c0_i32, %c0_i32_0 : i32, i32, i32
  }
  func.func @transform_15(%arg0: i32) -> (i32, i32) {
    %c0_i32 = arith.constant 0 : i32
    %c0_i32_0 = arith.constant 0 : i32
    %c0_i32_1 = arith.constant 0 : i32
    return %c0_i32, %c0_i32_0 : i32, i32
  }
  func.func @transform_16(%arg0: i32) -> (i32, i32) {
    %c0_i32 = arith.constant 0 : i32
    %c0_i32_0 = arith.constant 0 : i32
    %c0_i32_1 = arith.constant 0 : i32
    return %c0_i32, %c0_i32_0 : i32, i32
  }
  func.func @transform_17(%arg0: i32) -> (i32, i32) {
    %c0_i32 = arith.constant 0 : i32
    %c0_i32_0 = arith.constant 0 : i32
    %c0_i32_1 = arith.constant 0 : i32
    return %c0_i32, %c0_i32_0 : i32, i32
  }
  func.func @transform_18(%arg0: i32) -> (i32, i32) {
    %c0_i32 = arith.constant 0 : i32
    %c0_i32_0 = arith.constant 0 : i32
    %c0_i32_1 = arith.constant 0 : i32
    return %c0_i32, %c0_i32_0 : i32, i32
  }
}

</mosaic_0001>

<llo_original>
// kernel: tile.29
$region0: #{tile.29}
  %s0 = inlined_call_operand.vmem [shape: f32[8,2,16], index: 0, kind: input, shape index: {}]
  %s1 = inlined_call_operand.vmem [shape: f32[8,32], index: 1, kind: output, shape index: {}]
  $region1: #{tile.29} parent=0
    #allocation0 [shape = 'u8[32768]{0}', space=vmem, size = 0x8000, scoped, tag = 'scoped mem for input reshape']
    %s3 = ssub.s32 4, 1
    %s4 = scalar_lea.vmem %s0, 14
    %v5 = vld [vmem:[%s4] sm:%s3]
    %s6 = scalar_lea.vmem [#allocation0], 56
    %7 = vst [vmem:[%s6] sm:%s3] %v5
    %s8 = scalar_lea.vmem %s0, 12
    %v9 = vld [vmem:[%s8] sm:%s3]
    %s10 = scalar_lea.vmem [#allocation0], 48
    %11 = vst [vmem:[%s10] sm:%s3] %v9
    %s12 = scalar_lea.vmem %s0, 10
    %v13 = vld [vmem:[%s12] sm:%s3]
    %s14 = scalar_lea.vmem [#allocation0], 40
    %15 = vst [vmem:[%s14] sm:%s3] %v13
    %s16 = scalar_lea.vmem %s0, 8
    %v17 = vld [vmem:[%s16] sm:%s3]
    %s18 = scalar_lea.vmem [#allocation0], 32
    %19 = vst [vmem:[%s18] sm:%s3] %v17
    %s20 = scalar_lea.vmem %s0, 6
    %v21 = vld [vmem:[%s20] sm:%s3]
    %s22 = scalar_lea.vmem [#allocation0], 24
    %23 = vst [vmem:[%s22] sm:%s3] %v21
    %s24 = scalar_lea.vmem %s0, 4
    %v25 = vld [vmem:[%s24] sm:%s3]
    %s26 = scalar_lea.vmem [#allocation0], 16
    %27 = vst [vmem:[%s26] sm:%s3] %v25
    %s28 = scalar_lea.vmem %s0, 2
    %v29 = vld [vmem:[%s28] sm:%s3]
    %s30 = scalar_lea.vmem [#allocation0], 8
    %31 = vst [vmem:[%s30] sm:%s3] %v29
    %v32 = vld [vmem:[%s0] sm:%s3]
    %33 = vst [vmem:[#allocation0] sm:%s3] %v32
    %v34 = vld [vmem:[#allocation0] ss:$8 sm:$0xf]
    %v35 = vld [vmem:[#allocation0] ss:$8 sm:$0xf0]
    %vm36 = vcmask 1047556
    %v37 = vsel %vm36, %v35, %v34
    %vm38 = vcmask 130048
    %39 = vst.msk [vmem:[%s1] sm:$0xff] %vm38, %v37
    %s40 = scalar_lea.vmem [#allocation0], 1
    %v41 = vld [vmem:[%s40] ss:$8 sm:$0xf]
    %s42 = scalar_lea.vmem [#allocation0], 1
    %v43 = vld [vmem:[%s42] ss:$8 sm:$0xf0]
    %vm44 = vcmask 1047556
    %v45 = vsel %vm44, %v43, %v41
    %46 = vrot.lane.b32.xlu0 %v45, 16
    %v47 = vpop.permute.xlu0 %46
    %vm48 = vcmask 261248
    %49 = vst.msk [vmem:[%s1] sm:$0xff] %vm48, %v47

// kernel: palme_forward.3
$region0: #{palme_forward.3}
  #allocation0 [shape = 'u32[]', space=smem, size = 0x4, offset = 0x4, fixed_abs, tag = 'smem constant byte address 0x4 - core index']
  #allocation1 [shape = 'u32[72,128]{1,0:T(1,128)}', space=vmem, size = 0x9000, scoped, tag = 'internal scratch']
  %s0 = inlined_call_operand.vmem [shape: f32[2,64], index: 0, kind: input, shape index: {}]
  %s1 = inlined_call_operand.vmem [shape: f32[64,384], index: 1, kind: input, shape index: {}]
  %s2 = inlined_call_operand.vmem [shape: f32[1,384], index: 2, kind: input, shape index: {}]
  %s3 = inlined_call_operand.vmem [shape: f32[2,384], index: 3, kind: output, shape index: {}]
  %s4 = sld [smem:[#allocation0]]
  $region22: #{palme_forward.3} parent=0
    _
  %s6 = ssub.s32 1, %s4
  %s7 = scalar_select 0, %s6, %s4
  // Predicated region
  $region2: #{palme_forward.3} parent=0 // pred_check
    _
  $region3: #{palme_forward.3} parent=0 // pred_check_branch
    %9 = sbr.rel (0) target = $region5
  $region4: #{palme_forward.3} parent=0 // pred_region
    _
  $region5: #{palme_forward.3} parent=0 // pred_fallthru
    _
  // Predicated region
  $region6: #{palme_forward.3} parent=0 // pred_check
    _
  $region7: #{palme_forward.3} parent=0 // pred_check_branch
    %11 = sbr.rel (0) target = $region9
  $region8: #{palme_forward.3} parent=0 // pred_region
    _
  $region9: #{palme_forward.3} parent=0 // pred_fallthru
    _
  // Predicated region
  $region10: #{palme_forward.3} parent=0 // pred_check
    _
  $region11: #{palme_forward.3} parent=0 // pred_check_branch
    %13 = sbr.rel (0) target = $region13
  $region12: #{palme_forward.3} parent=0 // pred_region
    _
  $region13: #{palme_forward.3} parent=0 // pred_fallthru
    _
  %v14 = vld [vmem:[%s0] sm:$0x3]
  %v15 = vld [vmem:[%s1] sm:$0xff]
  %v16 = vld [vmem:[%s1 + $0x8] sm:$0xff]
  %v17 = vld [vmem:[%s1 + $0x10] sm:$0xff]
  %v18 = vld [vmem:[%s1 + $0x18] sm:$0xff]
  %v19 = vld [vmem:[%s1 + $0x20] sm:$0xff]
  %v20 = vld [vmem:[%s1 + $0x28] sm:$0xff]
  %v21 = vld [vmem:[%s1 + $0x30] sm:$0xff]
  %v22 = vld [vmem:[%s1 + $0x38] sm:$0xff]
  %v23 = vld [vmem:[%s1 + $0x40] sm:$0xff]
  %v24 = vld [vmem:[%s1 + $0x48] sm:$0xff]
  %v25 = vld [vmem:[%s1 + $0x50] sm:$0xff]
  %v26 = vld [vmem:[%s1 + $0x58] sm:$0xff]
  %v27 = vld [vmem:[%s1 + $0x60] sm:$0xff]
  %v28 = vld [vmem:[%s1 + $0x68] sm:$0xff]
  %v29 = vld [vmem:[%s1 + $0x70] sm:$0xff]
  %v30 = vld [vmem:[%s1 + $0x78] sm:$0xff]
  %v31 = vld [vmem:[%s1 + $0x80] sm:$0xff]
  %v32 = vld [vmem:[%s1 + $0x88] sm:$0xff]
  %v33 = vld [vmem:[%s1 + $0x90] sm:$0xff]
  %v34 = vld [vmem:[%s1 + $0x98] sm:$0xff]
  %v35 = vld [vmem:[%s1 + $0xa0] sm:$0xff]
  %v36 = vld [vmem:[%s1 + $0xa8] sm:$0xff]
  %v37 = vld [vmem:[%s1 + $0xb0] sm:$0xff]
  %v38 = vld [vmem:[%s1 + $0xb8] sm:$0xff]
  %v39 = vld [vmem:[%s2] sm:$0x7]
  %v41 = vperm.slane %v39, 0
  %v42 = vperm.slane %v39, 1
  %v43 = vperm.slane %v39, 2
  %vm47 = vcmask 523264
  %v49 = vsel %vm47, %v14, 0
  %51 = vmatpush.msra.mxu0 0.0
  %52 = vmatpush.msra.mxu0 0.0
  %53 = vmatpush.msra.mxu0 0.0
  %54 = vmatpush.msra.mxu0 0.0
  %55 = vmatpush.msra.mxu0 0.0
  %56 = vmatpush.msra.mxu0 0.0
  %57 = vmatpush.msra.mxu0 0.0
  %58 = vmatpush.msra.mxu0 0.0
  %59 = vmatpush.msra.mxu0 %v36
  %60 = vmatpush.msra.mxu0 %v33
  %61 = vmatpush.msra.mxu0 %v30
  %62 = vmatpush.msra.mxu0 %v27
  %63 = vmatpush.msra.mxu0 %v24
  %64 = vmatpush.msra.mxu0 %v21
  %65 = vmatpush.msra.mxu0 %v18
  %66 = vmatpush.msra.mxu0 %v15
  %67 = vmatmul.f32.gmra.mxu0 %v49
  %v68 = vpop.f32.mrf.mxu0
  %v69 = vadd.f32 %v41, %v68
  %70 = vdwg.mxu0
  %71 = vmatpush.msra.mxu0 0.0
  %72 = vmatpush.msra.mxu0 0.0
  %73 = vmatpush.msra.mxu0 0.0
  %74 = vmatpush.msra.mxu0 0.0
  %75 = vmatpush.msra.mxu0 0.0
  %76 = vmatpush.msra.mxu0 0.0
  %77 = vmatpush.msra.mxu0 0.0
  %78 = vmatpush.msra.mxu0 0.0
  %79 = vmatpush.msra.mxu0 %v37
  %80 = vmatpush.msra.mxu0 %v34
  %81 = vmatpush.msra.mxu0 %v31
  %82 = vmatpush.msra.mxu0 %v28
  %83 = vmatpush.msra.mxu0 %v25
  %84 = vmatpush.msra.mxu0 %v22
  %85 = vmatpush.msra.mxu0 %v19
  %86 = vmatpush.msra.mxu0 %v16
  %87 = vmatmul.f32.gmra.mxu0 %v49
  %v88 = vpop.f32.mrf.mxu0
  %v89 = vadd.f32 %v42, %v88
  %90 = vdwg.mxu0
  %91 = vmatpush.msra.mxu0 0.0
  %92 = vmatpush.msra.mxu0 0.0
  %93 = vmatpush.msra.mxu0 0.0
  %94 = vmatpush.msra.mxu0 0.0
  %95 = vmatpush.msra.mxu0 0.0
  %96 = vmatpush.msra.mxu0 0.0
  %97 = vmatpush.msra.mxu0 0.0
  %98 = vmatpush.msra.mxu0 0.0
  %99 = vmatpush.msra.mxu0 %v38
  %100 = vmatpush.msra.mxu0 %v35
  %101 = vmatpush.msra.mxu0 %v32
  %102 = vmatpush.msra.mxu0 %v29
  %103 = vmatpush.msra.mxu0 %v26
  %104 = vmatpush.msra.mxu0 %v23
  %105 = vmatpush.msra.mxu0 %v20
  %106 = vmatpush.msra.mxu0 %v17
  %107 = vmatmul.f32.gmra.mxu0 %v49
  %v108 = vpop.f32.mrf.mxu0
  %v109 = vadd.f32 %v43, %v108
  %110 = vdwg.mxu0
  %v114 = vrot.slane %v89, 6
  %v115 = vrot.slane %v109, 4
  %vm116 = vcmask 1041408
  %v117 = vsel %vm116, %v69, %v114
  %vm118 = vcmask 1043456
  %v119 = vsel %vm118, %v117, %v115
  %121 = vst [vmem:[%s3] sm:$0x3f] %v119
  // Predicated region
  $region14: #{palme_forward.3} parent=0 // pred_check
    _
  $region15: #{palme_forward.3} parent=0 // pred_check_branch
    %123 = sbr.rel (0) target = $region17
  $region16: #{palme_forward.3} parent=0 // pred_region
    _
  $region17: #{palme_forward.3} parent=0 // pred_fallthru
    _
  // Predicated region
  $region18: #{palme_forward.3} parent=0 // pred_check
    _
  $region19: #{palme_forward.3} parent=0 // pred_check_branch
    %125 = sbr.rel (0) target = $region21
  $region20: #{palme_forward.3} parent=0 // pred_region
    _
  $region21: #{palme_forward.3} parent=0 // pred_fallthru
    _

// kernel: palme_forward.5
$region0: #{palme_forward.5}
  #allocation0 [shape = 'u32[]', space=smem, size = 0x4, offset = 0x4, fixed_abs, tag = 'smem constant byte address 0x4 - core index']
  #allocation1 [shape = 'u32[72,128]{1,0:T(1,128)}', space=vmem, size = 0x9000, scoped, tag = 'internal scratch']
  #allocation2 [shape = 'f32[16,32]{1,0:T(8,128)}', space=vmem, size = 0x2000, scoped, tag = 'scratch operand']
  %s0 = inlined_call_operand.vmem [shape: f32[16,32], index: 0, kind: input, shape index: {}]
  %s1 = inlined_call_operand.vmem [shape: f32[8,32], index: 1, kind: input, shape index: {}]
  %s2 = inlined_call_operand.vmem [shape: f32[8,32], index: 2, kind: input, shape index: {}]
  %s3 = inlined_call_operand.vmem [shape: f32[2,1,32], index: 3, kind: input, shape index: {}]
  %s4 = inlined_call_operand.vmem [shape: f32[2,1,32], index: 4, kind: input, shape index: {}]
  %s5 = inlined_call_operand.vmem [shape: bf16[2,32,352], index: 5, kind: input, shape index: {}]
  %s6 = inlined_call_operand.vmem [shape: bf16[2,32,32], index: 6, kind: input, shape index: {}]
  %s7 = inlined_call_operand.vmem [shape: bf16[2,128,32], index: 7, kind: input, shape index: {}]
  %s8 = inlined_call_operand.vmem [shape: f32[1,32], index: 8, kind: input, shape index: {}]
  %s9 = inlined_call_operand.vmem [shape: f32[1,32], index: 9, kind: input, shape index: {}]
  %s10 = inlined_call_operand.vmem [shape: bf16[32,128], index: 10, kind: input, shape index: {}]
  %s11 = inlined_call_operand.hbm [shape: f32[16,128], index: 11, kind: output, shape index: {}]
  %s12 = sld [smem:[#allocation0]]
  $region85: #{palme_forward.5} parent=0
    _
  %s14 = ssub.s32 1, %s12
  %s15 = scalar_select 0, %s14, %s12
  $region1: #{palme_forward.5} parent=0
    #allocation3 [shape = 'u8[8192]{0}', space=vmem, size = 0x2000, scoped, tag = 'output window, operand 0, single buffered']
    #allocation4 [shape = 's32[2]{0}', space=sflag, size = 0x8, scoped, tag = 'scoped memory for palme_forward.5']
    %16 = vsyncpa [#allocation4], 0
    loop: start=0, step=1, limit=4
    $region2: #{palme_forward.5} parent=1 // loop_pre_header
      _
    $region3: #{palme_forward.5} parent=1 // loop_header
      %s18 = sphi 0, %s22
      %p19 = scmp.ge.s32.totalorder %s18, 4
      %s26 = sphi 0, %s26
      %s28 = sphi 0, %s26
      %s29 = sphi 0, %s28
      %s43 = sphi 0, %s29
      %s47 = sphi 0, %s47
      %s49 = sphi 0, %s47
      %s50 = sphi 0, %s49
      %s64 = sphi 0, %s50
      %s68 = sphi 0, %s68
      %s70 = sphi 0, %s68
      %s71 = sphi 0, %s70
      %s85 = sphi 0, %s71
      %s91 = sphi 0, %s93
      %s94 = sphi 0, %s91
      %s95 = sphi 0, %s94
      %s111 = sphi 0, %s95
      %s117 = sphi 0, %s119
      %s120 = sphi 0, %s117
      %s121 = sphi 0, %s120
      %s137 = sphi 0, %s121
      %s143 = sphi 0, %s145
      %s146 = sphi 0, %s143
      %s147 = sphi 0, %s146
      %s163 = sphi 0, %s147
      %s169 = sphi 0, %s171
      %s172 = sphi 0, %s169
      %s173 = sphi 0, %s172
      %s189 = sphi 0, %s173
      %s195 = sphi 0, %s197
      %s198 = sphi 0, %s195
      %s199 = sphi 0, %s198
      %s215 = sphi 0, %s199
      %s219 = sphi 0, %s219
      %s221 = sphi 0, %s219
      %s222 = sphi 0, %s221
      %s236 = sphi 0, %s222
      %s240 = sphi 0, %s240
      %s242 = sphi 0, %s240
      %s243 = sphi 0, %s242
      %s257 = sphi 0, %s243
      %s261 = sphi 0, %s261
      %s263 = sphi 0, %s261
      %s264 = sphi 0, %s263
      %s278 = sphi 0, %s264
      %s282 = sphi 0, %s282
      %s284 = sphi 0, %s282
      %s285 = sphi 0, %s284
      %s299 = sphi 0, %s285
    $region4: #{palme_forward.5} parent=1 // loop_header_branch
      %21 = sbr.rel (%p19) target = $region8
    $region5: #{palme_forward.5} parent=1 // loop_body
      %s23 = ssub.s32 %s18, 1
      %s24 = ssub.s32 %s18, 2
      %s25 = sadd.s32 %s18, 1
      %s27 = sadd.s32 %s26, 1
      %p30 = scmp.eq.s32.totalorder %s18, 1
      %p31 = scmp.ne.s32.totalorder %s26, %s28
      %p32 = scmp.eq.s32.totalorder %s18, 0
      %p33 = por %p31, %p32
      %p34 = scmp.ne.s32.totalorder %s26, %s28
      %p35 = scmp.eq.s32.totalorder %s23, 1
      %p36 = por %p34, %p35
      %p37 = scmp.ne.s32.totalorder %s28, %s29
      %p38 = scmp.eq.s32.totalorder %s23, 0
      %p39 = por %p37, %p38
      %p40 = scmp.ne.s32.totalorder %s28, %s29
      %p41 = scmp.eq.s32.totalorder %s24, 1
      %p42 = por %p40, %p41
      %p44 = scmp.ne.s32.totalorder %s29, %s43
      %p45 = scmp.eq.s32.totalorder %s24, 0
      %p46 = por %p44, %p45
      %s48 = sadd.s32 %s47, 1
      %p51 = scmp.eq.s32.totalorder %s18, 1
      %p52 = scmp.ne.s32.totalorder %s47, %s49
      %p53 = scmp.eq.s32.totalorder %s18, 0
      %p54 = por %p52, %p53
      %p55 = scmp.ne.s32.totalorder %s47, %s49
      %p56 = scmp.eq.s32.totalorder %s23, 1
      %p57 = por %p55, %p56
      %p58 = scmp.ne.s32.totalorder %s49, %s50
      %p59 = scmp.eq.s32.totalorder %s23, 0
      %p60 = por %p58, %p59
      %p61 = scmp.ne.s32.totalorder %s49, %s50
      %p62 = scmp.eq.s32.totalorder %s24, 1
      %p63 = por %p61, %p62
      %p65 = scmp.ne.s32.totalorder %s50, %s64
      %p66 = scmp.eq.s32.totalorder %s24, 0
      %p67 = por %p65, %p66
      %s69 = sadd.s32 %s68, 1
      %p72 = scmp.eq.s32.totalorder %s18, 1
      %p73 = scmp.ne.s32.totalorder %s68, %s70
      %p74 = scmp.eq.s32.totalorder %s18, 0
      %p75 = por %p73, %p74
      %p76 = scmp.ne.s32.totalorder %s68, %s70
      %p77 = scmp.eq.s32.totalorder %s23, 1
      %p78 = por %p76, %p77
      %p79 = scmp.ne.s32.totalorder %s70, %s71
      %p80 = scmp.eq.s32.totalorder %s23, 0
      %p81 = por %p79, %p80
      %p82 = scmp.ne.s32.totalorder %s70, %s71
      %p83 = scmp.eq.s32.totalorder %s24, 1
      %p84 = por %p82, %p83
      %p86 = scmp.ne.s32.totalorder %s71, %s85
      %p87 = scmp.eq.s32.totalorder %s24, 0
      %p88 = por %p86, %p87
      %s89 = ssub.s32 %s18, %s25
      %p90 = scmp.eq.s32.totalorder %s89, 0
      %s92 = sadd.s32 %s91, 1
      %s93 = scalar_select %p90, %s91, %s92
      %p96 = pneg %p90
      %p97 = scmp.eq.s32.totalorder %s18, 1
      %p98 = por %p96, %p97
      %p99 = scmp.ne.s32.totalorder %s91, %s94
      %p100 = scmp.eq.s32.totalorder %s18, 0
      %p101 = por %p99, %p100
      %p102 = scmp.ne.s32.totalorder %s91, %s94
      %p103 = scmp.eq.s32.totalorder %s23, 1
      %p104 = por %p102, %p103
      %p105 = scmp.ne.s32.totalorder %s94, %s95
      %p106 = scmp.eq.s32.totalorder %s23, 0
      %p107 = por %p105, %p106
      %p108 = scmp.ne.s32.totalorder %s94, %s95
      %p109 = scmp.eq.s32.totalorder %s24, 1
      %p110 = por %p108, %p109
      %p112 = scmp.ne.s32.totalorder %s95, %s111
      %p113 = scmp.eq.s32.totalorder %s24, 0
      %p114 = por %p112, %p113
      %s115 = ssub.s32 %s18, %s25
      %p116 = scmp.eq.s32.totalorder %s115, 0
      %s118 = sadd.s32 %s117, 1
      %s119 = scalar_select %p116, %s117, %s118
      %p122 = pneg %p116
      %p123 = scmp.eq.s32.totalorder %s18, 1
      %p124 = por %p122, %p123
      %p125 = scmp.ne.s32.totalorder %s117, %s120
      %p126 = scmp.eq.s32.totalorder %s18, 0
      %p127 = por %p125, %p126
      %p128 = scmp.ne.s32.totalorder %s117, %s120
      %p129 = scmp.eq.s32.totalorder %s23, 1
      %p130 = por %p128, %p129
      %p131 = scmp.ne.s32.totalorder %s120, %s121
      %p132 = scmp.eq.s32.totalorder %s23, 0
      %p133 = por %p131, %p132
      %p134 = scmp.ne.s32.totalorder %s120, %s121
      %p135 = scmp.eq.s32.totalorder %s24, 1
      %p136 = por %p134, %p135
      %p138 = scmp.ne.s32.totalorder %s121, %s137
      %p139 = scmp.eq.s32.totalorder %s24, 0
      %p140 = por %p138, %p139
      %s141 = ssub.s32 %s18, %s25
      %p142 = scmp.eq.s32.totalorder %s141, 0
      %s144 = sadd.s32 %s143, 1
      %s145 = scalar_select %p142, %s143, %s144
      %p148 = pneg %p142
      %p149 = scmp.eq.s32.totalorder %s18, 1
      %p150 = por %p148, %p149
      %p151 = scmp.ne.s32.totalorder %s143, %s146
      %p152 = scmp.eq.s32.totalorder %s18, 0
      %p153 = por %p151, %p152
      %p154 = scmp.ne.s32.totalorder %s143, %s146
      %p155 = scmp.eq.s32.totalorder %s23, 1
      %p156 = por %p154, %p155
      %p157 = scmp.ne.s32.totalorder %s146, %s147
      %p158 = scmp.eq.s32.totalorder %s23, 0
      %p159 = por %p157, %p158
      %p160 = scmp.ne.s32.totalorder %s146, %s147
      %p161 = scmp.eq.s32.totalorder %s24, 1
      %p162 = por %p160, %p161
      %p164 = scmp.ne.s32.totalorder %s147, %s163
      %p165 = scmp.eq.s32.totalorder %s24, 0
      %p166 = por %p164, %p165
      %s167 = ssub.s32 %s18, %s25
      %p168 = scmp.eq.s32.totalorder %s167, 0
      %s170 = sadd.s32 %s169, 1
      %s171 = scalar_select %p168, %s169, %s170
      %p174 = pneg %p168
      %p175 = scmp.eq.s32.totalorder %s18, 1
      %p176 = por %p174, %p175
      %p177 = scmp.ne.s32.totalorder %s169, %s172
      %p178 = scmp.eq.s32.totalorder %s18, 0
      %p179 = por %p177, %p178
      %p180 = scmp.ne.s32.totalorder %s169, %s172
      %p181 = scmp.eq.s32.totalorder %s23, 1
      %p182 = por %p180, %p181
      %p183 = scmp.ne.s32.totalorder %s172, %s173
      %p184 = scmp.eq.s32.totalorder %s23, 0
      %p185 = por %p183, %p184
      %p186 = scmp.ne.s32.totalorder %s172, %s173
      %p187 = scmp.eq.s32.totalorder %s24, 1
      %p188 = por %p186, %p187
      %p190 = scmp.ne.s32.totalorder %s173, %s189
      %p191 = scmp.eq.s32.totalorder %s24, 0
      %p192 = por %p190, %p191
      %s193 = ssub.s32 %s18, %s25
      %p194 = scmp.eq.s32.totalorder %s193, 0
      %s196 = sadd.s32 %s195, 1
      %s197 = scalar_select %p194, %s195, %s196
      %p200 = pneg %p194
      %p201 = scmp.eq.s32.totalorder %s18, 1
      %p202 = por %p200, %p201
      %p203 = scmp.ne.s32.totalorder %s195, %s198
      %p204 = scmp.eq.s32.totalorder %s18, 0
      %p205 = por %p203, %p204
      %p206 = scmp.ne.s32.totalorder %s195, %s198
      %p207 = scmp.eq.s32.totalorder %s23, 1
      %p208 = por %p206, %p207
      %p209 = scmp.ne.s32.totalorder %s198, %s199
      %p210 = scmp.eq.s32.totalorder %s23, 0
      %p211 = por %p209, %p210
      %p212 = scmp.ne.s32.totalorder %s198, %s199
      %p213 = scmp.eq.s32.totalorder %s24, 1
      %p214 = por %p212, %p213
      %p216 = scmp.ne.s32.totalorder %s199, %s215
      %p217 = scmp.eq.s32.totalorder %s24, 0
      %p218 = por %p216, %p217
      %s220 = sadd.s32 %s219, 1
      %p223 = scmp.eq.s32.totalorder %s18, 1
      %p224 = scmp.ne.s32.totalorder %s219, %s221
      %p225 = scmp.eq.s32.totalorder %s18, 0
      %p226 = por %p224, %p225
      %p227 = scmp.ne.s32.totalorder %s219, %s221
      %p228 = scmp.eq.s32.totalorder %s23, 1
      %p229 = por %p227, %p228
      %p230 = scmp.ne.s32.totalorder %s221, %s222
      %p231 = scmp.eq.s32.totalorder %s23, 0
      %p232 = por %p230, %p231
      %p233 = scmp.ne.s32.totalorder %s221, %s222
      %p234 = scmp.eq.s32.totalorder %s24, 1
      %p235 = por %p233, %p234
      %p237 = scmp.ne.s32.totalorder %s222, %s236
      %p238 = scmp.eq.s32.totalorder %s24, 0
      %p239 = por %p237, %p238
      %s241 = sadd.s32 %s240, 1
      %p244 = scmp.eq.s32.totalorder %s18, 1
      %p245 = scmp.ne.s32.totalorder %s240, %s242
      %p246 = scmp.eq.s32.totalorder %s18, 0
      %p247 = por %p245, %p246
      %p248 = scmp.ne.s32.totalorder %s240, %s242
      %p249 = scmp.eq.s32.totalorder %s23, 1
      %p250 = por %p248, %p249
      %p251 = scmp.ne.s32.totalorder %s242, %s243
      %p252 = scmp.eq.s32.totalorder %s23, 0
      %p253 = por %p251, %p252
      %p254 = scmp.ne.s32.totalorder %s242, %s243
      %p255 = scmp.eq.s32.totalorder %s24, 1
      %p256 = por %p254, %p255
      %p258 = scmp.ne.s32.totalorder %s243, %s257
      %p259 = scmp.eq.s32.totalorder %s24, 0
      %p260 = por %p258, %p259
      %s262 = sadd.s32 %s261, 1
      %p265 = scmp.eq.s32.totalorder %s18, 1
      %p266 = scmp.ne.s32.totalorder %s261, %s263
      %p267 = scmp.eq.s32.totalorder %s18, 0
      %p268 = por %p266, %p267
      %p269 = scmp.ne.s32.totalorder %s261, %s263
      %p270 = scmp.eq.s32.totalorder %s23, 1
      %p271 = por %p269, %p270
      %p272 = scmp.ne.s32.totalorder %s263, %s264
      %p273 = scmp.eq.s32.totalorder %s23, 0
      %p274 = por %p272, %p273
      %p275 = scmp.ne.s32.totalorder %s263, %s264
      %p276 = scmp.eq.s32.totalorder %s24, 1
      %p277 = por %p275, %p276
      %p279 = scmp.ne.s32.totalorder %s264, %s278
      %p280 = scmp.eq.s32.totalorder %s24, 0
      %p281 = por %p279, %p280
      %s283 = sadd.s32 %s282, 1
      %p286 = scmp.eq.s32.totalorder %s18, 1
      %p287 = scmp.ne.s32.totalorder %s282, %s284
      %p288 = scmp.eq.s32.totalorder %s18, 0
      %p289 = por %p287, %p288
      %p290 = scmp.ne.s32.totalorder %s282, %s284
      %p291 = scmp.eq.s32.totalorder %s23, 1
      %p292 = por %p290, %p291
      %p293 = scmp.ne.s32.totalorder %s284, %s285
      %p294 = scmp.eq.s32.totalorder %s23, 0
      %p295 = por %p293, %p294
      %p296 = scmp.ne.s32.totalorder %s284, %s285
      %p297 = scmp.eq.s32.totalorder %s24, 1
      %p298 = por %p296, %p297
      %p300 = scmp.ne.s32.totalorder %s285, %s299
      %p301 = scmp.eq.s32.totalorder %s24, 0
      %p302 = por %p300, %p301
      %p303 = scmp.le.s32.totalorder 1, %s18
      %p304 = scmp.lt.s32.totalorder %s18, 3
      %p305 = pnand %p303, %p304
      %p306 = pneg %p305
      // Predicated region
      $region9: #{palme_forward.5} parent=5 // pred_check
        _
      $region10: #{palme_forward.5} parent=5 // pred_check_branch
        %308 = sbr.rel (%p305) target = $region12
      $region11: #{palme_forward.5} parent=5 // pred_region
        %s309 = ssub.s32 %s18, 1
        // Predicated region
        $region13: #{palme_forward.5} parent=11 // pred_check
          %p310 = pneg %p39
        $region14: #{palme_forward.5} parent=11 // pred_check_branch
          %312 = sbr.rel (%p310) target = $region16
        $region15: #{palme_forward.5} parent=11 // pred_region
          _
        $region16: #{palme_forward.5} parent=11 // pred_fallthru
          _
        // Predicated region
        $region17: #{palme_forward.5} parent=11 // pred_check
          %p313 = pneg %p60
        $region18: #{palme_forward.5} parent=11 // pred_check_branch
          %315 = sbr.rel (%p313) target = $region20
        $region19: #{palme_forward.5} parent=11 // pred_region
          _
        $region20: #{palme_forward.5} parent=11 // pred_fallthru
          _
        // Predicated region
        $region21: #{palme_forward.5} parent=11 // pred_check
          %p316 = pneg %p81
        $region22: #{palme_forward.5} parent=11 // pred_check_branch
          %318 = sbr.rel (%p316) target = $region24
        $region23: #{palme_forward.5} parent=11 // pred_region
          _
        $region24: #{palme_forward.5} parent=11 // pred_fallthru
          _
        // Predicated region
        $region25: #{palme_forward.5} parent=11 // pred_check
          %p319 = pneg %p232
        $region26: #{palme_forward.5} parent=11 // pred_check_branch
          %321 = sbr.rel (%p319) target = $region28
        $region27: #{palme_forward.5} parent=11 // pred_region
          _
        $region28: #{palme_forward.5} parent=11 // pred_fallthru
          _
        // Predicated region
        $region29: #{palme_forward.5} parent=11 // pred_check
          %p322 = pneg %p253
        $region30: #{palme_forward.5} parent=11 // pred_check_branch
          %324 = sbr.rel (%p322) target = $region32
        $region31: #{palme_forward.5} parent=11 // pred_region
          _
        $region32: #{palme_forward.5} parent=11 // pred_fallthru
          _
        // Predicated region
        $region33: #{palme_forward.5} parent=11 // pred_check
          %p325 = pneg %p274
        $region34: #{palme_forward.5} parent=11 // pred_check_branch
          %327 = sbr.rel (%p325) target = $region36
        $region35: #{palme_forward.5} parent=11 // pred_region
          _
        $region36: #{palme_forward.5} parent=11 // pred_fallthru
          _
      $region12: #{palme_forward.5} parent=5 // pred_fallthru
        _
      %p328 = scmp.lt.s32.totalorder %s18, 2
      // Predicated region
      $region37: #{palme_forward.5} parent=5 // pred_check
        %p329 = pneg %p328
      $region38: #{palme_forward.5} parent=5 // pred_check_branch
        %331 = sbr.rel (%p329) target = $region40
      $region39: #{palme_forward.5} parent=5 // pred_region
        // Predicated region
        $region41: #{palme_forward.5} parent=39 // pred_check
          %p332 = pneg %p101
        $region42: #{palme_forward.5} parent=39 // pred_check_branch
          %334 = sbr.rel (%p332) target = $region44
        $region43: #{palme_forward.5} parent=39 // pred_region
          %p335 = scmp.lt.s32.totalorder %s18, 1
          %s336 = scalar_select %p335, %s18, 1
          %s337 = scalar_lea.vmem %s3, %s336
        $region44: #{palme_forward.5} parent=39 // pred_fallthru
          _
        // Predicated region
        $region45: #{palme_forward.5} parent=39 // pred_check
          %p338 = pneg %p127
        $region46: #{palme_forward.5} parent=39 // pred_check_branch
          %340 = sbr.rel (%p338) target = $region48
        $region47: #{palme_forward.5} parent=39 // pred_region
          %p341 = scmp.lt.s32.totalorder %s18, 1
          %s342 = scalar_select %p341, %s18, 1
          %s343 = scalar_lea.vmem %s4, %s342
        $region48: #{palme_forward.5} parent=39 // pred_fallthru
          _
        // Predicated region
        $region49: #{palme_forward.5} parent=39 // pred_check
          %p344 = pneg %p153
        $region50: #{palme_forward.5} parent=39 // pred_check_branch
          %346 = sbr.rel (%p344) target = $region52
        $region51: #{palme_forward.5} parent=39 // pred_region
          %p347 = scmp.lt.s32.totalorder %s18, 1
          %s348 = scalar_select %p347, %s18, 1
          %s349 = smul.addr %s348, 12
          %s350 = smul.addr %s349, 4
          %s351 = scalar_lea.vmem %s5, %s350
        $region52: #{palme_forward.5} parent=39 // pred_fallthru
          _
        // Predicated region
        $region53: #{palme_forward.5} parent=39 // pred_check
          %p352 = pneg %p179
        $region54: #{palme_forward.5} parent=39 // pred_check_branch
          %354 = sbr.rel (%p352) target = $region56
        $region55: #{palme_forward.5} parent=39 // pred_region
          %p355 = scmp.lt.s32.totalorder %s18, 1
          %s356 = scalar_select %p355, %s18, 1
          %s357 = smul.addr %s356, 4
          %s358 = smul.addr %s357, 4
          %s359 = scalar_lea.vmem %s6, %s358
        $region56: #{palme_forward.5} parent=39 // pred_fallthru
          _
        // Predicated region
        $region57: #{palme_forward.5} parent=39 // pred_check
          %p360 = pneg %p205
        $region58: #{palme_forward.5} parent=39 // pred_check_branch
          %362 = sbr.rel (%p360) target = $region60
        $region59: #{palme_forward.5} parent=39 // pred_region
          %p363 = scmp.lt.s32.totalorder %s18, 1
          %s364 = scalar_select %p363, %s18, 1
          %s365 = smul.addr %s364, 16
          %s366 = smul.addr %s365, 4
          %s367 = scalar_lea.vmem %s7, %s366
        $region60: #{palme_forward.5} parent=39 // pred_fallthru
          _
      $region40: #{palme_forward.5} parent=5 // pred_fallthru
        _
      %p368 = scmp.le.s32.totalorder 1, %s18
      %p369 = scmp.lt.s32.totalorder %s18, 3
      %p370 = pnand %p368, %p369
      %p371 = pneg %p370
      // Predicated region
      $region61: #{palme_forward.5} parent=5 // pred_check
        _
      $region62: #{palme_forward.5} parent=5 // pred_check_branch
        %373 = sbr.rel (%p370) target = $region64
      $region63: #{palme_forward.5} parent=5 // pred_region
        %s374 = ssub.s32 %s18, 1
        %p375 = pneg %p39
        %p376 = pneg %p36
        %p377 = pneg %p60
        %p378 = pneg %p57
        %p379 = pneg %p81
        %p380 = pneg %p78
        %p381 = scmp.lt.s32.totalorder %s23, 1
        %s382 = scalar_select %p381, %s23, 1
        %s383 = scalar_lea.vmem %s3, %s382
        %p384 = pneg %p107
        %p385 = pneg %p104
        %p386 = scmp.lt.s32.totalorder %s23, 1
        %s387 = scalar_select %p386, %s23, 1
        %s388 = scalar_lea.vmem %s4, %s387
        %p389 = pneg %p133
        %p390 = pneg %p130
        %p391 = scmp.lt.s32.totalorder %s23, 1
        %s392 = scalar_select %p391, %s23, 1
        %s393 = smul.addr %s392, 12
        %s394 = smul.addr %s393, 4
        %s395 = scalar_lea.vmem %s5, %s394
        %p396 = pneg %p159
        %p397 = pneg %p156
        %p398 = scmp.lt.s32.totalorder %s23, 1
        %s399 = scalar_select %p398, %s23, 1
        %s400 = smul.addr %s399, 4
        %s401 = smul.addr %s400, 4
        %s402 = scalar_lea.vmem %s6, %s401
        %p403 = pneg %p185
        %p404 = pneg %p182
        %p405 = scmp.lt.s32.totalorder %s23, 1
        %s406 = scalar_select %p405, %s23, 1
        %s407 = smul.addr %s406, 16
        %s408 = smul.addr %s407, 4
        %s409 = scalar_lea.vmem %s7, %s408
        %p410 = pneg %p211
        %p411 = pneg %p208
        %p412 = pneg %p232
        %p413 = pneg %p229
        %p414 = pneg %p253
        %p415 = pneg %p250
        %p416 = pneg %p274
        %p417 = pneg %p271
        %p418 = pneg %p295
        %p419 = pneg %p292
        %p420 = scmp.lt.s32.totalorder %s23, 1
        %s421 = scalar_select %p420, %s23, 1
        %s422 = scalar_lea.vmem %s3, %s421
        %p423 = scmp.lt.s32.totalorder %s23, 1
        %s424 = scalar_select %p423, %s23, 1
        %s425 = scalar_lea.vmem %s4, %s424
        %p426 = scmp.lt.s32.totalorder %s23, 1
        %s427 = scalar_select %p426, %s23, 1
        %s428 = smul.addr %s427, 12
        %s429 = smul.addr %s428, 4
        %s430 = scalar_lea.vmem %s5, %s429
        %p431 = scmp.lt.s32.totalorder %s23, 1
        %s432 = scalar_select %p431, %s23, 1
        %s433 = smul.addr %s432, 4
        %s434 = smul.addr %s433, 4
        %s435 = scalar_lea.vmem %s6, %s434
        %p436 = scmp.lt.s32.totalorder %s23, 1
        %s437 = scalar_select %p436, %s23, 1
        %s438 = smul.addr %s437, 16
        %s439 = smul.addr %s438, 4
        %s440 = scalar_lea.vmem %s7, %s439
        %p442 = scmp.eq.s32.totalorder %s23, 0
        // Predicated region
        $region65: #{palme_forward.5} parent=63 // pred_check
          %p443 = pneg %p442
        $region66: #{palme_forward.5} parent=63 // pred_check_branch
          %445 = sbr.rel (%p443) target = $region68
        $region67: #{palme_forward.5} parent=63 // pred_region
          %v446 = vld [vmem:[%s0] sm:$0xff]
          %v447 = vld [vmem:[%s0 + $0x8] sm:$0xff]
          %vm448 = vcmask 261120
          %449 = vst.msk [vmem:[#allocation2] sm:$0xff] %vm448, %v446
          %450 = vst.msk [vmem:[#allocation2 + $0x8] sm:$0xff] %vm448, %v447
        $region68: #{palme_forward.5} parent=63 // pred_fallthru
          _
        %v451 = vld [vmem:[#allocation2] sm:$0xff]
        %v452 = vld [vmem:[#allocation2 + $0x8] sm:$0xff]
        %v453 = vld [vmem:[%s422] sm:$0x1]
        %v454 = vld [vmem:[%s425] sm:$0x1]
        %vm455 = vcmask 261120
        %v456 = vsel %vm455, %v451, 0.0
        %457 = vadd.xlane.f32.xlu0 %v456
        %v458 = vpop.xlane.xlu0 %457
        %v459 = vsel %vm455, %v452, 0.0
        %460 = vadd.xlane.f32.xlu0 %v459
        %v461 = vpop.xlane.xlu0 %460
        %v462 = vrcp.pop 32.0
        %v463 = vmul.f32 32.0, %v462
        %v464 = vsub.f32 1.0, %v463
        %v465 = vmul.f32 %v462, %v464
        %v466 = vadd.f32 %v462, %v465
        %vm467 = vweird.f32 %v462
        %v468 = vsel %vm467, %v462, %v466
        %v469 = vmul.f32 %v458, %v468
        %v470 = vmul.f32 %v461, %v468
        %v471 = vsub.f32 %v451, %v469
        %v472 = vsub.f32 %v452, %v470
        %v473 = vmul.f32 %v471, %v471
        %v474 = vmul.f32 %v472, %v472
        %v475 = vsel %vm455, %v473, 0.0
        %476 = vadd.xlane.f32.xlu0 %v475
        %v477 = vpop.xlane.xlu0 %476
        %v478 = vsel %vm455, %v474, 0.0
        %479 = vadd.xlane.f32.xlu0 %v478
        %v480 = vpop.xlane.xlu0 %479
        %v481 = vmul.f32 %v477, %v468
        %v482 = vmul.f32 %v480, %v468
        %v483 = vadd.f32 %v481, 1e-05
        %v484 = vadd.f32 %v482, 1e-05
        %v485 = vrsqrt.pop %v483
        %v486 = vmul.f32 %v485, %v483
        %v487 = vmul.f32 %v486, %v485
        %v488 = vmul.f32 0.5, %v487
        %v489 = vsub.f32 1.5, %v488
        %v490 = vmul.f32 %v485, %v489
        %vm491 = vweird.f32 %v483
        %vm492 = vweird.f32 %v485
        %vm493 = vmor %vm491, %vm492
        %v494 = vsel %vm493, %v485, %v490
        %v495 = vrsqrt.pop %v484
        %v496 = vmul.f32 %v495, %v484
        %v497 = vmul.f32 %v496, %v495
        %v498 = vmul.f32 0.5, %v497
        %v499 = vsub.f32 1.5, %v498
        %v500 = vmul.f32 %v495, %v499
        %vm501 = vweird.f32 %v484
        %vm502 = vweird.f32 %v495
        %vm503 = vmor %vm501, %vm502
        %v504 = vsel %vm503, %v495, %v500
        %v505 = vmul.f32 %v471, %v494
        %v506 = vmul.f32 %v472, %v504
        %v508 = vperm.slane %v453, 0
        %v510 = vmul.f32 %v505, %v508
        %v511 = vmul.f32 %v506, %v508
        %v513 = vperm.slane %v454, 0
        %v515 = vadd.f32 %v510, %v513
        %v516 = vadd.f32 %v511, %v513
        %v517 = vpack.c.bf16 %v516, %v515
        %v518 = vld [vmem:[%s430] sm:$0xff]
        %v519 = vld [vmem:[%s430 + $0x8] sm:$0xf]
        %v520 = vld [vmem:[%s430 + $0xc] sm:$0xff]
        %v521 = vld [vmem:[%s430 + $0x14] sm:$0xf]
        %v522 = vld [vmem:[%s430 + $0x18] sm:$0xff]
        %v523 = vld [vmem:[%s430 + $0x20] sm:$0xf]
        %v524 = vld [vmem:[%s430 + $0x24] sm:$0xff]
        %v525 = vld [vmem:[%s430 + $0x2c] sm:$0xf]
        %v534 = vunpack.c.l.b16 %v518
        %v535 = vunpack.c.h.b16 %v518
        %v536 = vunpack.c.l.b16 %v519
        %v537 = vunpack.c.l.b16 %v520
        %v538 = vunpack.c.h.b16 %v520
        %v539 = vunpack.c.l.b16 %v521
        %v540 = vunpack.c.l.b16 %v522
        %v541 = vunpack.c.h.b16 %v522
        %v542 = vunpack.c.l.b16 %v523
        %v543 = vunpack.c.l.b16 %v524
        %v544 = vunpack.c.h.b16 %v524
        %v545 = vunpack.c.l.b16 %v525
        %v546 = vpack.c.b16 %v537, %v534
        %v547 = vpack.c.b16 %v538, %v535
        %v548 = vpack.c.b16 %v539, %v536
        %v549 = vpack.c.b16 %v543, %v540
        %v550 = vpack.c.b16 %v544, %v541
        %v551 = vpack.c.b16 %v545, %v542
        %v559 = vsel %vm455, %v517, 0
        %561 = vmatpush.bf16.msra.mxu0 0
        %562 = vmatpush.bf16.msra.mxu0 0
        %563 = vmatpush.bf16.msra.mxu0 0
        %564 = vmatpush.bf16.msra.mxu0 0
        %565 = vmatpush.bf16.msra.mxu0 0
        %566 = vmatpush.bf16.msra.mxu0 0
        %567 = vmatpush.bf16.msra.mxu0 %v549
        %568 = vmatpush.bf16.msra.mxu0 %v546
        %569 = vmatmul.bf16.gmra.mxu0 %v559
        %v570 = vpop.f32.mrf.mxu0
        %v571 = vadd.f32 0.0, %v570
        %v572 = vpop.f32.mrf.mxu0
        %v573 = vadd.f32 0.0, %v572
        %574 = vdwg.mxu0
        %575 = vmatpush.bf16.msra.mxu0 0
        %576 = vmatpush.bf16.msra.mxu0 0
        %577 = vmatpush.bf16.msra.mxu0 0
        %578 = vmatpush.bf16.msra.mxu0 0
        %579 = vmatpush.bf16.msra.mxu0 0
        %580 = vmatpush.bf16.msra.mxu0 0
        %581 = vmatpush.bf16.msra.mxu0 %v550
        %582 = vmatpush.bf16.msra.mxu0 %v547
        %583 = vmatmul.bf16.gmra.mxu0 %v559
        %v584 = vpop.f32.mrf.mxu0
        %v585 = vadd.f32 0.0, %v584
        %v586 = vpop.f32.mrf.mxu0
        %v587 = vadd.f32 0.0, %v586
        %588 = vdwg.mxu0
        %589 = vmatpush.bf16.msra.mxu0 0
        %590 = vmatpush.bf16.msra.mxu0 0
        %591 = vmatpush.bf16.msra.mxu0 0
        %592 = vmatpush.bf16.msra.mxu0 0
        %593 = vmatpush.bf16.msra.mxu0 0
        %594 = vmatpush.bf16.msra.mxu0 0
        %595 = vmatpush.bf16.msra.mxu0 %v551
        %596 = vmatpush.bf16.msra.mxu0 %v548
        %597 = vmatmul.bf16.gmra.mxu0 %v559
        %v598 = vpop.f32.mrf.mxu0
        %v599 = vadd.f32 0.0, %v598
        %v600 = vpop.f32.mrf.mxu0
        %v601 = vadd.f32 0.0, %v600
        %602 = vdwg.mxu0
        %v603 = vld [vmem:[%s1] sm:$0xff]
        %v604 = vld [vmem:[%s2] sm:$0xff]
        %v605 = vlaneseq
        %v606 = vand.u32 %v605, 127
        %vm607 = vcmp.lt.s32.totalorder %v606, 0
        %v608 = vsub.s32 0, %v606
        %v609 = vsel %vm607, %v608, %v606
        %v610 = vshrl.u32 %v609, 4
        %v611 = vand.u32 %v609, 15
        %v612 = vsub.s32 0, %v611
        %v613 = vsel %vm607, %v612, %v611
        %vm614 = vcmp.ne.s32.totalorder %v613, 0
        %vm615 = vcmp.lt.s32.totalorder %v613, 0
        %vm616 = vmand %vm615, %vm614
        %v617 = vadd.s32 %v613, 16
        %v618 = vsel %vm616, %v617, %v613
        %vm619 = vcmp.ge.s32.totalorder %v618, 8
        %vm620 = vcmask 1047808
        %621 = vrot.lane.b32.xlu0 %v599, 32
        %v622 = vpop.permute.xlu0 %621
        %v623 = vsel %vm620, %v622, %v599
        %624 = vrot.lane.b32.xlu0 %v601, 32
        %v625 = vpop.permute.xlu0 %624
        %v626 = vsel %vm620, %v625, %v601
        %627 = vrot.lane.b32.xlu0 %v623, 32
        %v628 = vpop.permute.xlu0 %627
        %629 = vrot.lane.b32.xlu0 %v626, 32
        %v630 = vpop.permute.xlu0 %629
        %v631 = vsel %vm620, %v628, %v599
        %v632 = vsel %vm620, %v630, %v601
        %635 = vrot.lane.b32.xlu0 %v631, 104
        %v636 = vpop.permute.xlu0 %635
        %637 = vrot.lane.b32.xlu0 %v632, 104
        %v638 = vpop.permute.xlu0 %637
        %641 = vrot.lane.b32.xlu0 %v631, 120
        %v642 = vpop.permute.xlu0 %641
        %643 = vrot.lane.b32.xlu0 %v632, 120
        %v644 = vpop.permute.xlu0 %643
        %v647 = vsel %vm619, %v636, %v642
        %v648 = vsel %vm619, %v638, %v644
        %v649 = vmul.f32 %v599, %v603
        %v650 = vmul.f32 %v601, %v603
        %v651 = vmul.f32 %v647, %v604
        %v652 = vmul.f32 %v648, %v604
        %v653 = vadd.f32 %v649, %v651
        %v654 = vadd.f32 %v650, %v652
        %657 = vrot.lane.b32.xlu0 %v599, 96
        %v658 = vpop.permute.xlu0 %657
        %659 = vrot.lane.b32.xlu0 %v601, 96
        %v660 = vpop.permute.xlu0 %659
        %663 = vrot.lane.b32.xlu0 %v658, 32
        %v664 = vpop.permute.xlu0 %663
        %v665 = vsel %vm620, %v664, %v658
        %666 = vrot.lane.b32.xlu0 %v660, 32
        %v667 = vpop.permute.xlu0 %666
        %v668 = vsel %vm620, %v667, %v660
        %669 = vrot.lane.b32.xlu0 %v665, 32
        %v670 = vpop.permute.xlu0 %669
        %671 = vrot.lane.b32.xlu0 %v668, 32
        %v672 = vpop.permute.xlu0 %671
        %v673 = vsel %vm620, %v670, %v658
        %v674 = vsel %vm620, %v672, %v660
        %677 = vrot.lane.b32.xlu0 %v673, 104
        %v678 = vpop.permute.xlu0 %677
        %679 = vrot.lane.b32.xlu0 %v674, 104
        %v680 = vpop.permute.xlu0 %679
        %683 = vrot.lane.b32.xlu0 %v673, 120
        %v684 = vpop.permute.xlu0 %683
        %685 = vrot.lane.b32.xlu0 %v674, 120
        %v686 = vpop.permute.xlu0 %685
        %v689 = vsel %vm619, %v678, %v684
        %v690 = vsel %vm619, %v680, %v686
        %692 = vrot.lane.b32.xlu0 %v603, 32
        %v693 = vpop.permute.xlu0 %692
        %v695 = vmul.f32 %v599, %v693
        %v696 = vmul.f32 %v601, %v693
        %v697 = vmul.f32 %v689, %v604
        %v698 = vmul.f32 %v690, %v604
        %701 = vrot.lane.b32.xlu0 %v697, 32
        %v702 = vpop.permute.xlu0 %701
        %703 = vrot.lane.b32.xlu0 %v698, 32
        %v704 = vpop.permute.xlu0 %703
        %v707 = vadd.f32 %v695, %v702
        %v708 = vadd.f32 %v696, %v704
        %v709 = vlaneseq
        %v710 = vshrl.u32 %v709, 7
        %vm711 = vcmp.le.s32.totalorder %v606, %v710
        %v712 = vld [vmem:[%s435] sm:$0xf]
        %v713 = vld [vmem:[%s435 + $0x4] sm:$0xf]
        %v714 = vld [vmem:[%s435 + $0x8] sm:$0xf]
        %v715 = vld [vmem:[%s435 + $0xc] sm:$0xf]
        %717 = vrot.lane.b32.xlu0 %v707, 96
        %v718 = vpop.permute.xlu0 %717
        %vm719 = vcmask 130048
        %v721 = vsel %vm719, %v653, 0
        %v723 = vsel %vm719, %v718, 0
        %725 = vmatpush.xpose.msra.mxu0 0.0
        %726 = vmatpush.xpose.msra.mxu0 0.0
        %727 = vmatpush.xpose.msra.mxu0 0.0
        %728 = vmatpush.xpose.msra.mxu0 0.0
        %729 = vmatpush.xpose.msra.mxu0 0.0
        %730 = vmatpush.xpose.msra.mxu0 0.0
        %731 = vmatpush.xpose.msra.mxu0 0.0
        %732 = vmatpush.xpose.msra.mxu0 0.0
        %733 = vmatpush.xpose.msra.mxu0 0.0
        %734 = vmatpush.xpose.msra.mxu0 0.0
        %735 = vmatpush.xpose.msra.mxu0 0.0
        %736 = vmatpush.xpose.msra.mxu0 0.0
        %737 = vmatpush.xpose.msra.mxu0 0.0
        %738 = vmatpush.xpose.msra.mxu0 0.0
        %739 = vmatpush.xpose.msra.mxu0 0.0
        %740 = vmatpush.xpose.msra.mxu0 %v723
        %741 = vmatmul.f32.gmra.mxu0 %v721
        %v742 = vpop.f32.mrf.mxu0
        %v743 = vadd.f32 0.0, %v742
        %744 = vdwg.mxu0
        %746 = vrot.lane.b32.xlu0 %v708, 96
        %v747 = vpop.permute.xlu0 %746
        %v749 = vsel %vm719, %v654, 0
        %v751 = vsel %vm719, %v747, 0
        %753 = vmatpush.xpose.msra.mxu0 0.0
        %754 = vmatpush.xpose.msra.mxu0 0.0
        %755 = vmatpush.xpose.msra.mxu0 0.0
        %756 = vmatpush.xpose.msra.mxu0 0.0
        %757 = vmatpush.xpose.msra.mxu0 0.0
        %758 = vmatpush.xpose.msra.mxu0 0.0
        %759 = vmatpush.xpose.msra.mxu0 0.0
        %760 = vmatpush.xpose.msra.mxu0 0.0
        %761 = vmatpush.xpose.msra.mxu0 0.0
        %762 = vmatpush.xpose.msra.mxu0 0.0
        %763 = vmatpush.xpose.msra.mxu0 0.0
        %764 = vmatpush.xpose.msra.mxu0 0.0
        %765 = vmatpush.xpose.msra.mxu0 0.0
        %766 = vmatpush.xpose.msra.mxu0 0.0
        %767 = vmatpush.xpose.msra.mxu0 0.0
        %768 = vmatpush.xpose.msra.mxu0 %v751
        %769 = vmatmul.f32.gmra.mxu0 %v749
        %v770 = vpop.f32.mrf.mxu0
        %v771 = vadd.f32 0.0, %v770
        %772 = vdwg.mxu0
        %v773 = vmul.f32 %v743, 0.25
        %v774 = vmul.f32 %v771, 0.25
        %v775 = vsel %vm711, 1, 0
        %vm776 = vcmp.eq.s32.totalorder %v775, 1
        %v777 = vsel %vm776, %v773, -1e+30
        %v778 = vsel %vm776, %v774, -1e+30
        %vm779 = vcmask 64512
        %v780 = vsel %vm779, %v777, -inf
        %781 = vmax.xlane.f32.xlu0 %v780
        %v782 = vpop.xlane.xlu0 %781
        %v783 = vsel %vm779, %v778, -inf
        %784 = vmax.xlane.f32.xlu0 %v783
        %v785 = vpop.xlane.xlu0 %784
        %v786 = vsub.f32 %v777, %v782
        %v787 = vsub.f32 %v778, %v785
        %v788 = vmul.f32 %v786, 1.442695
        %v789 = vpow.pop %v788
        %v790 = vmul.f32 %v787, 1.442695
        %v791 = vpow.pop %v790
        %v792 = vsel %vm779, %v789, 0.0
        %793 = vadd.xlane.f32.xlu0 %v792
        %v794 = vpop.xlane.xlu0 %793
        %v795 = vsel %vm779, %v791, 0.0
        %796 = vadd.xlane.f32.xlu0 %v795
        %v797 = vpop.xlane.xlu0 %796
        %798 = vrot.lane.b32.xlu0 %v599, 64
        %v799 = vpop.permute.xlu0 %798
        %v802 = vsel %vm779, %v789, 0
        %804 = vmatpush.msra.mxu0 0.0
        %805 = vmatpush.msra.mxu0 0.0
        %806 = vmatpush.msra.mxu0 0.0
        %807 = vmatpush.msra.mxu0 0.0
        %808 = vmatpush.msra.mxu0 0.0
        %809 = vmatpush.msra.mxu0 0.0
        %810 = vmatpush.msra.mxu0 0.0
        %811 = vmatpush.msra.mxu0 0.0
        %812 = vmatpush.msra.mxu0 0.0
        %813 = vmatpush.msra.mxu0 0.0
        %814 = vmatpush.msra.mxu0 0.0
        %815 = vmatpush.msra.mxu0 0.0
        %816 = vmatpush.msra.mxu0 0.0
        %817 = vmatpush.msra.mxu0 0.0
        %818 = vmatpush.msra.mxu0 0.0
        %819 = vmatpush.msra.mxu0 %v799
        %820 = vmatmul.f32.gmra.mxu0 %v802
        %v821 = vpop.f32.mrf.mxu0
        %v822 = vadd.f32 0.0, %v821
        %823 = vdwg.mxu0
        %824 = vrot.lane.b32.xlu0 %v601, 64
        %v825 = vpop.permute.xlu0 %824
        %v828 = vsel %vm779, %v791, 0
        %830 = vmatpush.msra.mxu0 0.0
        %831 = vmatpush.msra.mxu0 0.0
        %832 = vmatpush.msra.mxu0 0.0
        %833 = vmatpush.msra.mxu0 0.0
        %834 = vmatpush.msra.mxu0 0.0
        %835 = vmatpush.msra.mxu0 0.0
        %836 = vmatpush.msra.mxu0 0.0
        %837 = vmatpush.msra.mxu0 0.0
        %838 = vmatpush.msra.mxu0 0.0
        %839 = vmatpush.msra.mxu0 0.0
        %840 = vmatpush.msra.mxu0 0.0
        %841 = vmatpush.msra.mxu0 0.0
        %842 = vmatpush.msra.mxu0 0.0
        %843 = vmatpush.msra.mxu0 0.0
        %844 = vmatpush.msra.mxu0 0.0
        %845 = vmatpush.msra.mxu0 %v825
        %846 = vmatmul.f32.gmra.mxu0 %v828
        %v847 = vpop.f32.mrf.mxu0
        %v848 = vadd.f32 0.0, %v847
        %849 = vdwg.mxu0
        %v850 = vrcp.pop %v794
        %v851 = vrcp.pop %v797
        %v852 = vmul.f32 %v822, %v850
        %v853 = vmul.f32 %v848, %v851
        %v854 = vpack.c.bf16 %v853, %v852
        %855 = vrot.lane.b32.xlu0 %v653, 112
        %v856 = vpop.permute.xlu0 %855
        %857 = vrot.lane.b32.xlu0 %v707, 80
        %v858 = vpop.permute.xlu0 %857
        %v859 = vsel %vm719, %v856, 0
        %v861 = vsel %vm719, %v858, 0
        %863 = vmatpush.xpose.msra.mxu0 0.0
        %864 = vmatpush.xpose.msra.mxu0 0.0
        %865 = vmatpush.xpose.msra.mxu0 0.0
        %866 = vmatpush.xpose.msra.mxu0 0.0
        %867 = vmatpush.xpose.msra.mxu0 0.0
        %868 = vmatpush.xpose.msra.mxu0 0.0
        %869 = vmatpush.xpose.msra.mxu0 0.0
        %870 = vmatpush.xpose.msra.mxu0 0.0
        %871 = vmatpush.xpose.msra.mxu0 0.0
        %872 = vmatpush.xpose.msra.mxu0 0.0
        %873 = vmatpush.xpose.msra.mxu0 0.0
        %874 = vmatpush.xpose.msra.mxu0 0.0
        %875 = vmatpush.xpose.msra.mxu0 0.0
        %876 = vmatpush.xpose.msra.mxu0 0.0
        %877 = vmatpush.xpose.msra.mxu0 0.0
        %878 = vmatpush.xpose.msra.mxu0 %v861
        %879 = vmatmul.f32.gmra.mxu0 %v859
        %v880 = vpop.f32.mrf.mxu0
        %v881 = vadd.f32 0.0, %v880
        %882 = vdwg.mxu0
        %883 = vrot.lane.b32.xlu0 %v654, 112
        %v884 = vpop.permute.xlu0 %883
        %885 = vrot.lane.b32.xlu0 %v708, 80
        %v886 = vpop.permute.xlu0 %885
        %v887 = vsel %vm719, %v884, 0
        %v889 = vsel %vm719, %v886, 0
        %891 = vmatpush.xpose.msra.mxu0 0.0
        %892 = vmatpush.xpose.msra.mxu0 0.0
        %893 = vmatpush.xpose.msra.mxu0 0.0
        %894 = vmatpush.xpose.msra.mxu0 0.0
        %895 = vmatpush.xpose.msra.mxu0 0.0
        %896 = vmatpush.xpose.msra.mxu0 0.0
        %897 = vmatpush.xpose.msra.mxu0 0.0
        %898 = vmatpush.xpose.msra.mxu0 0.0
        %899 = vmatpush.xpose.msra.mxu0 0.0
        %900 = vmatpush.xpose.msra.mxu0 0.0
        %901 = vmatpush.xpose.msra.mxu0 0.0
        %902 = vmatpush.xpose.msra.mxu0 0.0
        %903 = vmatpush.xpose.msra.mxu0 0.0
        %904 = vmatpush.xpose.msra.mxu0 0.0
        %905 = vmatpush.xpose.msra.mxu0 0.0
        %906 = vmatpush.xpose.msra.mxu0 %v889
        %907 = vmatmul.f32.gmra.mxu0 %v887
        %v908 = vpop.f32.mrf.mxu0
        %v909 = vadd.f32 0.0, %v908
        %910 = vdwg.mxu0
        %v911 = vmul.f32 %v881, 0.25
        %v912 = vmul.f32 %v909, 0.25
        %v913 = vsel %vm776, %v911, -1e+30
        %v914 = vsel %vm776, %v912, -1e+30
        %v915 = vsel %vm779, %v913, -inf
        %916 = vmax.xlane.f32.xlu0 %v915
        %v917 = vpop.xlane.xlu0 %916
        %v918 = vsel %vm779, %v914, -inf
        %919 = vmax.xlane.f32.xlu0 %v918
        %v920 = vpop.xlane.xlu0 %919
        %v921 = vsub.f32 %v913, %v917
        %v922 = vsub.f32 %v914, %v920
        %v923 = vmul.f32 %v921, 1.442695
        %v924 = vpow.pop %v923
        %v925 = vmul.f32 %v922, 1.442695
        %v926 = vpow.pop %v925
        %v927 = vsel %vm779, %v924, 0.0
        %928 = vadd.xlane.f32.xlu0 %v927
        %v929 = vpop.xlane.xlu0 %928
        %v930 = vsel %vm779, %v926, 0.0
        %931 = vadd.xlane.f32.xlu0 %v930
        %v932 = vpop.xlane.xlu0 %931
        %933 = vrot.lane.b32.xlu0 %v599, 48
        %v934 = vpop.permute.xlu0 %933
        %v937 = vsel %vm779, %v924, 0
        %939 = vmatpush.msra.mxu0 0.0
        %940 = vmatpush.msra.mxu0 0.0
        %941 = vmatpush.msra.mxu0 0.0
        %942 = vmatpush.msra.mxu0 0.0
        %943 = vmatpush.msra.mxu0 0.0
        %944 = vmatpush.msra.mxu0 0.0
        %945 = vmatpush.msra.mxu0 0.0
        %946 = vmatpush.msra.mxu0 0.0
        %947 = vmatpush.msra.mxu0 0.0
        %948 = vmatpush.msra.mxu0 0.0
        %949 = vmatpush.msra.mxu0 0.0
        %950 = vmatpush.msra.mxu0 0.0
        %951 = vmatpush.msra.mxu0 0.0
        %952 = vmatpush.msra.mxu0 0.0
        %953 = vmatpush.msra.mxu0 0.0
        %954 = vmatpush.msra.mxu0 %v934
        %955 = vmatmul.f32.gmra.mxu0 %v937
        %v956 = vpop.f32.mrf.mxu0
        %v957 = vadd.f32 0.0, %v956
        %958 = vdwg.mxu0
        %959 = vrot.lane.b32.xlu0 %v601, 48
        %v960 = vpop.permute.xlu0 %959
        %v963 = vsel %vm779, %v926, 0
        %965 = vmatpush.msra.mxu0 0.0
        %966 = vmatpush.msra.mxu0 0.0
        %967 = vmatpush.msra.mxu0 0.0
        %968 = vmatpush.msra.mxu0 0.0
        %969 = vmatpush.msra.mxu0 0.0
        %970 = vmatpush.msra.mxu0 0.0
        %971 = vmatpush.msra.mxu0 0.0
        %972 = vmatpush.msra.mxu0 0.0
        %973 = vmatpush.msra.mxu0 0.0
        %974 = vmatpush.msra.mxu0 0.0
        %975 = vmatpush.msra.mxu0 0.0
        %976 = vmatpush.msra.mxu0 0.0
        %977 = vmatpush.msra.mxu0 0.0
        %978 = vmatpush.msra.mxu0 0.0
        %979 = vmatpush.msra.mxu0 0.0
        %980 = vmatpush.msra.mxu0 %v960
        %981 = vmatmul.f32.gmra.mxu0 %v963
        %v982 = vpop.f32.mrf.mxu0
        %v983 = vadd.f32 0.0, %v982
        %984 = vdwg.mxu0
        %v985 = vrcp.pop %v929
        %v986 = vrcp.pop %v932
        %v987 = vmul.f32 %v957, %v985
        %v988 = vmul.f32 %v983, %v986
        %v989 = vpack.c.bf16 %v988, %v987
        %v992 = vunpack.c.l.b16 %v714
        %v993 = vunpack.c.l.b16 %v715
        %v994 = vpack.c.b16 %v993, %v992
        %v997 = vsel %vm719, %v989, 0
        %999 = vmatpush.bf16.msra.mxu0 0
        %1000 = vmatpush.bf16.msra.mxu0 0
        %1001 = vmatpush.bf16.msra.mxu0 0
        %1002 = vmatpush.bf16.msra.mxu0 0
        %1003 = vmatpush.bf16.msra.mxu0 0
        %1004 = vmatpush.bf16.msra.mxu0 0
        %1005 = vmatpush.bf16.msra.mxu0 0
        %1006 = vmatpush.bf16.msra.mxu0 %v994
        %1007 = vmatmul.bf16.gmra.mxu0 %v997
        %v1008 = vpop.f32.mrf.mxu0
        %v1009 = vadd.f32 0.0, %v1008
        %v1010 = vpop.f32.mrf.mxu0
        %v1011 = vadd.f32 0.0, %v1010
        %1012 = vdwg.mxu0
        %v1015 = vunpack.c.l.b16 %v712
        %v1016 = vunpack.c.l.b16 %v713
        %v1017 = vpack.c.b16 %v1016, %v1015
        %v1020 = vsel %vm719, %v854, 0
        %1022 = vmatpush.bf16.msra.mxu0 0
        %1023 = vmatpush.bf16.msra.mxu0 0
        %1024 = vmatpush.bf16.msra.mxu0 0
        %1025 = vmatpush.bf16.msra.mxu0 0
        %1026 = vmatpush.bf16.msra.mxu0 0
        %1027 = vmatpush.bf16.msra.mxu0 0
        %1028 = vmatpush.bf16.msra.mxu0 0
        %1029 = vmatpush.bf16.msra.mxu0 %v1017
        %1030 = vmatmul.bf16.gmra.mxu0 %v1020
        %v1031 = vpop.f32.mrf.mxu0
        %v1032 = vadd.f32 %v1009, %v1031
        %v1033 = vpop.f32.mrf.mxu0
        %v1034 = vadd.f32 %v1011, %v1033
        %1035 = vdwg.mxu0
        %v1036 = vxor.u32 %v571, 2147483648
        %v1037 = vxor.u32 %v573, 2147483648
        %v1038 = vmul.f32 %v1036, 1.442695
        %v1039 = vpow.pop %v1038
        %v1040 = vmul.f32 %v1037, 1.442695
        %v1041 = vpow.pop %v1040
        %v1042 = vadd.f32 %v1039, 1.0
        %v1043 = vadd.f32 %v1041, 1.0
        %v1044 = vrcp.pop %v1042
        %v1045 = vmul.f32 %v1042, %v1044
        %v1046 = vsub.f32 1.0, %v1045
        %v1047 = vmul.f32 %v1044, %v1046
        %v1048 = vadd.f32 %v1044, %v1047
        %vm1049 = vweird.f32 %v1042
        %vm1050 = vweird.f32 %v1044
        %vm1051 = vmor %vm1049, %vm1050
        %v1052 = vsel %vm1051, %v1044, %v1048
        %v1053 = vand.u32 2147483647, %v1042
        %vm1054 = vcmp.eq.f32.partialorder %v1053, 8.507059e+37
        %v1055 = vand.u32 %v1042, 2147483648
        %v1056 = vor.u32 1.1754944e-38, %v1055
        %v1057 = vsel %vm1054, %v1056, %v1052
        %v1058 = vmul.f32 1.0, %v1057
        %v1059 = vrcp.pop %v1043
        %v1060 = vmul.f32 %v1043, %v1059
        %v1061 = vsub.f32 1.0, %v1060
        %v1062 = vmul.f32 %v1059, %v1061
        %v1063 = vadd.f32 %v1059, %v1062
        %vm1064 = vweird.f32 %v1043
        %vm1065 = vweird.f32 %v1059
        %vm1066 = vmor %vm1064, %vm1065
        %v1067 = vsel %vm1066, %v1059, %v1063
        %v1068 = vand.u32 2147483647, %v1043
        %vm1069 = vcmp.eq.f32.partialorder %v1068, 8.507059e+37
        %v1070 = vand.u32 %v1043, 2147483648
        %v1071 = vor.u32 1.1754944e-38, %v1070
        %v1072 = vsel %vm1069, %v1071, %v1067
        %v1073 = vmul.f32 1.0, %v1072
        %v1074 = vmul.f32 %v571, %v1058
        %v1075 = vmul.f32 %v573, %v1073
        %v1076 = vmul.f32 %v1074, %v585
        %v1077 = vmul.f32 %v1075, %v587
        %v1078 = vpack.c.bf16 %v1077, %v1076
        %v1079 = vld [vmem:[%s440] sm:$0xf]
        %v1080 = vld [vmem:[%s440 + $0x4] sm:$0xf]
        %v1081 = vld [vmem:[%s440 + $0x8] sm:$0xf]
        %v1082 = vld [vmem:[%s440 + $0xc] sm:$0xf]
        %v1083 = vld [vmem:[%s440 + $0x10] sm:$0xf]
        %v1084 = vld [vmem:[%s440 + $0x14] sm:$0xf]
        %v1085 = vld [vmem:[%s440 + $0x18] sm:$0xf]
        %v1086 = vld [vmem:[%s440 + $0x1c] sm:$0xf]
        %v1087 = vld [vmem:[%s440 + $0x20] sm:$0xf]
        %v1088 = vld [vmem:[%s440 + $0x24] sm:$0xf]
        %v1089 = vld [vmem:[%s440 + $0x28] sm:$0xf]
        %v1090 = vld [vmem:[%s440 + $0x2c] sm:$0xf]
        %v1091 = vld [vmem:[%s440 + $0x30] sm:$0xf]
        %v1092 = vld [vmem:[%s440 + $0x34] sm:$0xf]
        %v1093 = vld [vmem:[%s440 + $0x38] sm:$0xf]
        %v1094 = vld [vmem:[%s440 + $0x3c] sm:$0xf]
        %v1111 = vunpack.c.l.b16 %v1079
        %v1112 = vunpack.c.l.b16 %v1080
        %v1113 = vunpack.c.l.b16 %v1081
        %v1114 = vunpack.c.l.b16 %v1082
        %v1115 = vunpack.c.l.b16 %v1083
        %v1116 = vunpack.c.l.b16 %v1084
        %v1117 = vunpack.c.l.b16 %v1085
        %v1118 = vunpack.c.l.b16 %v1086
        %v1119 = vunpack.c.l.b16 %v1087
        %v1120 = vunpack.c.l.b16 %v1088
        %v1121 = vunpack.c.l.b16 %v1089
        %v1122 = vunpack.c.l.b16 %v1090
        %v1123 = vunpack.c.l.b16 %v1091
        %v1124 = vunpack.c.l.b16 %v1092
        %v1125 = vunpack.c.l.b16 %v1093
        %v1126 = vunpack.c.l.b16 %v1094
        %v1127 = vpack.c.b16 %v1112, %v1111
        %v1128 = vpack.c.b16 %v1114, %v1113
        %v1129 = vpack.c.b16 %v1116, %v1115
        %v1130 = vpack.c.b16 %v1118, %v1117
        %v1131 = vpack.c.b16 %v1120, %v1119
        %v1132 = vpack.c.b16 %v1122, %v1121
        %v1133 = vpack.c.b16 %v1124, %v1123
        %v1134 = vpack.c.b16 %v1126, %v1125
        %1143 = vmatpush.bf16.msra.mxu0 %v1134
        %1144 = vmatpush.bf16.msra.mxu0 %v1133
        %1145 = vmatpush.bf16.msra.mxu0 %v1132
        %1146 = vmatpush.bf16.msra.mxu0 %v1131
        %1147 = vmatpush.bf16.msra.mxu0 %v1130
        %1148 = vmatpush.bf16.msra.mxu0 %v1129
        %1149 = vmatpush.bf16.msra.mxu0 %v1128
        %1150 = vmatpush.bf16.msra.mxu0 %v1127
        %1151 = vmatmul.bf16.gmra.mxu0 %v1078
        %v1152 = vpop.f32.mrf.mxu0
        %v1153 = vadd.f32 0.0, %v1152
        %v1154 = vpop.f32.mrf.mxu0
        %v1155 = vadd.f32 0.0, %v1154
        %1156 = vdwg.mxu0
        %v1157 = vadd.f32 %v451, %v1032
        %v1158 = vadd.f32 %v452, %v1034
        %v1159 = vadd.f32 %v1157, %v1153
        %v1160 = vadd.f32 %v1158, %v1155
        %1161 = vst.msk [vmem:[#allocation2] sm:$0xff] %vm455, %v1159
        %1162 = vst.msk [vmem:[#allocation2 + $0x8] sm:$0xff] %vm455, %v1160
        %p1163 = scmp.eq.s32.totalorder %s23, 1
        // Predicated region
        $region69: #{palme_forward.5} parent=63 // pred_check
          %p1164 = pneg %p1163
        $region70: #{palme_forward.5} parent=63 // pred_check_branch
          %1166 = sbr.rel (%p1164) target = $region72
        $region71: #{palme_forward.5} parent=63 // pred_region
          %v1167 = vld [vmem:[%s8] sm:$0x1]
          %v1168 = vld [vmem:[%s9] sm:$0x1]
          %v1169 = vsel %vm455, %v1159, 0.0
          %1170 = vadd.xlane.f32.xlu0 %v1169
          %v1171 = vpop.xlane.xlu0 %1170
          %v1172 = vsel %vm455, %v1160, 0.0
          %1173 = vadd.xlane.f32.xlu0 %v1172
          %v1174 = vpop.xlane.xlu0 %1173
          %v1175 = vmul.f32 %v1171, %v468
          %v1176 = vmul.f32 %v1174, %v468
          %v1177 = vsub.f32 %v1159, %v1175
          %v1178 = vsub.f32 %v1160, %v1176
          %v1179 = vmul.f32 %v1177, %v1177
          %v1180 = vmul.f32 %v1178, %v1178
          %v1181 = vsel %vm455, %v1179, 0.0
          %1182 = vadd.xlane.f32.xlu0 %v1181
          %v1183 = vpop.xlane.xlu0 %1182
          %v1184 = vsel %vm455, %v1180, 0.0
          %1185 = vadd.xlane.f32.xlu0 %v1184
          %v1186 = vpop.xlane.xlu0 %1185
          %v1187 = vmul.f32 %v1183, %v468
          %v1188 = vmul.f32 %v1186, %v468
          %v1189 = vadd.f32 %v1187, 1e-05
          %v1190 = vadd.f32 %v1188, 1e-05
          %v1191 = vrsqrt.pop %v1189
          %v1192 = vmul.f32 %v1191, %v1189
          %v1193 = vmul.f32 %v1192, %v1191
          %v1194 = vmul.f32 0.5, %v1193
          %v1195 = vsub.f32 1.5, %v1194
          %v1196 = vmul.f32 %v1191, %v1195
          %vm1197 = vweird.f32 %v1189
          %vm1198 = vweird.f32 %v1191
          %vm1199 = vmor %vm1197, %vm1198
          %v1200 = vsel %vm1199, %v1191, %v1196
          %v1201 = vrsqrt.pop %v1190
          %v1202 = vmul.f32 %v1201, %v1190
          %v1203 = vmul.f32 %v1202, %v1201
          %v1204 = vmul.f32 0.5, %v1203
          %v1205 = vsub.f32 1.5, %v1204
          %v1206 = vmul.f32 %v1201, %v1205
          %vm1207 = vweird.f32 %v1190
          %vm1208 = vweird.f32 %v1201
          %vm1209 = vmor %vm1207, %vm1208
          %v1210 = vsel %vm1209, %v1201, %v1206
          %v1211 = vmul.f32 %v1177, %v1200
          %v1212 = vmul.f32 %v1178, %v1210
          %v1214 = vperm.slane %v1167, 0
          %v1216 = vmul.f32 %v1211, %v1214
          %v1217 = vmul.f32 %v1212, %v1214
          %v1219 = vperm.slane %v1168, 0
          %v1221 = vadd.f32 %v1216, %v1219
          %v1222 = vadd.f32 %v1217, %v1219
          %v1223 = vpack.c.bf16 %v1222, %v1221
          %v1224 = vld [vmem:[%s10] sm:$0xf]
          %v1225 = vld [vmem:[%s10 + $0x4] sm:$0xf]
          %v1226 = vld [vmem:[%s10 + $0x8] sm:$0xf]
          %v1227 = vld [vmem:[%s10 + $0xc] sm:$0xf]
          %v1232 = vunpack.c.l.b16 %v1224
          %v1233 = vunpack.c.l.b16 %v1225
          %v1234 = vunpack.c.l.b16 %v1226
          %v1235 = vunpack.c.l.b16 %v1227
          %v1236 = vpack.c.b16 %v1233, %v1232
          %v1237 = vpack.c.b16 %v1235, %v1234
          %v1241 = vsel %vm455, %v1223, 0
          %1243 = vmatpush.bf16.msra.mxu0 0
          %1244 = vmatpush.bf16.msra.mxu0 0
          %1245 = vmatpush.bf16.msra.mxu0 0
          %1246 = vmatpush.bf16.msra.mxu0 0
          %1247 = vmatpush.bf16.msra.mxu0 0
          %1248 = vmatpush.bf16.msra.mxu0 0
          %1249 = vmatpush.bf16.msra.mxu0 %v1237
          %1250 = vmatpush.bf16.msra.mxu0 %v1236
          %1251 = vmatmul.bf16.gmra.mxu0 %v1241
          %v1252 = vpop.f32.mrf.mxu0
          %v1253 = vadd.f32 0.0, %v1252
          %v1254 = vpop.f32.mrf.mxu0
          %v1255 = vadd.f32 0.0, %v1254
          %1256 = vdwg.mxu0
          %1257 = vst [vmem:[#allocation3] sm:$0xff] %v1253
          %1258 = vst [vmem:[#allocation3 + $0x8] sm:$0xff] %v1255
        $region72: #{palme_forward.5} parent=63 // pred_fallthru
          _
        // Predicated region
        $region73: #{palme_forward.5} parent=63 // pred_check
          %p1259 = pneg %p292
        $region74: #{palme_forward.5} parent=63 // pred_check_branch
          %1261 = sbr.rel (%p1259) target = $region76
        $region75: #{palme_forward.5} parent=63 // pred_region
          %1263 = vsyncadd [#allocation4], 0
          %s1264 = sshll.u32 [#allocation3], 4
          %s1265 = int_to_ptr.vmem [resolvable:$true] %s1264
          %s1266 = sshll.u32 %s11, 4
          %s1267 = int_to_ptr.hbm [resolvable:$true] %s1266
          %1272 = dma.vmem_to_hbm [thread:$0]  %s1265, 256, %s1267, [#allocation4], 128, 128, 8
        $region76: #{palme_forward.5} parent=63 // pred_fallthru
          _
        // Predicated region
        $region77: #{palme_forward.5} parent=63 // pred_check
          %p1273 = pneg %p292
        $region78: #{palme_forward.5} parent=63 // pred_check_branch
          %1275 = sbr.rel (%p1273) target = $region80
        $region79: #{palme_forward.5} parent=63 // pred_region
          %1277 = dma.done [#allocation4], 256
        $region80: #{palme_forward.5} parent=63 // pred_fallthru
          _
      $region64: #{palme_forward.5} parent=5 // pred_fallthru
        _
      %p1278 = scmp.le.s32.totalorder 2, %s18
      // Predicated region
      $region81: #{palme_forward.5} parent=5 // pred_check
        %p1279 = pneg %p1278
      $region82: #{palme_forward.5} parent=5 // pred_check_branch
        %1281 = sbr.rel (%p1279) target = $region84
      $region83: #{palme_forward.5} parent=5 // pred_region
        %s1282 = ssub.s32 %s18, 2
      $region84: #{palme_forward.5} parent=5 // pred_fallthru
        _
    $region6: #{palme_forward.5} parent=1 // loop_footer
      %s22 = sadd.s32 1, %s18
    $region7: #{palme_forward.5} parent=1 // loop_footer_branch
      %17 = sbr.rel target = $region3
    $region8: #{palme_forward.5} parent=1 // loop_exit
      _
    %1283 = vsyncpa [#allocation4], 1
    %s1284 = scalar_lea.sflag [#allocation4], 1
    %1285 = vsyncpa %s1284, 1

// kernel: palme_forward.4
$region0: #{palme_forward.4}
  #allocation0 [shape = 'u32[]', space=smem, size = 0x4, offset = 0x4, fixed_abs, tag = 'smem constant byte address 0x4 - core index']
  #allocation1 [shape = 'u32[72,128]{1,0:T(1,128)}', space=vmem, size = 0x9000, scoped, tag = 'internal scratch']
  #allocation2 [shape = 'f32[24,16]{1,0:T(8,128)}', space=vmem, size = 0x3000, scoped, tag = 'scratch operand']
  %s0 = inlined_call_operand.vmem [shape: f32[48,16], index: 0, kind: input, shape index: {}]
  %s1 = inlined_call_operand.vmem [shape: f32[24,16], index: 1, kind: input, shape index: {}]
  %s2 = inlined_call_operand.vmem [shape: f32[2,1,16], index: 2, kind: input, shape index: {}]
  %s3 = inlined_call_operand.vmem [shape: f32[2,1,16], index: 3, kind: input, shape index: {}]
  %s4 = inlined_call_operand.vmem [shape: f32[2,1,16], index: 4, kind: input, shape index: {}]
  %s5 = inlined_call_operand.vmem [shape: f32[2,1,16], index: 5, kind: input, shape index: {}]
  %s6 = inlined_call_operand.vmem [shape: bf16[2,16,16], index: 6, kind: input, shape index: {}]
  %s7 = inlined_call_operand.vmem [shape: bf16[2,16,32], index: 7, kind: input, shape index: {}]
  %s8 = inlined_call_operand.vmem [shape: bf16[2,16,16], index: 8, kind: input, shape index: {}]
  %s9 = inlined_call_operand.vmem [shape: f32[2,1,16], index: 9, kind: input, shape index: {}]
  %s10 = inlined_call_operand.vmem [shape: f32[2,1,16], index: 10, kind: input, shape index: {}]
  %s11 = inlined_call_operand.vmem [shape: bf16[2,16,64], index: 11, kind: input, shape index: {}]
  %s12 = inlined_call_operand.vmem [shape: f32[2,1,64], index: 12, kind: input, shape index: {}]
  %s13 = inlined_call_operand.vmem [shape: bf16[2,64,16], index: 13, kind: input, shape index: {}]
  %s14 = inlined_call_operand.vmem [shape: f32[2,1,16], index: 14, kind: input, shape index: {}]
  %s15 = inlined_call_operand.vmem [shape: f32[1,16], index: 15, kind: input, shape index: {}]
  %s16 = inlined_call_operand.vmem [shape: f32[1,16], index: 16, kind: input, shape index: {}]
  %s17 = inlined_call_operand.vmem [shape: bf16[16,32], index: 17, kind: input, shape index: {}]
  %s18 = inlined_call_operand.vmem [shape: f32[24,32], index: 18, kind: output, shape index: {}]
  %s19 = sld [smem:[#allocation0]]
  $region113: #{palme_forward.4} parent=0
    _
  %s21 = ssub.s32 1, %s19
  %s22 = scalar_select 0, %s21, %s19
  loop: start=0, step=1, limit=4
  $region2: #{palme_forward.4} parent=0 // loop_pre_header
    _
  $region3: #{palme_forward.4} parent=0 // loop_header
    %s24 = sphi 0, %s28
    %p25 = scmp.ge.s32.totalorder %s24, 4
    %s32 = sphi 0, %s32
    %s34 = sphi 0, %s32
    %s35 = sphi 0, %s34
    %s49 = sphi 0, %s35
    %s53 = sphi 0, %s53
    %s55 = sphi 0, %s53
    %s56 = sphi 0, %s55
    %s70 = sphi 0, %s56
    %s76 = sphi 0, %s78
    %s79 = sphi 0, %s76
    %s80 = sphi 0, %s79
    %s96 = sphi 0, %s80
    %s102 = sphi 0, %s104
    %s105 = sphi 0, %s102
    %s106 = sphi 0, %s105
    %s122 = sphi 0, %s106
    %s128 = sphi 0, %s130
    %s131 = sphi 0, %s128
    %s132 = sphi 0, %s131
    %s148 = sphi 0, %s132
    %s154 = sphi 0, %s156
    %s157 = sphi 0, %s154
    %s158 = sphi 0, %s157
    %s174 = sphi 0, %s158
    %s180 = sphi 0, %s182
    %s183 = sphi 0, %s180
    %s184 = sphi 0, %s183
    %s200 = sphi 0, %s184
    %s206 = sphi 0, %s208
    %s209 = sphi 0, %s206
    %s210 = sphi 0, %s209
    %s226 = sphi 0, %s210
    %s232 = sphi 0, %s234
    %s235 = sphi 0, %s232
    %s236 = sphi 0, %s235
    %s252 = sphi 0, %s236
    %s258 = sphi 0, %s260
    %s261 = sphi 0, %s258
    %s262 = sphi 0, %s261
    %s278 = sphi 0, %s262
    %s284 = sphi 0, %s286
    %s287 = sphi 0, %s284
    %s288 = sphi 0, %s287
    %s304 = sphi 0, %s288
    %s310 = sphi 0, %s312
    %s313 = sphi 0, %s310
    %s314 = sphi 0, %s313
    %s330 = sphi 0, %s314
    %s336 = sphi 0, %s338
    %s339 = sphi 0, %s336
    %s340 = sphi 0, %s339
    %s356 = sphi 0, %s340
    %s362 = sphi 0, %s364
    %s365 = sphi 0, %s362
    %s366 = sphi 0, %s365
    %s382 = sphi 0, %s366
    %s388 = sphi 0, %s390
    %s391 = sphi 0, %s388
    %s392 = sphi 0, %s391
    %s408 = sphi 0, %s392
    %s412 = sphi 0, %s412
    %s414 = sphi 0, %s412
    %s415 = sphi 0, %s414
    %s429 = sphi 0, %s415
    %s433 = sphi 0, %s433
    %s435 = sphi 0, %s433
    %s436 = sphi 0, %s435
    %s450 = sphi 0, %s436
    %s454 = sphi 0, %s454
    %s456 = sphi 0, %s454
    %s457 = sphi 0, %s456
    %s471 = sphi 0, %s457
    %s475 = sphi 0, %s475
    %s477 = sphi 0, %s475
    %s478 = sphi 0, %s477
    %s492 = sphi 0, %s478
  $region4: #{palme_forward.4} parent=0 // loop_header_branch
    %27 = sbr.rel (%p25) target = $region8
  $region5: #{palme_forward.4} parent=0 // loop_body
    %s29 = ssub.s32 %s24, 1
    %s30 = ssub.s32 %s24, 2
    %s31 = sadd.s32 %s24, 1
    %s33 = sadd.s32 %s32, 1
    %p36 = scmp.eq.s32.totalorder %s24, 1
    %p37 = scmp.ne.s32.totalorder %s32, %s34
    %p38 = scmp.eq.s32.totalorder %s24, 0
    %p39 = por %p37, %p38
    %p40 = scmp.ne.s32.totalorder %s32, %s34
    %p41 = scmp.eq.s32.totalorder %s29, 1
    %p42 = por %p40, %p41
    %p43 = scmp.ne.s32.totalorder %s34, %s35
    %p44 = scmp.eq.s32.totalorder %s29, 0
    %p45 = por %p43, %p44
    %p46 = scmp.ne.s32.totalorder %s34, %s35
    %p47 = scmp.eq.s32.totalorder %s30, 1
    %p48 = por %p46, %p47
    %p50 = scmp.ne.s32.totalorder %s35, %s49
    %p51 = scmp.eq.s32.totalorder %s30, 0
    %p52 = por %p50, %p51
    %s54 = sadd.s32 %s53, 1
    %p57 = scmp.eq.s32.totalorder %s24, 1
    %p58 = scmp.ne.s32.totalorder %s53, %s55
    %p59 = scmp.eq.s32.totalorder %s24, 0
    %p60 = por %p58, %p59
    %p61 = scmp.ne.s32.totalorder %s53, %s55
    %p62 = scmp.eq.s32.totalorder %s29, 1
    %p63 = por %p61, %p62
    %p64 = scmp.ne.s32.totalorder %s55, %s56
    %p65 = scmp.eq.s32.totalorder %s29, 0
    %p66 = por %p64, %p65
    %p67 = scmp.ne.s32.totalorder %s55, %s56
    %p68 = scmp.eq.s32.totalorder %s30, 1
    %p69 = por %p67, %p68
    %p71 = scmp.ne.s32.totalorder %s56, %s70
    %p72 = scmp.eq.s32.totalorder %s30, 0
    %p73 = por %p71, %p72
    %s74 = ssub.s32 %s24, %s31
    %p75 = scmp.eq.s32.totalorder %s74, 0
    %s77 = sadd.s32 %s76, 1
    %s78 = scalar_select %p75, %s76, %s77
    %p81 = pneg %p75
    %p82 = scmp.eq.s32.totalorder %s24, 1
    %p83 = por %p81, %p82
    %p84 = scmp.ne.s32.totalorder %s76, %s79
    %p85 = scmp.eq.s32.totalorder %s24, 0
    %p86 = por %p84, %p85
    %p87 = scmp.ne.s32.totalorder %s76, %s79
    %p88 = scmp.eq.s32.totalorder %s29, 1
    %p89 = por %p87, %p88
    %p90 = scmp.ne.s32.totalorder %s79, %s80
    %p91 = scmp.eq.s32.totalorder %s29, 0
    %p92 = por %p90, %p91
    %p93 = scmp.ne.s32.totalorder %s79, %s80
    %p94 = scmp.eq.s32.totalorder %s30, 1
    %p95 = por %p93, %p94
    %p97 = scmp.ne.s32.totalorder %s80, %s96
    %p98 = scmp.eq.s32.totalorder %s30, 0
    %p99 = por %p97, %p98
    %s100 = ssub.s32 %s24, %s31
    %p101 = scmp.eq.s32.totalorder %s100, 0
    %s103 = sadd.s32 %s102, 1
    %s104 = scalar_select %p101, %s102, %s103
    %p107 = pneg %p101
    %p108 = scmp.eq.s32.totalorder %s24, 1
    %p109 = por %p107, %p108
    %p110 = scmp.ne.s32.totalorder %s102, %s105
    %p111 = scmp.eq.s32.totalorder %s24, 0
    %p112 = por %p110, %p111
    %p113 = scmp.ne.s32.totalorder %s102, %s105
    %p114 = scmp.eq.s32.totalorder %s29, 1
    %p115 = por %p113, %p114
    %p116 = scmp.ne.s32.totalorder %s105, %s106
    %p117 = scmp.eq.s32.totalorder %s29, 0
    %p118 = por %p116, %p117
    %p119 = scmp.ne.s32.totalorder %s105, %s106
    %p120 = scmp.eq.s32.totalorder %s30, 1
    %p121 = por %p119, %p120
    %p123 = scmp.ne.s32.totalorder %s106, %s122
    %p124 = scmp.eq.s32.totalorder %s30, 0
    %p125 = por %p123, %p124
    %s126 = ssub.s32 %s24, %s31
    %p127 = scmp.eq.s32.totalorder %s126, 0
    %s129 = sadd.s32 %s128, 1
    %s130 = scalar_select %p127, %s128, %s129
    %p133 = pneg %p127
    %p134 = scmp.eq.s32.totalorder %s24, 1
    %p135 = por %p133, %p134
    %p136 = scmp.ne.s32.totalorder %s128, %s131
    %p137 = scmp.eq.s32.totalorder %s24, 0
    %p138 = por %p136, %p137
    %p139 = scmp.ne.s32.totalorder %s128, %s131
    %p140 = scmp.eq.s32.totalorder %s29, 1
    %p141 = por %p139, %p140
    %p142 = scmp.ne.s32.totalorder %s131, %s132
    %p143 = scmp.eq.s32.totalorder %s29, 0
    %p144 = por %p142, %p143
    %p145 = scmp.ne.s32.totalorder %s131, %s132
    %p146 = scmp.eq.s32.totalorder %s30, 1
    %p147 = por %p145, %p146
    %p149 = scmp.ne.s32.totalorder %s132, %s148
    %p150 = scmp.eq.s32.totalorder %s30, 0
    %p151 = por %p149, %p150
    %s152 = ssub.s32 %s24, %s31
    %p153 = scmp.eq.s32.totalorder %s152, 0
    %s155 = sadd.s32 %s154, 1
    %s156 = scalar_select %p153, %s154, %s155
    %p159 = pneg %p153
    %p160 = scmp.eq.s32.totalorder %s24, 1
    %p161 = por %p159, %p160
    %p162 = scmp.ne.s32.totalorder %s154, %s157
    %p163 = scmp.eq.s32.totalorder %s24, 0
    %p164 = por %p162, %p163
    %p165 = scmp.ne.s32.totalorder %s154, %s157
    %p166 = scmp.eq.s32.totalorder %s29, 1
    %p167 = por %p165, %p166
    %p168 = scmp.ne.s32.totalorder %s157, %s158
    %p169 = scmp.eq.s32.totalorder %s29, 0
    %p170 = por %p168, %p169
    %p171 = scmp.ne.s32.totalorder %s157, %s158
    %p172 = scmp.eq.s32.totalorder %s30, 1
    %p173 = por %p171, %p172
    %p175 = scmp.ne.s32.totalorder %s158, %s174
    %p176 = scmp.eq.s32.totalorder %s30, 0
    %p177 = por %p175, %p176
    %s178 = ssub.s32 %s24, %s31
    %p179 = scmp.eq.s32.totalorder %s178, 0
    %s181 = sadd.s32 %s180, 1
    %s182 = scalar_select %p179, %s180, %s181
    %p185 = pneg %p179
    %p186 = scmp.eq.s32.totalorder %s24, 1
    %p187 = por %p185, %p186
    %p188 = scmp.ne.s32.totalorder %s180, %s183
    %p189 = scmp.eq.s32.totalorder %s24, 0
    %p190 = por %p188, %p189
    %p191 = scmp.ne.s32.totalorder %s180, %s183
    %p192 = scmp.eq.s32.totalorder %s29, 1
    %p193 = por %p191, %p192
    %p194 = scmp.ne.s32.totalorder %s183, %s184
    %p195 = scmp.eq.s32.totalorder %s29, 0
    %p196 = por %p194, %p195
    %p197 = scmp.ne.s32.totalorder %s183, %s184
    %p198 = scmp.eq.s32.totalorder %s30, 1
    %p199 = por %p197, %p198
    %p201 = scmp.ne.s32.totalorder %s184, %s200
    %p202 = scmp.eq.s32.totalorder %s30, 0
    %p203 = por %p201, %p202
    %s204 = ssub.s32 %s24, %s31
    %p205 = scmp.eq.s32.totalorder %s204, 0
    %s207 = sadd.s32 %s206, 1
    %s208 = scalar_select %p205, %s206, %s207
    %p211 = pneg %p205
    %p212 = scmp.eq.s32.totalorder %s24, 1
    %p213 = por %p211, %p212
    %p214 = scmp.ne.s32.totalorder %s206, %s209
    %p215 = scmp.eq.s32.totalorder %s24, 0
    %p216 = por %p214, %p215
    %p217 = scmp.ne.s32.totalorder %s206, %s209
    %p218 = scmp.eq.s32.totalorder %s29, 1
    %p219 = por %p217, %p218
    %p220 = scmp.ne.s32.totalorder %s209, %s210
    %p221 = scmp.eq.s32.totalorder %s29, 0
    %p222 = por %p220, %p221
    %p223 = scmp.ne.s32.totalorder %s209, %s210
    %p224 = scmp.eq.s32.totalorder %s30, 1
    %p225 = por %p223, %p224
    %p227 = scmp.ne.s32.totalorder %s210, %s226
    %p228 = scmp.eq.s32.totalorder %s30, 0
    %p229 = por %p227, %p228
    %s230 = ssub.s32 %s24, %s31
    %p231 = scmp.eq.s32.totalorder %s230, 0
    %s233 = sadd.s32 %s232, 1
    %s234 = scalar_select %p231, %s232, %s233
    %p237 = pneg %p231
    %p238 = scmp.eq.s32.totalorder %s24, 1
    %p239 = por %p237, %p238
    %p240 = scmp.ne.s32.totalorder %s232, %s235
    %p241 = scmp.eq.s32.totalorder %s24, 0
    %p242 = por %p240, %p241
    %p243 = scmp.ne.s32.totalorder %s232, %s235
    %p244 = scmp.eq.s32.totalorder %s29, 1
    %p245 = por %p243, %p244
    %p246 = scmp.ne.s32.totalorder %s235, %s236
    %p247 = scmp.eq.s32.totalorder %s29, 0
    %p248 = por %p246, %p247
    %p249 = scmp.ne.s32.totalorder %s235, %s236
    %p250 = scmp.eq.s32.totalorder %s30, 1
    %p251 = por %p249, %p250
    %p253 = scmp.ne.s32.totalorder %s236, %s252
    %p254 = scmp.eq.s32.totalorder %s30, 0
    %p255 = por %p253, %p254
    %s256 = ssub.s32 %s24, %s31
    %p257 = scmp.eq.s32.totalorder %s256, 0
    %s259 = sadd.s32 %s258, 1
    %s260 = scalar_select %p257, %s258, %s259
    %p263 = pneg %p257
    %p264 = scmp.eq.s32.totalorder %s24, 1
    %p265 = por %p263, %p264
    %p266 = scmp.ne.s32.totalorder %s258, %s261
    %p267 = scmp.eq.s32.totalorder %s24, 0
    %p268 = por %p266, %p267
    %p269 = scmp.ne.s32.totalorder %s258, %s261
    %p270 = scmp.eq.s32.totalorder %s29, 1
    %p271 = por %p269, %p270
    %p272 = scmp.ne.s32.totalorder %s261, %s262
    %p273 = scmp.eq.s32.totalorder %s29, 0
    %p274 = por %p272, %p273
    %p275 = scmp.ne.s32.totalorder %s261, %s262
    %p276 = scmp.eq.s32.totalorder %s30, 1
    %p277 = por %p275, %p276
    %p279 = scmp.ne.s32.totalorder %s262, %s278
    %p280 = scmp.eq.s32.totalorder %s30, 0
    %p281 = por %p279, %p280
    %s282 = ssub.s32 %s24, %s31
    %p283 = scmp.eq.s32.totalorder %s282, 0
    %s285 = sadd.s32 %s284, 1
    %s286 = scalar_select %p283, %s284, %s285
    %p289 = pneg %p283
    %p290 = scmp.eq.s32.totalorder %s24, 1
    %p291 = por %p289, %p290
    %p292 = scmp.ne.s32.totalorder %s284, %s287
    %p293 = scmp.eq.s32.totalorder %s24, 0
    %p294 = por %p292, %p293
    %p295 = scmp.ne.s32.totalorder %s284, %s287
    %p296 = scmp.eq.s32.totalorder %s29, 1
    %p297 = por %p295, %p296
    %p298 = scmp.ne.s32.totalorder %s287, %s288
    %p299 = scmp.eq.s32.totalorder %s29, 0
    %p300 = por %p298, %p299
    %p301 = scmp.ne.s32.totalorder %s287, %s288
    %p302 = scmp.eq.s32.totalorder %s30, 1
    %p303 = por %p301, %p302
    %p305 = scmp.ne.s32.totalorder %s288, %s304
    %p306 = scmp.eq.s32.totalorder %s30, 0
    %p307 = por %p305, %p306
    %s308 = ssub.s32 %s24, %s31
    %p309 = scmp.eq.s32.totalorder %s308, 0
    %s311 = sadd.s32 %s310, 1
    %s312 = scalar_select %p309, %s310, %s311
    %p315 = pneg %p309
    %p316 = scmp.eq.s32.totalorder %s24, 1
    %p317 = por %p315, %p316
    %p318 = scmp.ne.s32.totalorder %s310, %s313
    %p319 = scmp.eq.s32.totalorder %s24, 0
    %p320 = por %p318, %p319
    %p321 = scmp.ne.s32.totalorder %s310, %s313
    %p322 = scmp.eq.s32.totalorder %s29, 1
    %p323 = por %p321, %p322
    %p324 = scmp.ne.s32.totalorder %s313, %s314
    %p325 = scmp.eq.s32.totalorder %s29, 0
    %p326 = por %p324, %p325
    %p327 = scmp.ne.s32.totalorder %s313, %s314
    %p328 = scmp.eq.s32.totalorder %s30, 1
    %p329 = por %p327, %p328
    %p331 = scmp.ne.s32.totalorder %s314, %s330
    %p332 = scmp.eq.s32.totalorder %s30, 0
    %p333 = por %p331, %p332
    %s334 = ssub.s32 %s24, %s31
    %p335 = scmp.eq.s32.totalorder %s334, 0
    %s337 = sadd.s32 %s336, 1
    %s338 = scalar_select %p335, %s336, %s337
    %p341 = pneg %p335
    %p342 = scmp.eq.s32.totalorder %s24, 1
    %p343 = por %p341, %p342
    %p344 = scmp.ne.s32.totalorder %s336, %s339
    %p345 = scmp.eq.s32.totalorder %s24, 0
    %p346 = por %p344, %p345
    %p347 = scmp.ne.s32.totalorder %s336, %s339
    %p348 = scmp.eq.s32.totalorder %s29, 1
    %p349 = por %p347, %p348
    %p350 = scmp.ne.s32.totalorder %s339, %s340
    %p351 = scmp.eq.s32.totalorder %s29, 0
    %p352 = por %p350, %p351
    %p353 = scmp.ne.s32.totalorder %s339, %s340
    %p354 = scmp.eq.s32.totalorder %s30, 1
    %p355 = por %p353, %p354
    %p357 = scmp.ne.s32.totalorder %s340, %s356
    %p358 = scmp.eq.s32.totalorder %s30, 0
    %p359 = por %p357, %p358
    %s360 = ssub.s32 %s24, %s31
    %p361 = scmp.eq.s32.totalorder %s360, 0
    %s363 = sadd.s32 %s362, 1
    %s364 = scalar_select %p361, %s362, %s363
    %p367 = pneg %p361
    %p368 = scmp.eq.s32.totalorder %s24, 1
    %p369 = por %p367, %p368
    %p370 = scmp.ne.s32.totalorder %s362, %s365
    %p371 = scmp.eq.s32.totalorder %s24, 0
    %p372 = por %p370, %p371
    %p373 = scmp.ne.s32.totalorder %s362, %s365
    %p374 = scmp.eq.s32.totalorder %s29, 1
    %p375 = por %p373, %p374
    %p376 = scmp.ne.s32.totalorder %s365, %s366
    %p377 = scmp.eq.s32.totalorder %s29, 0
    %p378 = por %p376, %p377
    %p379 = scmp.ne.s32.totalorder %s365, %s366
    %p380 = scmp.eq.s32.totalorder %s30, 1
    %p381 = por %p379, %p380
    %p383 = scmp.ne.s32.totalorder %s366, %s382
    %p384 = scmp.eq.s32.totalorder %s30, 0
    %p385 = por %p383, %p384
    %s386 = ssub.s32 %s24, %s31
    %p387 = scmp.eq.s32.totalorder %s386, 0
    %s389 = sadd.s32 %s388, 1
    %s390 = scalar_select %p387, %s388, %s389
    %p393 = pneg %p387
    %p394 = scmp.eq.s32.totalorder %s24, 1
    %p395 = por %p393, %p394
    %p396 = scmp.ne.s32.totalorder %s388, %s391
    %p397 = scmp.eq.s32.totalorder %s24, 0
    %p398 = por %p396, %p397
    %p399 = scmp.ne.s32.totalorder %s388, %s391
    %p400 = scmp.eq.s32.totalorder %s29, 1
    %p401 = por %p399, %p400
    %p402 = scmp.ne.s32.totalorder %s391, %s392
    %p403 = scmp.eq.s32.totalorder %s29, 0
    %p404 = por %p402, %p403
    %p405 = scmp.ne.s32.totalorder %s391, %s392
    %p406 = scmp.eq.s32.totalorder %s30, 1
    %p407 = por %p405, %p406
    %p409 = scmp.ne.s32.totalorder %s392, %s408
    %p410 = scmp.eq.s32.totalorder %s30, 0
    %p411 = por %p409, %p410
    %s413 = sadd.s32 %s412, 1
    %p416 = scmp.eq.s32.totalorder %s24, 1
    %p417 = scmp.ne.s32.totalorder %s412, %s414
    %p418 = scmp.eq.s32.totalorder %s24, 0
    %p419 = por %p417, %p418
    %p420 = scmp.ne.s32.totalorder %s412, %s414
    %p421 = scmp.eq.s32.totalorder %s29, 1
    %p422 = por %p420, %p421
    %p423 = scmp.ne.s32.totalorder %s414, %s415
    %p424 = scmp.eq.s32.totalorder %s29, 0
    %p425 = por %p423, %p424
    %p426 = scmp.ne.s32.totalorder %s414, %s415
    %p427 = scmp.eq.s32.totalorder %s30, 1
    %p428 = por %p426, %p427
    %p430 = scmp.ne.s32.totalorder %s415, %s429
    %p431 = scmp.eq.s32.totalorder %s30, 0
    %p432 = por %p430, %p431
    %s434 = sadd.s32 %s433, 1
    %p437 = scmp.eq.s32.totalorder %s24, 1
    %p438 = scmp.ne.s32.totalorder %s433, %s435
    %p439 = scmp.eq.s32.totalorder %s24, 0
    %p440 = por %p438, %p439
    %p441 = scmp.ne.s32.totalorder %s433, %s435
    %p442 = scmp.eq.s32.totalorder %s29, 1
    %p443 = por %p441, %p442
    %p444 = scmp.ne.s32.totalorder %s435, %s436
    %p445 = scmp.eq.s32.totalorder %s29, 0
    %p446 = por %p444, %p445
    %p447 = scmp.ne.s32.totalorder %s435, %s436
    %p448 = scmp.eq.s32.totalorder %s30, 1
    %p449 = por %p447, %p448
    %p451 = scmp.ne.s32.totalorder %s436, %s450
    %p452 = scmp.eq.s32.totalorder %s30, 0
    %p453 = por %p451, %p452
    %s455 = sadd.s32 %s454, 1
    %p458 = scmp.eq.s32.totalorder %s24, 1
    %p459 = scmp.ne.s32.totalorder %s454, %s456
    %p460 = scmp.eq.s32.totalorder %s24, 0
    %p461 = por %p459, %p460
    %p462 = scmp.ne.s32.totalorder %s454, %s456
    %p463 = scmp.eq.s32.totalorder %s29, 1
    %p464 = por %p462, %p463
    %p465 = scmp.ne.s32.totalorder %s456, %s457
    %p466 = scmp.eq.s32.totalorder %s29, 0
    %p467 = por %p465, %p466
    %p468 = scmp.ne.s32.totalorder %s456, %s457
    %p469 = scmp.eq.s32.totalorder %s30, 1
    %p470 = por %p468, %p469
    %p472 = scmp.ne.s32.totalorder %s457, %s471
    %p473 = scmp.eq.s32.totalorder %s30, 0
    %p474 = por %p472, %p473
    %s476 = sadd.s32 %s475, 1
    %p479 = scmp.eq.s32.totalorder %s24, 1
    %p480 = scmp.ne.s32.totalorder %s475, %s477
    %p481 = scmp.eq.s32.totalorder %s24, 0
    %p482 = por %p480, %p481
    %p483 = scmp.ne.s32.totalorder %s475, %s477
    %p484 = scmp.eq.s32.totalorder %s29, 1
    %p485 = por %p483, %p484
    %p486 = scmp.ne.s32.totalorder %s477, %s478
    %p487 = scmp.eq.s32.totalorder %s29, 0
    %p488 = por %p486, %p487
    %p489 = scmp.ne.s32.totalorder %s477, %s478
    %p490 = scmp.eq.s32.totalorder %s30, 1
    %p491 = por %p489, %p490
    %p493 = scmp.ne.s32.totalorder %s478, %s492
    %p494 = scmp.eq.s32.totalorder %s30, 0
    %p495 = por %p493, %p494
    %p496 = scmp.le.s32.totalorder 1, %s24
    %p497 = scmp.lt.s32.totalorder %s24, 3
    %p498 = pnand %p496, %p497
    %p499 = pneg %p498
    // Predicated region
    $region9: #{palme_forward.4} parent=5 // pred_check
      _
    $region10: #{palme_forward.4} parent=5 // pred_check_branch
      %501 = sbr.rel (%p498) target = $region12
    $region11: #{palme_forward.4} parent=5 // pred_region
      %s502 = ssub.s32 %s24, 1
      // Predicated region
      $region13: #{palme_forward.4} parent=11 // pred_check
        %p503 = pneg %p45
      $region14: #{palme_forward.4} parent=11 // pred_check_branch
        %505 = sbr.rel (%p503) target = $region16
      $region15: #{palme_forward.4} parent=11 // pred_region
        _
      $region16: #{palme_forward.4} parent=11 // pred_fallthru
        _
      // Predicated region
      $region17: #{palme_forward.4} parent=11 // pred_check
        %p506 = pneg %p66
      $region18: #{palme_forward.4} parent=11 // pred_check_branch
        %508 = sbr.rel (%p506) target = $region20
      $region19: #{palme_forward.4} parent=11 // pred_region
        _
      $region20: #{palme_forward.4} parent=11 // pred_fallthru
        _
      // Predicated region
      $region21: #{palme_forward.4} parent=11 // pred_check
        %p509 = pneg %p425
      $region22: #{palme_forward.4} parent=11 // pred_check_branch
        %511 = sbr.rel (%p509) target = $region24
      $region23: #{palme_forward.4} parent=11 // pred_region
        _
      $region24: #{palme_forward.4} parent=11 // pred_fallthru
        _
      // Predicated region
      $region25: #{palme_forward.4} parent=11 // pred_check
        %p512 = pneg %p446
      $region26: #{palme_forward.4} parent=11 // pred_check_branch
        %514 = sbr.rel (%p512) target = $region28
      $region27: #{palme_forward.4} parent=11 // pred_region
        _
      $region28: #{palme_forward.4} parent=11 // pred_fallthru
        _
      // Predicated region
      $region29: #{palme_forward.4} parent=11 // pred_check
        %p515 = pneg %p467
      $region30: #{palme_forward.4} parent=11 // pred_check_branch
        %517 = sbr.rel (%p515) target = $region32
      $region31: #{palme_forward.4} parent=11 // pred_region
        _
      $region32: #{palme_forward.4} parent=11 // pred_fallthru
        _
    $region12: #{palme_forward.4} parent=5 // pred_fallthru
      _
    %p518 = scmp.lt.s32.totalorder %s24, 2
    // Predicated region
    $region33: #{palme_forward.4} parent=5 // pred_check
      %p519 = pneg %p518
    $region34: #{palme_forward.4} parent=5 // pred_check_branch
      %521 = sbr.rel (%p519) target = $region36
    $region35: #{palme_forward.4} parent=5 // pred_region
      // Predicated region
      $region37: #{palme_forward.4} parent=35 // pred_check
        %p522 = pneg %p86
      $region38: #{palme_forward.4} parent=35 // pred_check_branch
        %524 = sbr.rel (%p522) target = $region40
      $region39: #{palme_forward.4} parent=35 // pred_region
        %p525 = scmp.lt.s32.totalorder %s24, 1
        %s526 = scalar_select %p525, %s24, 1
        %s527 = scalar_lea.vmem %s2, %s526
      $region40: #{palme_forward.4} parent=35 // pred_fallthru
        _
      // Predicated region
      $region41: #{palme_forward.4} parent=35 // pred_check
        %p528 = pneg %p112
      $region42: #{palme_forward.4} parent=35 // pred_check_branch
        %530 = sbr.rel (%p528) target = $region44
      $region43: #{palme_forward.4} parent=35 // pred_region
        %p531 = scmp.lt.s32.totalorder %s24, 1
        %s532 = scalar_select %p531, %s24, 1
        %s533 = scalar_lea.vmem %s3, %s532
      $region44: #{palme_forward.4} parent=35 // pred_fallthru
        _
      // Predicated region
      $region45: #{palme_forward.4} parent=35 // pred_check
        %p534 = pneg %p138
      $region46: #{palme_forward.4} parent=35 // pred_check_branch
        %536 = sbr.rel (%p534) target = $region48
      $region47: #{palme_forward.4} parent=35 // pred_region
        %p537 = scmp.lt.s32.totalorder %s24, 1
        %s538 = scalar_select %p537, %s24, 1
        %s539 = scalar_lea.vmem %s4, %s538
      $region48: #{palme_forward.4} parent=35 // pred_fallthru
        _
      // Predicated region
      $region49: #{palme_forward.4} parent=35 // pred_check
        %p540 = pneg %p164
      $region50: #{palme_forward.4} parent=35 // pred_check_branch
        %542 = sbr.rel (%p540) target = $region52
      $region51: #{palme_forward.4} parent=35 // pred_region
        %p543 = scmp.lt.s32.totalorder %s24, 1
        %s544 = scalar_select %p543, %s24, 1
        %s545 = scalar_lea.vmem %s5, %s544
      $region52: #{palme_forward.4} parent=35 // pred_fallthru
        _
      // Predicated region
      $region53: #{palme_forward.4} parent=35 // pred_check
        %p546 = pneg %p190
      $region54: #{palme_forward.4} parent=35 // pred_check_branch
        %548 = sbr.rel (%p546) target = $region56
      $region55: #{palme_forward.4} parent=35 // pred_region
        %p549 = scmp.lt.s32.totalorder %s24, 1
        %s550 = scalar_select %p549, %s24, 1
        %s551 = smul.addr %s550, 2
        %s552 = smul.addr %s551, 4
        %s553 = scalar_lea.vmem %s6, %s552
      $region56: #{palme_forward.4} parent=35 // pred_fallthru
        _
      // Predicated region
      $region57: #{palme_forward.4} parent=35 // pred_check
        %p554 = pneg %p216
      $region58: #{palme_forward.4} parent=35 // pred_check_branch
        %556 = sbr.rel (%p554) target = $region60
      $region59: #{palme_forward.4} parent=35 // pred_region
        %p557 = scmp.lt.s32.totalorder %s24, 1
        %s558 = scalar_select %p557, %s24, 1
        %s559 = smul.addr %s558, 2
        %s560 = smul.addr %s559, 4
        %s561 = scalar_lea.vmem %s7, %s560
      $region60: #{palme_forward.4} parent=35 // pred_fallthru
        _
      // Predicated region
      $region61: #{palme_forward.4} parent=35 // pred_check
        %p562 = pneg %p242
      $region62: #{palme_forward.4} parent=35 // pred_check_branch
        %564 = sbr.rel (%p562) target = $region64
      $region63: #{palme_forward.4} parent=35 // pred_region
        %p565 = scmp.lt.s32.totalorder %s24, 1
        %s566 = scalar_select %p565, %s24, 1
        %s567 = smul.addr %s566, 2
        %s568 = smul.addr %s567, 4
        %s569 = scalar_lea.vmem %s8, %s568
      $region64: #{palme_forward.4} parent=35 // pred_fallthru
        _
      // Predicated region
      $region65: #{palme_forward.4} parent=35 // pred_check
        %p570 = pneg %p268
      $region66: #{palme_forward.4} parent=35 // pred_check_branch
        %572 = sbr.rel (%p570) target = $region68
      $region67: #{palme_forward.4} parent=35 // pred_region
        %p573 = scmp.lt.s32.totalorder %s24, 1
        %s574 = scalar_select %p573, %s24, 1
        %s575 = scalar_lea.vmem %s9, %s574
      $region68: #{palme_forward.4} parent=35 // pred_fallthru
        _
      // Predicated region
      $region69: #{palme_forward.4} parent=35 // pred_check
        %p576 = pneg %p294
      $region70: #{palme_forward.4} parent=35 // pred_check_branch
        %578 = sbr.rel (%p576) target = $region72
      $region71: #{palme_forward.4} parent=35 // pred_region
        %p579 = scmp.lt.s32.totalorder %s24, 1
        %s580 = scalar_select %p579, %s24, 1
        %s581 = scalar_lea.vmem %s10, %s580
      $region72: #{palme_forward.4} parent=35 // pred_fallthru
        _
      // Predicated region
      $region73: #{palme_forward.4} parent=35 // pred_check
        %p582 = pneg %p320
      $region74: #{palme_forward.4} parent=35 // pred_check_branch
        %584 = sbr.rel (%p582) target = $region76
      $region75: #{palme_forward.4} parent=35 // pred_region
        %p585 = scmp.lt.s32.totalorder %s24, 1
        %s586 = scalar_select %p585, %s24, 1
        %s587 = smul.addr %s586, 2
        %s588 = smul.addr %s587, 4
        %s589 = scalar_lea.vmem %s11, %s588
      $region76: #{palme_forward.4} parent=35 // pred_fallthru
        _
      // Predicated region
      $region77: #{palme_forward.4} parent=35 // pred_check
        %p590 = pneg %p346
      $region78: #{palme_forward.4} parent=35 // pred_check_branch
        %592 = sbr.rel (%p590) target = $region80
      $region79: #{palme_forward.4} parent=35 // pred_region
        %p593 = scmp.lt.s32.totalorder %s24, 1
        %s594 = scalar_select %p593, %s24, 1
        %s595 = scalar_lea.vmem %s12, %s594
      $region80: #{palme_forward.4} parent=35 // pred_fallthru
        _
      // Predicated region
      $region81: #{palme_forward.4} parent=35 // pred_check
        %p596 = pneg %p372
      $region82: #{palme_forward.4} parent=35 // pred_check_branch
        %598 = sbr.rel (%p596) target = $region84
      $region83: #{palme_forward.4} parent=35 // pred_region
        %p599 = scmp.lt.s32.totalorder %s24, 1
        %s600 = scalar_select %p599, %s24, 1
        %s601 = smul.addr %s600, 8
        %s602 = smul.addr %s601, 4
        %s603 = scalar_lea.vmem %s13, %s602
      $region84: #{palme_forward.4} parent=35 // pred_fallthru
        _
      // Predicated region
      $region85: #{palme_forward.4} parent=35 // pred_check
        %p604 = pneg %p398
      $region86: #{palme_forward.4} parent=35 // pred_check_branch
        %606 = sbr.rel (%p604) target = $region88
      $region87: #{palme_forward.4} parent=35 // pred_region
        %p607 = scmp.lt.s32.totalorder %s24, 1
        %s608 = scalar_select %p607, %s24, 1
        %s609 = scalar_lea.vmem %s14, %s608
      $region88: #{palme_forward.4} parent=35 // pred_fallthru
        _
    $region36: #{palme_forward.4} parent=5 // pred_fallthru
      _
    %p610 = scmp.le.s32.totalorder 1, %s24
    %p611 = scmp.lt.s32.totalorder %s24, 3
    %p612 = pnand %p610, %p611
    %p613 = pneg %p612
    // Predicated region
    $region89: #{palme_forward.4} parent=5 // pred_check
      _
    $region90: #{palme_forward.4} parent=5 // pred_check_branch
      %615 = sbr.rel (%p612) target = $region92
    $region91: #{palme_forward.4} parent=5 // pred_region
      %s616 = ssub.s32 %s24, 1
      %p617 = pneg %p45
      %p618 = pneg %p42
      %p619 = pneg %p66
      %p620 = pneg %p63
      %p621 = scmp.lt.s32.totalorder %s29, 1
      %s622 = scalar_select %p621, %s29, 1
      %s623 = scalar_lea.vmem %s2, %s622
      %p624 = pneg %p92
      %p625 = pneg %p89
      %p626 = scmp.lt.s32.totalorder %s29, 1
      %s627 = scalar_select %p626, %s29, 1
      %s628 = scalar_lea.vmem %s3, %s627
      %p629 = pneg %p118
      %p630 = pneg %p115
      %p631 = scmp.lt.s32.totalorder %s29, 1
      %s632 = scalar_select %p631, %s29, 1
      %s633 = scalar_lea.vmem %s4, %s632
      %p634 = pneg %p144
      %p635 = pneg %p141
      %p636 = scmp.lt.s32.totalorder %s29, 1
      %s637 = scalar_select %p636, %s29, 1
      %s638 = scalar_lea.vmem %s5, %s637
      %p639 = pneg %p170
      %p640 = pneg %p167
      %p641 = scmp.lt.s32.totalorder %s29, 1
      %s642 = scalar_select %p641, %s29, 1
      %s643 = smul.addr %s642, 2
      %s644 = smul.addr %s643, 4
      %s645 = scalar_lea.vmem %s6, %s644
      %p646 = pneg %p196
      %p647 = pneg %p193
      %p648 = scmp.lt.s32.totalorder %s29, 1
      %s649 = scalar_select %p648, %s29, 1
      %s650 = smul.addr %s649, 2
      %s651 = smul.addr %s650, 4
      %s652 = scalar_lea.vmem %s7, %s651
      %p653 = pneg %p222
      %p654 = pneg %p219
      %p655 = scmp.lt.s32.totalorder %s29, 1
      %s656 = scalar_select %p655, %s29, 1
      %s657 = smul.addr %s656, 2
      %s658 = smul.addr %s657, 4
      %s659 = scalar_lea.vmem %s8, %s658
      %p660 = pneg %p248
      %p661 = pneg %p245
      %p662 = scmp.lt.s32.totalorder %s29, 1
      %s663 = scalar_select %p662, %s29, 1
      %s664 = scalar_lea.vmem %s9, %s663
      %p665 = pneg %p274
      %p666 = pneg %p271
      %p667 = scmp.lt.s32.totalorder %s29, 1
      %s668 = scalar_select %p667, %s29, 1
      %s669 = scalar_lea.vmem %s10, %s668
      %p670 = pneg %p300
      %p671 = pneg %p297
      %p672 = scmp.lt.s32.totalorder %s29, 1
      %s673 = scalar_select %p672, %s29, 1
      %s674 = smul.addr %s673, 2
      %s675 = smul.addr %s674, 4
      %s676 = scalar_lea.vmem %s11, %s675
      %p677 = pneg %p326
      %p678 = pneg %p323
      %p679 = scmp.lt.s32.totalorder %s29, 1
      %s680 = scalar_select %p679, %s29, 1
      %s681 = scalar_lea.vmem %s12, %s680
      %p682 = pneg %p352
      %p683 = pneg %p349
      %p684 = scmp.lt.s32.totalorder %s29, 1
      %s685 = scalar_select %p684, %s29, 1
      %s686 = smul.addr %s685, 8
      %s687 = smul.addr %s686, 4
      %s688 = scalar_lea.vmem %s13, %s687
      %p689 = pneg %p378
      %p690 = pneg %p375
      %p691 = scmp.lt.s32.totalorder %s29, 1
      %s692 = scalar_select %p691, %s29, 1
      %s693 = scalar_lea.vmem %s14, %s692
      %p694 = pneg %p404
      %p695 = pneg %p401
      %p696 = pneg %p425
      %p697 = pneg %p422
      %p698 = pneg %p446
      %p699 = pneg %p443
      %p700 = pneg %p467
      %p701 = pneg %p464
      %p702 = pneg %p488
      %p703 = pneg %p485
      %p704 = scmp.lt.s32.totalorder %s29, 1
      %s705 = scalar_select %p704, %s29, 1
      %s706 = scalar_lea.vmem %s2, %s705
      %p707 = scmp.lt.s32.totalorder %s29, 1
      %s708 = scalar_select %p707, %s29, 1
      %s709 = scalar_lea.vmem %s3, %s708
      %p710 = scmp.lt.s32.totalorder %s29, 1
      %s711 = scalar_select %p710, %s29, 1
      %s712 = scalar_lea.vmem %s4, %s711
      %p713 = scmp.lt.s32.totalorder %s29, 1
      %s714 = scalar_select %p713, %s29, 1
      %s715 = scalar_lea.vmem %s5, %s714
      %p716 = scmp.lt.s32.totalorder %s29, 1
      %s717 = scalar_select %p716, %s29, 1
      %s718 = smul.addr %s717, 2
      %s719 = smul.addr %s718, 4
      %s720 = scalar_lea.vmem %s6, %s719
      %p721 = scmp.lt.s32.totalorder %s29, 1
      %s722 = scalar_select %p721, %s29, 1
      %s723 = smul.addr %s722, 2
      %s724 = smul.addr %s723, 4
      %s725 = scalar_lea.vmem %s7, %s724
      %p726 = scmp.lt.s32.totalorder %s29, 1
      %s727 = scalar_select %p726, %s29, 1
      %s728 = smul.addr %s727, 2
      %s729 = smul.addr %s728, 4
      %s730 = scalar_lea.vmem %s8, %s729
      %p731 = scmp.lt.s32.totalorder %s29, 1
      %s732 = scalar_select %p731, %s29, 1
      %s733 = scalar_lea.vmem %s9, %s732
      %p734 = scmp.lt.s32.totalorder %s29, 1
      %s735 = scalar_select %p734, %s29, 1
      %s736 = scalar_lea.vmem %s10, %s735
      %p737 = scmp.lt.s32.totalorder %s29, 1
      %s738 = scalar_select %p737, %s29, 1
      %s739 = smul.addr %s738, 2
      %s740 = smul.addr %s739, 4
      %s741 = scalar_lea.vmem %s11, %s740
      %p742 = scmp.lt.s32.totalorder %s29, 1
      %s743 = scalar_select %p742, %s29, 1
      %s744 = scalar_lea.vmem %s12, %s743
      %p745 = scmp.lt.s32.totalorder %s29, 1
      %s746 = scalar_select %p745, %s29, 1
      %s747 = smul.addr %s746, 8
      %s748 = smul.addr %s747, 4
      %s749 = scalar_lea.vmem %s13, %s748
      %p750 = scmp.lt.s32.totalorder %s29, 1
      %s751 = scalar_select %p750, %s29, 1
      %s752 = scalar_lea.vmem %s14, %s751
      %p754 = scmp.eq.s32.totalorder %s29, 0
      // Predicated region
      $region93: #{palme_forward.4} parent=91 // pred_check
        %p755 = pneg %p754
      $region94: #{palme_forward.4} parent=91 // pred_check_branch
        %757 = sbr.rel (%p755) target = $region96
      $region95: #{palme_forward.4} parent=91 // pred_region
        %v758 = vld [vmem:[%s1] sm:$0xff]
        %v759 = vld [vmem:[%s1 + $0x8] sm:$0xff]
        %v760 = vld [vmem:[%s1 + $0x10] sm:$0xff]
        %vm761 = vcmask 130048
        %762 = vst.msk [vmem:[#allocation2] sm:$0xff] %vm761, %v758
        %763 = vst.msk [vmem:[#allocation2 + $0x8] sm:$0xff] %vm761, %v759
        %764 = vst.msk [vmem:[#allocation2 + $0x10] sm:$0xff] %vm761, %v760
      $region96: #{palme_forward.4} parent=91 // pred_fallthru
        _
      %v765 = vld [vmem:[#allocation2] sm:$0xff]
      %v766 = vld [vmem:[#allocation2 + $0x8] sm:$0xff]
      %v767 = vld [vmem:[#allocation2 + $0x10] sm:$0xff]
      %v768 = vld [vmem:[%s0] sm:$0xff]
      %v769 = vld [vmem:[%s0 + $0x8] sm:$0xff]
      %v770 = vld [vmem:[%s0 + $0x10] sm:$0xff]
      %v771 = vld [vmem:[%s0 + $0x18] sm:$0xff]
      %v772 = vld [vmem:[%s0 + $0x20] sm:$0xff]
      %v773 = vld [vmem:[%s0 + $0x28] sm:$0xff]
      %v774 = vld [vmem:[%s706] sm:$0x1]
      %v775 = vld [vmem:[%s709] sm:$0x1]
      %vm776 = vcmask 130048
      %v777 = vsel %vm776, %v768, 0.0
      %778 = vadd.xlane.f32.xlu0 %v777
      %v779 = vpop.xlane.xlu0 %778
      %v780 = vsel %vm776, %v769, 0.0
      %781 = vadd.xlane.f32.xlu0 %v780
      %v782 = vpop.xlane.xlu0 %781
      %v783 = vsel %vm776, %v770, 0.0
      %784 = vadd.xlane.f32.xlu0 %v783
      %v785 = vpop.xlane.xlu0 %784
      %v786 = vsel %vm776, %v771, 0.0
      %787 = vadd.xlane.f32.xlu0 %v786
      %v788 = vpop.xlane.xlu0 %787
      %v789 = vsel %vm776, %v772, 0.0
      %790 = vadd.xlane.f32.xlu0 %v789
      %v791 = vpop.xlane.xlu0 %790
      %v792 = vsel %vm776, %v773, 0.0
      %793 = vadd.xlane.f32.xlu0 %v792
      %v794 = vpop.xlane.xlu0 %793
      %v795 = vrcp.pop 16.0
      %v796 = vmul.f32 16.0, %v795
      %v797 = vsub.f32 1.0, %v796
      %v798 = vmul.f32 %v795, %v797
      %v799 = vadd.f32 %v795, %v798
      %vm800 = vweird.f32 %v795
      %v801 = vsel %vm800, %v795, %v799
      %v802 = vmul.f32 %v779, %v801
      %v803 = vmul.f32 %v782, %v801
      %v804 = vmul.f32 %v785, %v801
      %v805 = vmul.f32 %v788, %v801
      %v806 = vmul.f32 %v791, %v801
      %v807 = vmul.f32 %v794, %v801
      %v808 = vsub.f32 %v768, %v802
      %v809 = vsub.f32 %v769, %v803
      %v810 = vsub.f32 %v770, %v804
      %v811 = vsub.f32 %v771, %v805
      %v812 = vsub.f32 %v772, %v806
      %v813 = vsub.f32 %v773, %v807
      %v814 = vmul.f32 %v808, %v808
      %v815 = vmul.f32 %v809, %v809
      %v816 = vmul.f32 %v810, %v810
      %v817 = vmul.f32 %v811, %v811
      %v818 = vmul.f32 %v812, %v812
      %v819 = vmul.f32 %v813, %v813
      %v820 = vsel %vm776, %v814, 0.0
      %821 = vadd.xlane.f32.xlu0 %v820
      %v822 = vpop.xlane.xlu0 %821
      %v823 = vsel %vm776, %v815, 0.0
      %824 = vadd.xlane.f32.xlu0 %v823
      %v825 = vpop.xlane.xlu0 %824
      %v826 = vsel %vm776, %v816, 0.0
      %827 = vadd.xlane.f32.xlu0 %v826
      %v828 = vpop.xlane.xlu0 %827
      %v829 = vsel %vm776, %v817, 0.0
      %830 = vadd.xlane.f32.xlu0 %v829
      %v831 = vpop.xlane.xlu0 %830
      %v832 = vsel %vm776, %v818, 0.0
      %833 = vadd.xlane.f32.xlu0 %v832
      %v834 = vpop.xlane.xlu0 %833
      %v835 = vsel %vm776, %v819, 0.0
      %836 = vadd.xlane.f32.xlu0 %v835
      %v837 = vpop.xlane.xlu0 %836
      %v838 = vmul.f32 %v822, %v801
      %v839 = vmul.f32 %v825, %v801
      %v840 = vmul.f32 %v828, %v801
      %v841 = vmul.f32 %v831, %v801
      %v842 = vmul.f32 %v834, %v801
      %v843 = vmul.f32 %v837, %v801
      %v844 = vadd.f32 %v838, 1e-05
      %v845 = vadd.f32 %v839, 1e-05
      %v846 = vadd.f32 %v840, 1e-05
      %v847 = vadd.f32 %v841, 1e-05
      %v848 = vadd.f32 %v842, 1e-05
      %v849 = vadd.f32 %v843, 1e-05
      %v850 = vrsqrt.pop %v844
      %v851 = vmul.f32 %v850, %v844
      %v852 = vmul.f32 %v851, %v850
      %v853 = vmul.f32 0.5, %v852
      %v854 = vsub.f32 1.5, %v853
      %v855 = vmul.f32 %v850, %v854
      %vm856 = vweird.f32 %v844
      %vm857 = vweird.f32 %v850
      %vm858 = vmor %vm856, %vm857
      %v859 = vsel %vm858, %v850, %v855
      %v860 = vrsqrt.pop %v845
      %v861 = vmul.f32 %v860, %v845
      %v862 = vmul.f32 %v861, %v860
      %v863 = vmul.f32 0.5, %v862
      %v864 = vsub.f32 1.5, %v863
      %v865 = vmul.f32 %v860, %v864
      %vm866 = vweird.f32 %v845
      %vm867 = vweird.f32 %v860
      %vm868 = vmor %vm866, %vm867
      %v869 = vsel %vm868, %v860, %v865
      %v870 = vrsqrt.pop %v846
      %v871 = vmul.f32 %v870, %v846
      %v872 = vmul.f32 %v871, %v870
      %v873 = vmul.f32 0.5, %v872
      %v874 = vsub.f32 1.5, %v873
      %v875 = vmul.f32 %v870, %v874
      %vm876 = vweird.f32 %v846
      %vm877 = vweird.f32 %v870
      %vm878 = vmor %vm876, %vm877
      %v879 = vsel %vm878, %v870, %v875
      %v880 = vrsqrt.pop %v847
      %v881 = vmul.f32 %v880, %v847
      %v882 = vmul.f32 %v881, %v880
      %v883 = vmul.f32 0.5, %v882
      %v884 = vsub.f32 1.5, %v883
      %v885 = vmul.f32 %v880, %v884
      %vm886 = vweird.f32 %v847
      %vm887 = vweird.f32 %v880
      %vm888 = vmor %vm886, %vm887
      %v889 = vsel %vm888, %v880, %v885
      %v890 = vrsqrt.pop %v848
      %v891 = vmul.f32 %v890, %v848
      %v892 = vmul.f32 %v891, %v890
      %v893 = vmul.f32 0.5, %v892
      %v894 = vsub.f32 1.5, %v893
      %v895 = vmul.f32 %v890, %v894
      %vm896 = vweird.f32 %v848
      %vm897 = vweird.f32 %v890
      %vm898 = vmor %vm896, %vm897
      %v899 = vsel %vm898, %v890, %v895
      %v900 = vrsqrt.pop %v849
      %v901 = vmul.f32 %v900, %v849
      %v902 = vmul.f32 %v901, %v900
      %v903 = vmul.f32 0.5, %v902
      %v904 = vsub.f32 1.5, %v903
      %v905 = vmul.f32 %v900, %v904
      %vm906 = vweird.f32 %v849
      %vm907 = vweird.f32 %v900
      %vm908 = vmor %vm906, %vm907
      %v909 = vsel %vm908, %v900, %v905
      %v910 = vmul.f32 %v808, %v859
      %v911 = vmul.f32 %v809, %v869
      %v912 = vmul.f32 %v810, %v879
      %v913 = vmul.f32 %v811, %v889
      %v914 = vmul.f32 %v812, %v899
      %v915 = vmul.f32 %v813, %v909
      %v917 = vperm.slane %v774, 0
      %v919 = vmul.f32 %v910, %v917
      %v920 = vmul.f32 %v911, %v917
      %v921 = vmul.f32 %v912, %v917
      %v922 = vmul.f32 %v913, %v917
      %v923 = vmul.f32 %v914, %v917
      %v924 = vmul.f32 %v915, %v917
      %v926 = vperm.slane %v775, 0
      %v928 = vadd.f32 %v919, %v926
      %v929 = vadd.f32 %v920, %v926
      %v930 = vadd.f32 %v921, %v926
      %v931 = vadd.f32 %v922, %v926
      %v932 = vadd.f32 %v923, %v926
      %v933 = vadd.f32 %v924, %v926
      %v934 = vld [vmem:[%s712] sm:$0x1]
      %v935 = vld [vmem:[%s715] sm:$0x1]
      %v936 = vsel %vm776, %v765, 0.0
      %937 = vadd.xlane.f32.xlu0 %v936
      %v938 = vpop.xlane.xlu0 %937
      %v939 = vsel %vm776, %v766, 0.0
      %940 = vadd.xlane.f32.xlu0 %v939
      %v941 = vpop.xlane.xlu0 %940
      %v942 = vsel %vm776, %v767, 0.0
      %943 = vadd.xlane.f32.xlu0 %v942
      %v944 = vpop.xlane.xlu0 %943
      %v945 = vmul.f32 %v938, %v801
      %v946 = vmul.f32 %v941, %v801
      %v947 = vmul.f32 %v944, %v801
      %v948 = vsub.f32 %v765, %v945
      %v949 = vsub.f32 %v766, %v946
      %v950 = vsub.f32 %v767, %v947
      %v951 = vmul.f32 %v948, %v948
      %v952 = vmul.f32 %v949, %v949
      %v953 = vmul.f32 %v950, %v950
      %v954 = vsel %vm776, %v951, 0.0
      %955 = vadd.xlane.f32.xlu0 %v954
      %v956 = vpop.xlane.xlu0 %955
      %v957 = vsel %vm776, %v952, 0.0
      %958 = vadd.xlane.f32.xlu0 %v957
      %v959 = vpop.xlane.xlu0 %958
      %v960 = vsel %vm776, %v953, 0.0
      %961 = vadd.xlane.f32.xlu0 %v960
      %v962 = vpop.xlane.xlu0 %961
      %v963 = vmul.f32 %v956, %v801
      %v964 = vmul.f32 %v959, %v801
      %v965 = vmul.f32 %v962, %v801
      %v966 = vadd.f32 %v963, 1e-05
      %v967 = vadd.f32 %v964, 1e-05
      %v968 = vadd.f32 %v965, 1e-05
      %v969 = vrsqrt.pop %v966
      %v970 = vmul.f32 %v969, %v966
      %v971 = vmul.f32 %v970, %v969
      %v972 = vmul.f32 0.5, %v971
      %v973 = vsub.f32 1.5, %v972
      %v974 = vmul.f32 %v969, %v973
      %vm975 = vweird.f32 %v966
      %vm976 = vweird.f32 %v969
      %vm977 = vmor %vm975, %vm976
      %v978 = vsel %vm977, %v969, %v974
      %v979 = vrsqrt.pop %v967
      %v980 = vmul.f32 %v979, %v967
      %v981 = vmul.f32 %v980, %v979
      %v982 = vmul.f32 0.5, %v981
      %v983 = vsub.f32 1.5, %v982
      %v984 = vmul.f32 %v979, %v983
      %vm985 = vweird.f32 %v967
      %vm986 = vweird.f32 %v979
      %vm987 = vmor %vm985, %vm986
      %v988 = vsel %vm987, %v979, %v984
      %v989 = vrsqrt.pop %v968
      %v990 = vmul.f32 %v989, %v968
      %v991 = vmul.f32 %v990, %v989
      %v992 = vmul.f32 0.5, %v991
      %v993 = vsub.f32 1.5, %v992
      %v994 = vmul.f32 %v989, %v993
      %vm995 = vweird.f32 %v968
      %vm996 = vweird.f32 %v989
      %vm997 = vmor %vm995, %vm996
      %v998 = vsel %vm997, %v989, %v994
      %v999 = vmul.f32 %v948, %v978
      %v1000 = vmul.f32 %v949, %v988
      %v1001 = vmul.f32 %v950, %v998
      %v1003 = vperm.slane %v934, 0
      %v1005 = vmul.f32 %v999, %v1003
      %v1006 = vmul.f32 %v1000, %v1003
      %v1007 = vmul.f32 %v1001, %v1003
      %v1009 = vperm.slane %v935, 0
      %v1011 = vadd.f32 %v1005, %v1009
      %v1012 = vadd.f32 %v1006, %v1009
      %v1013 = vadd.f32 %v1007, %v1009
      %v1014 = vpack.c.bf16 %v1012, %v1011
      %v1015 = vpack.c.bf16 %v1013, %v1013
      %v1016 = vld [vmem:[%s720] sm:$0xf]
      %v1017 = vld [vmem:[%s720 + $0x4] sm:$0xf]
      %v1020 = vunpack.c.l.b16 %v1016
      %v1021 = vunpack.c.l.b16 %v1017
      %v1022 = vpack.c.b16 %v1021, %v1020
      %v1025 = vsel %vm776, %v1014, 0
      %v1028 = vsel %vm776, %v1015, 0
      %1030 = vmatpush.bf16.msra.mxu0 0
      %1031 = vmatpush.bf16.msra.mxu0 0
      %1032 = vmatpush.bf16.msra.mxu0 0
      %1033 = vmatpush.bf16.msra.mxu0 0
      %1034 = vmatpush.bf16.msra.mxu0 0
      %1035 = vmatpush.bf16.msra.mxu0 0
      %1036 = vmatpush.bf16.msra.mxu0 0
      %1037 = vmatpush.bf16.msra.mxu0 %v1022
      %1038 = vmatmul.bf16.gmra.mxu0 %v1025
      %v1039 = vpop.f32.mrf.mxu0
      %v1040 = vadd.f32 0.0, %v1039
      %v1041 = vpop.f32.mrf.mxu0
      %v1042 = vadd.f32 0.0, %v1041
      %1043 = vmatmul.bf16.gmra.mxu0 %v1028
      %v1044 = vpop.f32.mrf.mxu0
      %v1045 = vadd.f32 0.0, %v1044
      %v1046 = vpop.f32.mrf.mxu0
      %1047 = vdwg.mxu0
      %v1048 = vpack.c.bf16 %v929, %v928
      %v1049 = vpack.c.bf16 %v931, %v930
      %v1050 = vpack.c.bf16 %v933, %v932
      %v1051 = vld [vmem:[%s725] sm:$0xf]
      %v1052 = vld [vmem:[%s725 + $0x4] sm:$0xf]
      %v1055 = vunpack.c.l.b16 %v1051
      %v1056 = vunpack.c.l.b16 %v1052
      %v1057 = vpack.c.b16 %v1056, %v1055
      %v1060 = vsel %vm776, %v1048, 0
      %v1063 = vsel %vm776, %v1049, 0
      %v1066 = vsel %vm776, %v1050, 0
      %1068 = vmatpush.bf16.msra.mxu0 0
      %1069 = vmatpush.bf16.msra.mxu0 0
      %1070 = vmatpush.bf16.msra.mxu0 0
      %1071 = vmatpush.bf16.msra.mxu0 0
      %1072 = vmatpush.bf16.msra.mxu0 0
      %1073 = vmatpush.bf16.msra.mxu0 0
      %1074 = vmatpush.bf16.msra.mxu0 0
      %1075 = vmatpush.bf16.msra.mxu0 %v1057
      %1076 = vmatmul.bf16.gmra.mxu0 %v1060
      %v1077 = vpop.f32.mrf.mxu0
      %v1078 = vadd.f32 0.0, %v1077
      %v1079 = vpop.f32.mrf.mxu0
      %v1080 = vadd.f32 0.0, %v1079
      %1081 = vmatmul.bf16.gmra.mxu0 %v1063
      %v1082 = vpop.f32.mrf.mxu0
      %v1083 = vadd.f32 0.0, %v1082
      %v1084 = vpop.f32.mrf.mxu0
      %v1085 = vadd.f32 0.0, %v1084
      %1086 = vmatmul.bf16.gmra.mxu0 %v1066
      %v1087 = vpop.f32.mrf.mxu0
      %v1088 = vadd.f32 0.0, %v1087
      %v1089 = vpop.f32.mrf.mxu0
      %v1090 = vadd.f32 0.0, %v1089
      %1091 = vdwg.mxu0
      %1092 = vmatpush.bf16.msra.mxu0 0
      %1093 = vmatpush.bf16.msra.mxu0 0
      %1094 = vmatpush.bf16.msra.mxu0 0
      %1095 = vmatpush.bf16.msra.mxu0 0
      %1096 = vmatpush.bf16.msra.mxu0 0
      %1097 = vmatpush.bf16.msra.mxu0 0
      %1098 = vmatpush.bf16.msra.mxu0 0
      %1099 = vmatpush.bf16.msra.mxu0 %v1057
      %1100 = vmatmul.bf16.gmra.mxu0 %v1025
      %v1101 = vpop.f32.mrf.mxu0
      %v1102 = vadd.f32 0.0, %v1101
      %v1103 = vpop.f32.mrf.mxu0
      %v1104 = vadd.f32 0.0, %v1103
      %1105 = vmatmul.bf16.gmra.mxu0 %v1028
      %v1106 = vpop.f32.mrf.mxu0
      %v1107 = vadd.f32 0.0, %v1106
      %v1108 = vpop.f32.mrf.mxu0
      %1109 = vdwg.mxu0
      %v1113 = vrot.slane %v1040, 4
      %v1114 = vrot.slane %v1042, 4
      %v1115 = vrot.slane %v1045, 4
      %v1119 = vrot.slane %v1102, 4
      %v1120 = vrot.slane %v1104, 4
      %v1121 = vrot.slane %v1107, 4
      %v1122 = vld [vmem:[%s730] sm:$0xf]
      %v1123 = vld [vmem:[%s730 + $0x4] sm:$0xf]
      %vm1124 = vcmask 64512
      %v1125 = vsel %vm1124, %v1040, 0
      %v1128 = vsel %vm1124, %v1078, 0
      %1130 = vmatpush.xpose.msra.mxu0 0.0
      %1131 = vmatpush.xpose.msra.mxu0 0.0
      %1132 = vmatpush.xpose.msra.mxu0 0.0
      %1133 = vmatpush.xpose.msra.mxu0 0.0
      %1134 = vmatpush.xpose.msra.mxu0 0.0
      %1135 = vmatpush.xpose.msra.mxu0 0.0
      %1136 = vmatpush.xpose.msra.mxu0 0.0
      %1137 = vmatpush.xpose.msra.mxu0 0.0
      %1138 = vmatpush.xpose.msra.mxu0 0.0
      %1139 = vmatpush.xpose.msra.mxu0 0.0
      %1140 = vmatpush.xpose.msra.mxu0 0.0
      %1141 = vmatpush.xpose.msra.mxu0 0.0
      %1142 = vmatpush.xpose.msra.mxu0 0.0
      %1143 = vmatpush.xpose.msra.mxu0 0.0
      %1144 = vmatpush.xpose.msra.mxu0 0.0
      %1145 = vmatpush.xpose.msra.mxu0 %v1128
      %1146 = vmatmul.f32.gmra.mxu0 %v1125
      %v1147 = vpop.f32.mrf.mxu0
      %v1148 = vadd.f32 0.0, %v1147
      %1149 = vdwg.mxu0
      %v1150 = vsel %vm1124, %v1113, 0
      %v1153 = vsel %vm1124, %v1080, 0
      %1155 = vmatpush.xpose.msra.mxu0 0.0
      %1156 = vmatpush.xpose.msra.mxu0 0.0
      %1157 = vmatpush.xpose.msra.mxu0 0.0
      %1158 = vmatpush.xpose.msra.mxu0 0.0
      %1159 = vmatpush.xpose.msra.mxu0 0.0
      %1160 = vmatpush.xpose.msra.mxu0 0.0
      %1161 = vmatpush.xpose.msra.mxu0 0.0
      %1162 = vmatpush.xpose.msra.mxu0 0.0
      %1163 = vmatpush.xpose.msra.mxu0 0.0
      %1164 = vmatpush.xpose.msra.mxu0 0.0
      %1165 = vmatpush.xpose.msra.mxu0 0.0
      %1166 = vmatpush.xpose.msra.mxu0 0.0
      %1167 = vmatpush.xpose.msra.mxu0 0.0
      %1168 = vmatpush.xpose.msra.mxu0 0.0
      %1169 = vmatpush.xpose.msra.mxu0 0.0
      %1170 = vmatpush.xpose.msra.mxu0 %v1153
      %1171 = vmatmul.f32.gmra.mxu0 %v1150
      %v1172 = vpop.f32.mrf.mxu0
      %v1173 = vadd.f32 0.0, %v1172
      %1174 = vdwg.mxu0
      %v1175 = vsel %vm1124, %v1042, 0
      %v1178 = vsel %vm1124, %v1083, 0
      %1180 = vmatpush.xpose.msra.mxu0 0.0
      %1181 = vmatpush.xpose.msra.mxu0 0.0
      %1182 = vmatpush.xpose.msra.mxu0 0.0
      %1183 = vmatpush.xpose.msra.mxu0 0.0
      %1184 = vmatpush.xpose.msra.mxu0 0.0
      %1185 = vmatpush.xpose.msra.mxu0 0.0
      %1186 = vmatpush.xpose.msra.mxu0 0.0
      %1187 = vmatpush.xpose.msra.mxu0 0.0
      %1188 = vmatpush.xpose.msra.mxu0 0.0
      %1189 = vmatpush.xpose.msra.mxu0 0.0
      %1190 = vmatpush.xpose.msra.mxu0 0.0
      %1191 = vmatpush.xpose.msra.mxu0 0.0
      %1192 = vmatpush.xpose.msra.mxu0 0.0
      %1193 = vmatpush.xpose.msra.mxu0 0.0
      %1194 = vmatpush.xpose.msra.mxu0 0.0
      %1195 = vmatpush.xpose.msra.mxu0 %v1178
      %1196 = vmatmul.f32.gmra.mxu0 %v1175
      %v1197 = vpop.f32.mrf.mxu0
      %v1198 = vadd.f32 0.0, %v1197
      %1199 = vdwg.mxu0
      %v1200 = vsel %vm1124, %v1114, 0
      %v1203 = vsel %vm1124, %v1085, 0
      %1205 = vmatpush.xpose.msra.mxu0 0.0
      %1206 = vmatpush.xpose.msra.mxu0 0.0
      %1207 = vmatpush.xpose.msra.mxu0 0.0
      %1208 = vmatpush.xpose.msra.mxu0 0.0
      %1209 = vmatpush.xpose.msra.mxu0 0.0
      %1210 = vmatpush.xpose.msra.mxu0 0.0
      %1211 = vmatpush.xpose.msra.mxu0 0.0
      %1212 = vmatpush.xpose.msra.mxu0 0.0
      %1213 = vmatpush.xpose.msra.mxu0 0.0
      %1214 = vmatpush.xpose.msra.mxu0 0.0
      %1215 = vmatpush.xpose.msra.mxu0 0.0
      %1216 = vmatpush.xpose.msra.mxu0 0.0
      %1217 = vmatpush.xpose.msra.mxu0 0.0
      %1218 = vmatpush.xpose.msra.mxu0 0.0
      %1219 = vmatpush.xpose.msra.mxu0 0.0
      %1220 = vmatpush.xpose.msra.mxu0 %v1203
      %1221 = vmatmul.f32.gmra.mxu0 %v1200
      %v1222 = vpop.f32.mrf.mxu0
      %v1223 = vadd.f32 0.0, %v1222
      %1224 = vdwg.mxu0
      %v1225 = vsel %vm1124, %v1045, 0
      %v1228 = vsel %vm1124, %v1088, 0
      %1230 = vmatpush.xpose.msra.mxu0 0.0
      %1231 = vmatpush.xpose.msra.mxu0 0.0
      %1232 = vmatpush.xpose.msra.mxu0 0.0
      %1233 = vmatpush.xpose.msra.mxu0 0.0
      %1234 = vmatpush.xpose.msra.mxu0 0.0
      %1235 = vmatpush.xpose.msra.mxu0 0.0
      %1236 = vmatpush.xpose.msra.mxu0 0.0
      %1237 = vmatpush.xpose.msra.mxu0 0.0
      %1238 = vmatpush.xpose.msra.mxu0 0.0
      %1239 = vmatpush.xpose.msra.mxu0 0.0
      %1240 = vmatpush.xpose.msra.mxu0 0.0
      %1241 = vmatpush.xpose.msra.mxu0 0.0
      %1242 = vmatpush.xpose.msra.mxu0 0.0
      %1243 = vmatpush.xpose.msra.mxu0 0.0
      %1244 = vmatpush.xpose.msra.mxu0 0.0
      %1245 = vmatpush.xpose.msra.mxu0 %v1228
      %1246 = vmatmul.f32.gmra.mxu0 %v1225
      %v1247 = vpop.f32.mrf.mxu0
      %v1248 = vadd.f32 0.0, %v1247
      %1249 = vdwg.mxu0
      %v1250 = vsel %vm1124, %v1115, 0
      %v1253 = vsel %vm1124, %v1090, 0
      %1255 = vmatpush.xpose.msra.mxu0 0.0
      %1256 = vmatpush.xpose.msra.mxu0 0.0
      %1257 = vmatpush.xpose.msra.mxu0 0.0
      %1258 = vmatpush.xpose.msra.mxu0 0.0
      %1259 = vmatpush.xpose.msra.mxu0 0.0
      %1260 = vmatpush.xpose.msra.mxu0 0.0
      %1261 = vmatpush.xpose.msra.mxu0 0.0
      %1262 = vmatpush.xpose.msra.mxu0 0.0
      %1263 = vmatpush.xpose.msra.mxu0 0.0
      %1264 = vmatpush.xpose.msra.mxu0 0.0
      %1265 = vmatpush.xpose.msra.mxu0 0.0
      %1266 = vmatpush.xpose.msra.mxu0 0.0
      %1267 = vmatpush.xpose.msra.mxu0 0.0
      %1268 = vmatpush.xpose.msra.mxu0 0.0
      %1269 = vmatpush.xpose.msra.mxu0 0.0
      %1270 = vmatpush.xpose.msra.mxu0 %v1253
      %1271 = vmatmul.f32.gmra.mxu0 %v1250
      %v1272 = vpop.f32.mrf.mxu0
      %v1273 = vadd.f32 0.0, %v1272
      %1274 = vdwg.mxu0
      %v1275 = vmul.f32 %v1148, 0.35355338
      %v1276 = vmul.f32 %v1173, 0.35355338
      %v1277 = vmul.f32 %v1198, 0.35355338
      %v1278 = vmul.f32 %v1223, 0.35355338
      %v1279 = vmul.f32 %v1248, 0.35355338
      %v1280 = vmul.f32 %v1273, 0.35355338
      %v1281 = vsel %vm1124, %v1102, 0
      %1283 = vmatpush.xpose.msra.mxu0 0.0
      %1284 = vmatpush.xpose.msra.mxu0 0.0
      %1285 = vmatpush.xpose.msra.mxu0 0.0
      %1286 = vmatpush.xpose.msra.mxu0 0.0
      %1287 = vmatpush.xpose.msra.mxu0 0.0
      %1288 = vmatpush.xpose.msra.mxu0 0.0
      %1289 = vmatpush.xpose.msra.mxu0 0.0
      %1290 = vmatpush.xpose.msra.mxu0 0.0
      %1291 = vmatpush.xpose.msra.mxu0 0.0
      %1292 = vmatpush.xpose.msra.mxu0 0.0
      %1293 = vmatpush.xpose.msra.mxu0 0.0
      %1294 = vmatpush.xpose.msra.mxu0 0.0
      %1295 = vmatpush.xpose.msra.mxu0 0.0
      %1296 = vmatpush.xpose.msra.mxu0 0.0
      %1297 = vmatpush.xpose.msra.mxu0 0.0
      %1298 = vmatpush.xpose.msra.mxu0 %v1281
      %1299 = vmatmul.f32.gmra.mxu0 %v1125
      %v1300 = vpop.f32.mrf.mxu0
      %v1301 = vadd.f32 0.0, %v1300
      %1302 = vdwg.mxu0
      %v1303 = vsel %vm1124, %v1119, 0
      %1305 = vmatpush.xpose.msra.mxu0 0.0
      %1306 = vmatpush.xpose.msra.mxu0 0.0
      %1307 = vmatpush.xpose.msra.mxu0 0.0
      %1308 = vmatpush.xpose.msra.mxu0 0.0
      %1309 = vmatpush.xpose.msra.mxu0 0.0
      %1310 = vmatpush.xpose.msra.mxu0 0.0
      %1311 = vmatpush.xpose.msra.mxu0 0.0
      %1312 = vmatpush.xpose.msra.mxu0 0.0
      %1313 = vmatpush.xpose.msra.mxu0 0.0
      %1314 = vmatpush.xpose.msra.mxu0 0.0
      %1315 = vmatpush.xpose.msra.mxu0 0.0
      %1316 = vmatpush.xpose.msra.mxu0 0.0
      %1317 = vmatpush.xpose.msra.mxu0 0.0
      %1318 = vmatpush.xpose.msra.mxu0 0.0
      %1319 = vmatpush.xpose.msra.mxu0 0.0
      %1320 = vmatpush.xpose.msra.mxu0 %v1303
      %1321 = vmatmul.f32.gmra.mxu0 %v1150
      %v1322 = vpop.f32.mrf.mxu0
      %v1323 = vadd.f32 0.0, %v1322
      %1324 = vdwg.mxu0
      %v1325 = vsel %vm1124, %v1104, 0
      %1327 = vmatpush.xpose.msra.mxu0 0.0
      %1328 = vmatpush.xpose.msra.mxu0 0.0
      %1329 = vmatpush.xpose.msra.mxu0 0.0
      %1330 = vmatpush.xpose.msra.mxu0 0.0
      %1331 = vmatpush.xpose.msra.mxu0 0.0
      %1332 = vmatpush.xpose.msra.mxu0 0.0
      %1333 = vmatpush.xpose.msra.mxu0 0.0
      %1334 = vmatpush.xpose.msra.mxu0 0.0
      %1335 = vmatpush.xpose.msra.mxu0 0.0
      %1336 = vmatpush.xpose.msra.mxu0 0.0
      %1337 = vmatpush.xpose.msra.mxu0 0.0
      %1338 = vmatpush.xpose.msra.mxu0 0.0
      %1339 = vmatpush.xpose.msra.mxu0 0.0
      %1340 = vmatpush.xpose.msra.mxu0 0.0
      %1341 = vmatpush.xpose.msra.mxu0 0.0
      %1342 = vmatpush.xpose.msra.mxu0 %v1325
      %1343 = vmatmul.f32.gmra.mxu0 %v1175
      %v1344 = vpop.f32.mrf.mxu0
      %v1345 = vadd.f32 0.0, %v1344
      %1346 = vdwg.mxu0
      %v1347 = vsel %vm1124, %v1120, 0
      %1349 = vmatpush.xpose.msra.mxu0 0.0
      %1350 = vmatpush.xpose.msra.mxu0 0.0
      %1351 = vmatpush.xpose.msra.mxu0 0.0
      %1352 = vmatpush.xpose.msra.mxu0 0.0
      %1353 = vmatpush.xpose.msra.mxu0 0.0
      %1354 = vmatpush.xpose.msra.mxu0 0.0
      %1355 = vmatpush.xpose.msra.mxu0 0.0
      %1356 = vmatpush.xpose.msra.mxu0 0.0
      %1357 = vmatpush.xpose.msra.mxu0 0.0
      %1358 = vmatpush.xpose.msra.mxu0 0.0
      %1359 = vmatpush.xpose.msra.mxu0 0.0
      %1360 = vmatpush.xpose.msra.mxu0 0.0
      %1361 = vmatpush.xpose.msra.mxu0 0.0
      %1362 = vmatpush.xpose.msra.mxu0 0.0
      %1363 = vmatpush.xpose.msra.mxu0 0.0
      %1364 = vmatpush.xpose.msra.mxu0 %v1347
      %1365 = vmatmul.f32.gmra.mxu0 %v1200
      %v1366 = vpop.f32.mrf.mxu0
      %v1367 = vadd.f32 0.0, %v1366
      %1368 = vdwg.mxu0
      %v1369 = vsel %vm1124, %v1107, 0
      %1371 = vmatpush.xpose.msra.mxu0 0.0
      %1372 = vmatpush.xpose.msra.mxu0 0.0
      %1373 = vmatpush.xpose.msra.mxu0 0.0
      %1374 = vmatpush.xpose.msra.mxu0 0.0
      %1375 = vmatpush.xpose.msra.mxu0 0.0
      %1376 = vmatpush.xpose.msra.mxu0 0.0
      %1377 = vmatpush.xpose.msra.mxu0 0.0
      %1378 = vmatpush.xpose.msra.mxu0 0.0
      %1379 = vmatpush.xpose.msra.mxu0 0.0
      %1380 = vmatpush.xpose.msra.mxu0 0.0
      %1381 = vmatpush.xpose.msra.mxu0 0.0
      %1382 = vmatpush.xpose.msra.mxu0 0.0
      %1383 = vmatpush.xpose.msra.mxu0 0.0
      %1384 = vmatpush.xpose.msra.mxu0 0.0
      %1385 = vmatpush.xpose.msra.mxu0 0.0
      %1386 = vmatpush.xpose.msra.mxu0 %v1369
      %1387 = vmatmul.f32.gmra.mxu0 %v1225
      %v1388 = vpop.f32.mrf.mxu0
      %v1389 = vadd.f32 0.0, %v1388
      %1390 = vdwg.mxu0
      %v1391 = vsel %vm1124, %v1121, 0
      %1393 = vmatpush.xpose.msra.mxu0 0.0
      %1394 = vmatpush.xpose.msra.mxu0 0.0
      %1395 = vmatpush.xpose.msra.mxu0 0.0
      %1396 = vmatpush.xpose.msra.mxu0 0.0
      %1397 = vmatpush.xpose.msra.mxu0 0.0
      %1398 = vmatpush.xpose.msra.mxu0 0.0
      %1399 = vmatpush.xpose.msra.mxu0 0.0
      %1400 = vmatpush.xpose.msra.mxu0 0.0
      %1401 = vmatpush.xpose.msra.mxu0 0.0
      %1402 = vmatpush.xpose.msra.mxu0 0.0
      %1403 = vmatpush.xpose.msra.mxu0 0.0
      %1404 = vmatpush.xpose.msra.mxu0 0.0
      %1405 = vmatpush.xpose.msra.mxu0 0.0
      %1406 = vmatpush.xpose.msra.mxu0 0.0
      %1407 = vmatpush.xpose.msra.mxu0 0.0
      %1408 = vmatpush.xpose.msra.mxu0 %v1391
      %1409 = vmatmul.f32.gmra.mxu0 %v1250
      %v1410 = vpop.f32.mrf.mxu0
      %v1411 = vadd.f32 0.0, %v1410
      %1412 = vdwg.mxu0
      %v1413 = vmul.f32 %v1301, 0.35355338
      %v1414 = vmul.f32 %v1323, 0.35355338
      %v1415 = vmul.f32 %v1345, 0.35355338
      %v1416 = vmul.f32 %v1367, 0.35355338
      %v1417 = vmul.f32 %v1389, 0.35355338
      %v1418 = vmul.f32 %v1411, 0.35355338
      %vm1419 = vcmask 60416
      %v1420 = vsel %vm1419, %v1275, -inf
      %1421 = vmax.xlane.f32.xlu0 %v1420
      %v1422 = vpop.xlane.xlu0 %1421
      %v1423 = vsel %vm1419, %v1276, -inf
      %1424 = vmax.xlane.f32.xlu0 %v1423
      %v1425 = vpop.xlane.xlu0 %1424
      %v1426 = vsel %vm1419, %v1277, -inf
      %1427 = vmax.xlane.f32.xlu0 %v1426
      %v1428 = vpop.xlane.xlu0 %1427
      %v1429 = vsel %vm1419, %v1278, -inf
      %1430 = vmax.xlane.f32.xlu0 %v1429
      %v1431 = vpop.xlane.xlu0 %1430
      %v1432 = vsel %vm1419, %v1279, -inf
      %1433 = vmax.xlane.f32.xlu0 %v1432
      %v1434 = vpop.xlane.xlu0 %1433
      %v1435 = vsel %vm1419, %v1280, -inf
      %1436 = vmax.xlane.f32.xlu0 %v1435
      %v1437 = vpop.xlane.xlu0 %1436
      %vm1438 = vcmask 27648
      %v1439 = vsel %vm1438, %v1413, -inf
      %1440 = vmax.xlane.f32.xlu0 %v1439
      %v1441 = vpop.xlane.xlu0 %1440
      %v1442 = vsel %vm1438, %v1414, -inf
      %1443 = vmax.xlane.f32.xlu0 %v1442
      %v1444 = vpop.xlane.xlu0 %1443
      %v1445 = vsel %vm1438, %v1415, -inf
      %1446 = vmax.xlane.f32.xlu0 %v1445
      %v1447 = vpop.xlane.xlu0 %1446
      %v1448 = vsel %vm1438, %v1416, -inf
      %1449 = vmax.xlane.f32.xlu0 %v1448
      %v1450 = vpop.xlane.xlu0 %1449
      %v1451 = vsel %vm1438, %v1417, -inf
      %1452 = vmax.xlane.f32.xlu0 %v1451
      %v1453 = vpop.xlane.xlu0 %1452
      %v1454 = vsel %vm1438, %v1418, -inf
      %1455 = vmax.xlane.f32.xlu0 %v1454
      %v1456 = vpop.xlane.xlu0 %1455
      %v1457 = vmax.f32 %v1422, %v1441
      %v1458 = vmax.f32 %v1425, %v1444
      %v1459 = vmax.f32 %v1428, %v1447
      %v1460 = vmax.f32 %v1431, %v1450
      %v1461 = vmax.f32 %v1434, %v1453
      %v1462 = vmax.f32 %v1437, %v1456
      %v1463 = vsub.f32 %v1275, %v1457
      %v1464 = vsub.f32 %v1276, %v1458
      %v1465 = vsub.f32 %v1277, %v1459
      %v1466 = vsub.f32 %v1278, %v1460
      %v1467 = vsub.f32 %v1279, %v1461
      %v1468 = vsub.f32 %v1280, %v1462
      %v1469 = vmul.f32 %v1463, 1.442695
      %v1470 = vpow.pop %v1469
      %v1471 = vmul.f32 %v1464, 1.442695
      %v1472 = vpow.pop %v1471
      %v1473 = vmul.f32 %v1465, 1.442695
      %v1474 = vpow.pop %v1473
      %v1475 = vmul.f32 %v1466, 1.442695
      %v1476 = vpow.pop %v1475
      %v1477 = vmul.f32 %v1467, 1.442695
      %v1478 = vpow.pop %v1477
      %v1479 = vmul.f32 %v1468, 1.442695
      %v1480 = vpow.pop %v1479
      %v1481 = vsub.f32 %v1413, %v1457
      %v1482 = vsub.f32 %v1414, %v1458
      %v1483 = vsub.f32 %v1415, %v1459
      %v1484 = vsub.f32 %v1416, %v1460
      %v1485 = vsub.f32 %v1417, %v1461
      %v1486 = vsub.f32 %v1418, %v1462
      %v1487 = vmul.f32 %v1481, 1.442695
      %v1488 = vpow.pop %v1487
      %v1489 = vmul.f32 %v1482, 1.442695
      %v1490 = vpow.pop %v1489
      %v1491 = vmul.f32 %v1483, 1.442695
      %v1492 = vpow.pop %v1491
      %v1493 = vmul.f32 %v1484, 1.442695
      %v1494 = vpow.pop %v1493
      %v1495 = vmul.f32 %v1485, 1.442695
      %v1496 = vpow.pop %v1495
      %v1497 = vmul.f32 %v1486, 1.442695
      %v1498 = vpow.pop %v1497
      %v1499 = vsel %vm1419, %v1470, 0.0
      %1500 = vadd.xlane.f32.xlu0 %v1499
      %v1501 = vpop.xlane.xlu0 %1500
      %v1502 = vsel %vm1419, %v1472, 0.0
      %1503 = vadd.xlane.f32.xlu0 %v1502
      %v1504 = vpop.xlane.xlu0 %1503
      %v1505 = vsel %vm1419, %v1474, 0.0
      %1506 = vadd.xlane.f32.xlu0 %v1505
      %v1507 = vpop.xlane.xlu0 %1506
      %v1508 = vsel %vm1419, %v1476, 0.0
      %1509 = vadd.xlane.f32.xlu0 %v1508
      %v1510 = vpop.xlane.xlu0 %1509
      %v1511 = vsel %vm1419, %v1478, 0.0
      %1512 = vadd.xlane.f32.xlu0 %v1511
      %v1513 = vpop.xlane.xlu0 %1512
      %v1514 = vsel %vm1419, %v1480, 0.0
      %1515 = vadd.xlane.f32.xlu0 %v1514
      %v1516 = vpop.xlane.xlu0 %1515
      %v1517 = vsel %vm1438, %v1488, 0.0
      %1518 = vadd.xlane.f32.xlu0 %v1517
      %v1519 = vpop.xlane.xlu0 %1518
      %v1520 = vsel %vm1438, %v1490, 0.0
      %1521 = vadd.xlane.f32.xlu0 %v1520
      %v1522 = vpop.xlane.xlu0 %1521
      %v1523 = vsel %vm1438, %v1492, 0.0
      %1524 = vadd.xlane.f32.xlu0 %v1523
      %v1525 = vpop.xlane.xlu0 %1524
      %v1526 = vsel %vm1438, %v1494, 0.0
      %1527 = vadd.xlane.f32.xlu0 %v1526
      %v1528 = vpop.xlane.xlu0 %1527
      %v1529 = vsel %vm1438, %v1496, 0.0
      %1530 = vadd.xlane.f32.xlu0 %v1529
      %v1531 = vpop.xlane.xlu0 %1530
      %v1532 = vsel %vm1438, %v1498, 0.0
      %1533 = vadd.xlane.f32.xlu0 %v1532
      %v1534 = vpop.xlane.xlu0 %1533
      %v1535 = vadd.f32 %v1501, %v1519
      %v1536 = vadd.f32 %v1504, %v1522
      %v1537 = vadd.f32 %v1507, %v1525
      %v1538 = vadd.f32 %v1510, %v1528
      %v1539 = vadd.f32 %v1513, %v1531
      %v1540 = vadd.f32 %v1516, %v1534
      %1541 = vst [vmem:[#allocation1] ss:$2 sm:$0xff] %v1102
      %v1542 = vld.sshfl [vmem:[#allocation1] sm:$0xff pattern:$0x75316420]
      %1543 = vrot.lane.b32.xlu0 %v1542, 112
      %v1544 = vpop.permute.xlu0 %1543
      %vm1545 = vcmask 31744
      %v1547 = vsel %vm1545, %v1488, 0
      %vm1549 = vcmask 1043456
      %v1550 = vsel %vm1549, %v1544, 0
      %1552 = vmatpush.msra.mxu0 0.0
      %1553 = vmatpush.msra.mxu0 0.0
      %1554 = vmatpush.msra.mxu0 0.0
      %1555 = vmatpush.msra.mxu0 0.0
      %1556 = vmatpush.msra.mxu0 0.0
      %1557 = vmatpush.msra.mxu0 0.0
      %1558 = vmatpush.msra.mxu0 0.0
      %1559 = vmatpush.msra.mxu0 0.0
      %1560 = vmatpush.msra.mxu0 0.0
      %1561 = vmatpush.msra.mxu0 0.0
      %1562 = vmatpush.msra.mxu0 0.0
      %1563 = vmatpush.msra.mxu0 0.0
      %1564 = vmatpush.msra.mxu0 0.0
      %1565 = vmatpush.msra.mxu0 0.0
      %1566 = vmatpush.msra.mxu0 0.0
      %1567 = vmatpush.msra.mxu0 %v1550
      %1568 = vmatmul.f32.gmra.mxu0 %v1547
      %v1569 = vpop.f32.mrf.mxu0
      %v1570 = vadd.f32 0.0, %v1569
      %1571 = vdwg.mxu0
      %1572 = vst [vmem:[#allocation1] ss:$2 sm:$0xff] %v1119
      %v1573 = vld.sshfl [vmem:[#allocation1] sm:$0xff pattern:$0x75316420]
      %1574 = vrot.lane.b32.xlu0 %v1573, 112
      %v1575 = vpop.permute.xlu0 %1574
      %v1577 = vsel %vm1545, %v1490, 0
      %v1579 = vsel %vm1549, %v1575, 0
      %1581 = vmatpush.msra.mxu0 0.0
      %1582 = vmatpush.msra.mxu0 0.0
      %1583 = vmatpush.msra.mxu0 0.0
      %1584 = vmatpush.msra.mxu0 0.0
      %1585 = vmatpush.msra.mxu0 0.0
      %1586 = vmatpush.msra.mxu0 0.0
      %1587 = vmatpush.msra.mxu0 0.0
      %1588 = vmatpush.msra.mxu0 0.0
      %1589 = vmatpush.msra.mxu0 0.0
      %1590 = vmatpush.msra.mxu0 0.0
      %1591 = vmatpush.msra.mxu0 0.0
      %1592 = vmatpush.msra.mxu0 0.0
      %1593 = vmatpush.msra.mxu0 0.0
      %1594 = vmatpush.msra.mxu0 0.0
      %1595 = vmatpush.msra.mxu0 0.0
      %1596 = vmatpush.msra.mxu0 %v1579
      %1597 = vmatmul.f32.gmra.mxu0 %v1577
      %v1598 = vpop.f32.mrf.mxu0
      %v1599 = vadd.f32 0.0, %v1598
      %1600 = vdwg.mxu0
      %1601 = vst [vmem:[#allocation1] ss:$2 sm:$0xff] %v1104
      %v1602 = vld.sshfl [vmem:[#allocation1] sm:$0xff pattern:$0x75316420]
      %1603 = vrot.lane.b32.xlu0 %v1602, 112
      %v1604 = vpop.permute.xlu0 %1603
      %v1606 = vsel %vm1545, %v1492, 0
      %v1608 = vsel %vm1549, %v1604, 0
      %1610 = vmatpush.msra.mxu0 0.0
      %1611 = vmatpush.msra.mxu0 0.0
      %1612 = vmatpush.msra.mxu0 0.0
      %1613 = vmatpush.msra.mxu0 0.0
      %1614 = vmatpush.msra.mxu0 0.0
      %1615 = vmatpush.msra.mxu0 0.0
      %1616 = vmatpush.msra.mxu0 0.0
      %1617 = vmatpush.msra.mxu0 0.0
      %1618 = vmatpush.msra.mxu0 0.0
      %1619 = vmatpush.msra.mxu0 0.0
      %1620 = vmatpush.msra.mxu0 0.0
      %1621 = vmatpush.msra.mxu0 0.0
      %1622 = vmatpush.msra.mxu0 0.0
      %1623 = vmatpush.msra.mxu0 0.0
      %1624 = vmatpush.msra.mxu0 0.0
      %1625 = vmatpush.msra.mxu0 %v1608
      %1626 = vmatmul.f32.gmra.mxu0 %v1606
      %v1627 = vpop.f32.mrf.mxu0
      %v1628 = vadd.f32 0.0, %v1627
      %1629 = vdwg.mxu0
      %1630 = vst [vmem:[#allocation1] ss:$2 sm:$0xff] %v1120
      %v1631 = vld.sshfl [vmem:[#allocation1] sm:$0xff pattern:$0x75316420]
      %1632 = vrot.lane.b32.xlu0 %v1631, 112
      %v1633 = vpop.permute.xlu0 %1632
      %v1635 = vsel %vm1545, %v1494, 0
      %v1637 = vsel %vm1549, %v1633, 0
      %1639 = vmatpush.msra.mxu0 0.0
      %1640 = vmatpush.msra.mxu0 0.0
      %1641 = vmatpush.msra.mxu0 0.0
      %1642 = vmatpush.msra.mxu0 0.0
      %1643 = vmatpush.msra.mxu0 0.0
      %1644 = vmatpush.msra.mxu0 0.0
      %1645 = vmatpush.msra.mxu0 0.0
      %1646 = vmatpush.msra.mxu0 0.0
      %1647 = vmatpush.msra.mxu0 0.0
      %1648 = vmatpush.msra.mxu0 0.0
      %1649 = vmatpush.msra.mxu0 0.0
      %1650 = vmatpush.msra.mxu0 0.0
      %1651 = vmatpush.msra.mxu0 0.0
      %1652 = vmatpush.msra.mxu0 0.0
      %1653 = vmatpush.msra.mxu0 0.0
      %1654 = vmatpush.msra.mxu0 %v1637
      %1655 = vmatmul.f32.gmra.mxu0 %v1635
      %v1656 = vpop.f32.mrf.mxu0
      %v1657 = vadd.f32 0.0, %v1656
      %1658 = vdwg.mxu0
      %1659 = vst [vmem:[#allocation1] ss:$2 sm:$0xff] %v1107
      %v1660 = vld.sshfl [vmem:[#allocation1] sm:$0xff pattern:$0x75316420]
      %1661 = vrot.lane.b32.xlu0 %v1660, 112
      %v1662 = vpop.permute.xlu0 %1661
      %v1664 = vsel %vm1545, %v1496, 0
      %v1666 = vsel %vm1549, %v1662, 0
      %1668 = vmatpush.msra.mxu0 0.0
      %1669 = vmatpush.msra.mxu0 0.0
      %1670 = vmatpush.msra.mxu0 0.0
      %1671 = vmatpush.msra.mxu0 0.0
      %1672 = vmatpush.msra.mxu0 0.0
      %1673 = vmatpush.msra.mxu0 0.0
      %1674 = vmatpush.msra.mxu0 0.0
      %1675 = vmatpush.msra.mxu0 0.0
      %1676 = vmatpush.msra.mxu0 0.0
      %1677 = vmatpush.msra.mxu0 0.0
      %1678 = vmatpush.msra.mxu0 0.0
      %1679 = vmatpush.msra.mxu0 0.0
      %1680 = vmatpush.msra.mxu0 0.0
      %1681 = vmatpush.msra.mxu0 0.0
      %1682 = vmatpush.msra.mxu0 0.0
      %1683 = vmatpush.msra.mxu0 %v1666
      %1684 = vmatmul.f32.gmra.mxu0 %v1664
      %v1685 = vpop.f32.mrf.mxu0
      %v1686 = vadd.f32 0.0, %v1685
      %1687 = vdwg.mxu0
      %1688 = vst [vmem:[#allocation1] ss:$2 sm:$0xff] %v1121
      %v1689 = vld.sshfl [vmem:[#allocation1] sm:$0xff pattern:$0x75316420]
      %1690 = vrot.lane.b32.xlu0 %v1689, 112
      %v1691 = vpop.permute.xlu0 %1690
      %v1693 = vsel %vm1545, %v1498, 0
      %v1695 = vsel %vm1549, %v1691, 0
      %1697 = vmatpush.msra.mxu0 0.0
      %1698 = vmatpush.msra.mxu0 0.0
      %1699 = vmatpush.msra.mxu0 0.0
      %1700 = vmatpush.msra.mxu0 0.0
      %1701 = vmatpush.msra.mxu0 0.0
      %1702 = vmatpush.msra.mxu0 0.0
      %1703 = vmatpush.msra.mxu0 0.0
      %1704 = vmatpush.msra.mxu0 0.0
      %1705 = vmatpush.msra.mxu0 0.0
      %1706 = vmatpush.msra.mxu0 0.0
      %1707 = vmatpush.msra.mxu0 0.0
      %1708 = vmatpush.msra.mxu0 0.0
      %1709 = vmatpush.msra.mxu0 0.0
      %1710 = vmatpush.msra.mxu0 0.0
      %1711 = vmatpush.msra.mxu0 0.0
      %1712 = vmatpush.msra.mxu0 %v1695
      %1713 = vmatmul.f32.gmra.mxu0 %v1693
      %v1714 = vpop.f32.mrf.mxu0
      %v1715 = vadd.f32 0.0, %v1714
      %1716 = vdwg.mxu0
      %1717 = vrot.lane.b32.xlu0 %v1078, 112
      %v1718 = vpop.permute.xlu0 %1717
      %v1721 = vsel %vm1124, %v1470, 0
      %1723 = vmatpush.msra.mxu0 0.0
      %1724 = vmatpush.msra.mxu0 0.0
      %1725 = vmatpush.msra.mxu0 0.0
      %1726 = vmatpush.msra.mxu0 0.0
      %1727 = vmatpush.msra.mxu0 0.0
      %1728 = vmatpush.msra.mxu0 0.0
      %1729 = vmatpush.msra.mxu0 0.0
      %1730 = vmatpush.msra.mxu0 0.0
      %1731 = vmatpush.msra.mxu0 0.0
      %1732 = vmatpush.msra.mxu0 0.0
      %1733 = vmatpush.msra.mxu0 0.0
      %1734 = vmatpush.msra.mxu0 0.0
      %1735 = vmatpush.msra.mxu0 0.0
      %1736 = vmatpush.msra.mxu0 0.0
      %1737 = vmatpush.msra.mxu0 0.0
      %1738 = vmatpush.msra.mxu0 %v1718
      %1739 = vmatmul.f32.gmra.mxu0 %v1721
      %v1740 = vpop.f32.mrf.mxu0
      %v1741 = vadd.f32 %v1570, %v1740
      %1742 = vdwg.mxu0
      %1743 = vrot.lane.b32.xlu0 %v1080, 112
      %v1744 = vpop.permute.xlu0 %1743
      %v1747 = vsel %vm1124, %v1472, 0
      %1749 = vmatpush.msra.mxu0 0.0
      %1750 = vmatpush.msra.mxu0 0.0
      %1751 = vmatpush.msra.mxu0 0.0
      %1752 = vmatpush.msra.mxu0 0.0
      %1753 = vmatpush.msra.mxu0 0.0
      %1754 = vmatpush.msra.mxu0 0.0
      %1755 = vmatpush.msra.mxu0 0.0
      %1756 = vmatpush.msra.mxu0 0.0
      %1757 = vmatpush.msra.mxu0 0.0
      %1758 = vmatpush.msra.mxu0 0.0
      %1759 = vmatpush.msra.mxu0 0.0
      %1760 = vmatpush.msra.mxu0 0.0
      %1761 = vmatpush.msra.mxu0 0.0
      %1762 = vmatpush.msra.mxu0 0.0
      %1763 = vmatpush.msra.mxu0 0.0
      %1764 = vmatpush.msra.mxu0 %v1744
      %1765 = vmatmul.f32.gmra.mxu0 %v1747
      %v1766 = vpop.f32.mrf.mxu0
      %v1767 = vadd.f32 %v1599, %v1766
      %1768 = vdwg.mxu0
      %1769 = vrot.lane.b32.xlu0 %v1083, 112
      %v1770 = vpop.permute.xlu0 %1769
      %v1773 = vsel %vm1124, %v1474, 0
      %1775 = vmatpush.msra.mxu0 0.0
      %1776 = vmatpush.msra.mxu0 0.0
      %1777 = vmatpush.msra.mxu0 0.0
      %1778 = vmatpush.msra.mxu0 0.0
      %1779 = vmatpush.msra.mxu0 0.0
      %1780 = vmatpush.msra.mxu0 0.0
      %1781 = vmatpush.msra.mxu0 0.0
      %1782 = vmatpush.msra.mxu0 0.0
      %1783 = vmatpush.msra.mxu0 0.0
      %1784 = vmatpush.msra.mxu0 0.0
      %1785 = vmatpush.msra.mxu0 0.0
      %1786 = vmatpush.msra.mxu0 0.0
      %1787 = vmatpush.msra.mxu0 0.0
      %1788 = vmatpush.msra.mxu0 0.0
      %1789 = vmatpush.msra.mxu0 0.0
      %1790 = vmatpush.msra.mxu0 %v1770
      %1791 = vmatmul.f32.gmra.mxu0 %v1773
      %v1792 = vpop.f32.mrf.mxu0
      %v1793 = vadd.f32 %v1628, %v1792
      %1794 = vdwg.mxu0
      %1795 = vrot.lane.b32.xlu0 %v1085, 112
      %v1796 = vpop.permute.xlu0 %1795
      %v1799 = vsel %vm1124, %v1476, 0
      %1801 = vmatpush.msra.mxu0 0.0
      %1802 = vmatpush.msra.mxu0 0.0
      %1803 = vmatpush.msra.mxu0 0.0
      %1804 = vmatpush.msra.mxu0 0.0
      %1805 = vmatpush.msra.mxu0 0.0
      %1806 = vmatpush.msra.mxu0 0.0
      %1807 = vmatpush.msra.mxu0 0.0
      %1808 = vmatpush.msra.mxu0 0.0
      %1809 = vmatpush.msra.mxu0 0.0
      %1810 = vmatpush.msra.mxu0 0.0
      %1811 = vmatpush.msra.mxu0 0.0
      %1812 = vmatpush.msra.mxu0 0.0
      %1813 = vmatpush.msra.mxu0 0.0
      %1814 = vmatpush.msra.mxu0 0.0
      %1815 = vmatpush.msra.mxu0 0.0
      %1816 = vmatpush.msra.mxu0 %v1796
      %1817 = vmatmul.f32.gmra.mxu0 %v1799
      %v1818 = vpop.f32.mrf.mxu0
      %v1819 = vadd.f32 %v1657, %v1818
      %1820 = vdwg.mxu0
      %1821 = vrot.lane.b32.xlu0 %v1088, 112
      %v1822 = vpop.permute.xlu0 %1821
      %v1825 = vsel %vm1124, %v1478, 0
      %1827 = vmatpush.msra.mxu0 0.0
      %1828 = vmatpush.msra.mxu0 0.0
      %1829 = vmatpush.msra.mxu0 0.0
      %1830 = vmatpush.msra.mxu0 0.0
      %1831 = vmatpush.msra.mxu0 0.0
      %1832 = vmatpush.msra.mxu0 0.0
      %1833 = vmatpush.msra.mxu0 0.0
      %1834 = vmatpush.msra.mxu0 0.0
      %1835 = vmatpush.msra.mxu0 0.0
      %1836 = vmatpush.msra.mxu0 0.0
      %1837 = vmatpush.msra.mxu0 0.0
      %1838 = vmatpush.msra.mxu0 0.0
      %1839 = vmatpush.msra.mxu0 0.0
      %1840 = vmatpush.msra.mxu0 0.0
      %1841 = vmatpush.msra.mxu0 0.0
      %1842 = vmatpush.msra.mxu0 %v1822
      %1843 = vmatmul.f32.gmra.mxu0 %v1825
      %v1844 = vpop.f32.mrf.mxu0
      %v1845 = vadd.f32 %v1686, %v1844
      %1846 = vdwg.mxu0
      %1847 = vrot.lane.b32.xlu0 %v1090, 112
      %v1848 = vpop.permute.xlu0 %1847
      %v1851 = vsel %vm1124, %v1480, 0
      %1853 = vmatpush.msra.mxu0 0.0
      %1854 = vmatpush.msra.mxu0 0.0
      %1855 = vmatpush.msra.mxu0 0.0
      %1856 = vmatpush.msra.mxu0 0.0
      %1857 = vmatpush.msra.mxu0 0.0
      %1858 = vmatpush.msra.mxu0 0.0
      %1859 = vmatpush.msra.mxu0 0.0
      %1860 = vmatpush.msra.mxu0 0.0
      %1861 = vmatpush.msra.mxu0 0.0
      %1862 = vmatpush.msra.mxu0 0.0
      %1863 = vmatpush.msra.mxu0 0.0
      %1864 = vmatpush.msra.mxu0 0.0
      %1865 = vmatpush.msra.mxu0 0.0
      %1866 = vmatpush.msra.mxu0 0.0
      %1867 = vmatpush.msra.mxu0 0.0
      %1868 = vmatpush.msra.mxu0 %v1848
      %1869 = vmatmul.f32.gmra.mxu0 %v1851
      %v1870 = vpop.f32.mrf.mxu0
      %v1871 = vadd.f32 %v1715, %v1870
      %1872 = vdwg.mxu0
      %v1873 = vrcp.pop %v1535
      %v1874 = vrcp.pop %v1536
      %v1875 = vrcp.pop %v1537
      %v1876 = vrcp.pop %v1538
      %v1877 = vrcp.pop %v1539
      %v1878 = vrcp.pop %v1540
      %v1879 = vmul.f32 %v1741, %v1873
      %v1880 = vmul.f32 %v1767, %v1874
      %v1881 = vmul.f32 %v1793, %v1875
      %v1882 = vmul.f32 %v1819, %v1876
      %v1883 = vmul.f32 %v1845, %v1877
      %v1884 = vmul.f32 %v1871, %v1878
      %1891 = vst [vmem:[#allocation1] ss:$2 sm:$0xff] %v1879
      %s1892 = scalar_lea.vmem [#allocation1], 1
      %1893 = vst [vmem:[%s1892] ss:$2 sm:$0xff] %v1880
      %s1894 = scalar_lea.vmem [#allocation1], 16
      %1895 = vst [vmem:[%s1894] ss:$2 sm:$0xff] %v1881
      %s1896 = scalar_lea.vmem [#allocation1], 17
      %1897 = vst [vmem:[%s1896] ss:$2 sm:$0xff] %v1882
      %s1898 = scalar_lea.vmem [#allocation1], 32
      %1899 = vst [vmem:[%s1898] ss:$2 sm:$0xff] %v1883
      %s1900 = scalar_lea.vmem [#allocation1], 33
      %1901 = vst [vmem:[%s1900] ss:$2 sm:$0xff] %v1884
      %v1902 = vld.sshfl [vmem:[#allocation1] sm:$0xff pattern:$0x75316420]
      %v1903 = vld.sshfl [vmem:[#allocation1 + $0x10] sm:$0xff pattern:$0x75316420]
      %v1904 = vld.sshfl [vmem:[#allocation1 + $0x20] sm:$0xff pattern:$0x75316420]
      %v1908 = vpack.c.bf16 %v1903, %v1902
      %v1909 = vpack.c.bf16 %v1904, %v1904
      %1910 = vst [vmem:[#allocation1] ss:$2 sm:$0xff] %v1040
      %v1911 = vld.sshfl [vmem:[#allocation1] sm:$0xff pattern:$0x75316420]
      %1912 = vrot.lane.b32.xlu0 %v1911, 120
      %v1913 = vpop.permute.xlu0 %1912
      %1914 = vrot.lane.b32.xlu0 %v1078, 120
      %v1915 = vpop.permute.xlu0 %1914
      %v1916 = vsel %vm1124, %v1913, 0
      %v1918 = vsel %vm1124, %v1915, 0
      %1920 = vmatpush.xpose.msra.mxu0 0.0
      %1921 = vmatpush.xpose.msra.mxu0 0.0
      %1922 = vmatpush.xpose.msra.mxu0 0.0
      %1923 = vmatpush.xpose.msra.mxu0 0.0
      %1924 = vmatpush.xpose.msra.mxu0 0.0
      %1925 = vmatpush.xpose.msra.mxu0 0.0
      %1926 = vmatpush.xpose.msra.mxu0 0.0
      %1927 = vmatpush.xpose.msra.mxu0 0.0
      %1928 = vmatpush.xpose.msra.mxu0 0.0
      %1929 = vmatpush.xpose.msra.mxu0 0.0
      %1930 = vmatpush.xpose.msra.mxu0 0.0
      %1931 = vmatpush.xpose.msra.mxu0 0.0
      %1932 = vmatpush.xpose.msra.mxu0 0.0
      %1933 = vmatpush.xpose.msra.mxu0 0.0
      %1934 = vmatpush.xpose.msra.mxu0 0.0
      %1935 = vmatpush.xpose.msra.mxu0 %v1918
      %1936 = vmatmul.f32.gmra.mxu0 %v1916
      %v1937 = vpop.f32.mrf.mxu0
      %v1938 = vadd.f32 0.0, %v1937
      %1939 = vdwg.mxu0
      %1940 = vst [vmem:[#allocation1] ss:$2 sm:$0xff] %v1113
      %v1941 = vld.sshfl [vmem:[#allocation1] sm:$0xff pattern:$0x75316420]
      %1942 = vrot.lane.b32.xlu0 %v1941, 120
      %v1943 = vpop.permute.xlu0 %1942
      %1944 = vrot.lane.b32.xlu0 %v1080, 120
      %v1945 = vpop.permute.xlu0 %1944
      %v1946 = vsel %vm1124, %v1943, 0
      %v1948 = vsel %vm1124, %v1945, 0
      %1950 = vmatpush.xpose.msra.mxu0 0.0
      %1951 = vmatpush.xpose.msra.mxu0 0.0
      %1952 = vmatpush.xpose.msra.mxu0 0.0
      %1953 = vmatpush.xpose.msra.mxu0 0.0
      %1954 = vmatpush.xpose.msra.mxu0 0.0
      %1955 = vmatpush.xpose.msra.mxu0 0.0
      %1956 = vmatpush.xpose.msra.mxu0 0.0
      %1957 = vmatpush.xpose.msra.mxu0 0.0
      %1958 = vmatpush.xpose.msra.mxu0 0.0
      %1959 = vmatpush.xpose.msra.mxu0 0.0
      %1960 = vmatpush.xpose.msra.mxu0 0.0
      %1961 = vmatpush.xpose.msra.mxu0 0.0
      %1962 = vmatpush.xpose.msra.mxu0 0.0
      %1963 = vmatpush.xpose.msra.mxu0 0.0
      %1964 = vmatpush.xpose.msra.mxu0 0.0
      %1965 = vmatpush.xpose.msra.mxu0 %v1948
      %1966 = vmatmul.f32.gmra.mxu0 %v1946
      %v1967 = vpop.f32.mrf.mxu0
      %v1968 = vadd.f32 0.0, %v1967
      %1969 = vdwg.mxu0
      %1970 = vst [vmem:[#allocation1] ss:$2 sm:$0xff] %v1042
      %v1971 = vld.sshfl [vmem:[#allocation1] sm:$0xff pattern:$0x75316420]
      %1972 = vrot.lane.b32.xlu0 %v1971, 120
      %v1973 = vpop.permute.xlu0 %1972
      %1974 = vrot.lane.b32.xlu0 %v1083, 120
      %v1975 = vpop.permute.xlu0 %1974
      %v1976 = vsel %vm1124, %v1973, 0
      %v1978 = vsel %vm1124, %v1975, 0
      %1980 = vmatpush.xpose.msra.mxu0 0.0
      %1981 = vmatpush.xpose.msra.mxu0 0.0
      %1982 = vmatpush.xpose.msra.mxu0 0.0
      %1983 = vmatpush.xpose.msra.mxu0 0.0
      %1984 = vmatpush.xpose.msra.mxu0 0.0
      %1985 = vmatpush.xpose.msra.mxu0 0.0
      %1986 = vmatpush.xpose.msra.mxu0 0.0
      %1987 = vmatpush.xpose.msra.mxu0 0.0
      %1988 = vmatpush.xpose.msra.mxu0 0.0
      %1989 = vmatpush.xpose.msra.mxu0 0.0
      %1990 = vmatpush.xpose.msra.mxu0 0.0
      %1991 = vmatpush.xpose.msra.mxu0 0.0
      %1992 = vmatpush.xpose.msra.mxu0 0.0
      %1993 = vmatpush.xpose.msra.mxu0 0.0
      %1994 = vmatpush.xpose.msra.mxu0 0.0
      %1995 = vmatpush.xpose.msra.mxu0 %v1978
      %1996 = vmatmul.f32.gmra.mxu0 %v1976
      %v1997 = vpop.f32.mrf.mxu0
      %v1998 = vadd.f32 0.0, %v1997
      %1999 = vdwg.mxu0
      %2000 = vst [vmem:[#allocation1] ss:$2 sm:$0xff] %v1114
      %v2001 = vld.sshfl [vmem:[#allocation1] sm:$0xff pattern:$0x75316420]
      %2002 = vrot.lane.b32.xlu0 %v2001, 120
      %v2003 = vpop.permute.xlu0 %2002
      %2004 = vrot.lane.b32.xlu0 %v1085, 120
      %v2005 = vpop.permute.xlu0 %2004
      %v2006 = vsel %vm1124, %v2003, 0
      %v2008 = vsel %vm1124, %v2005, 0
      %2010 = vmatpush.xpose.msra.mxu0 0.0
      %2011 = vmatpush.xpose.msra.mxu0 0.0
      %2012 = vmatpush.xpose.msra.mxu0 0.0
      %2013 = vmatpush.xpose.msra.mxu0 0.0
      %2014 = vmatpush.xpose.msra.mxu0 0.0
      %2015 = vmatpush.xpose.msra.mxu0 0.0
      %2016 = vmatpush.xpose.msra.mxu0 0.0
      %2017 = vmatpush.xpose.msra.mxu0 0.0
      %2018 = vmatpush.xpose.msra.mxu0 0.0
      %2019 = vmatpush.xpose.msra.mxu0 0.0
      %2020 = vmatpush.xpose.msra.mxu0 0.0
      %2021 = vmatpush.xpose.msra.mxu0 0.0
      %2022 = vmatpush.xpose.msra.mxu0 0.0
      %2023 = vmatpush.xpose.msra.mxu0 0.0
      %2024 = vmatpush.xpose.msra.mxu0 0.0
      %2025 = vmatpush.xpose.msra.mxu0 %v2008
      %2026 = vmatmul.f32.gmra.mxu0 %v2006
      %v2027 = vpop.f32.mrf.mxu0
      %v2028 = vadd.f32 0.0, %v2027
      %2029 = vdwg.mxu0
      %2030 = vst [vmem:[#allocation1] ss:$2 sm:$0xff] %v1045
      %v2031 = vld.sshfl [vmem:[#allocation1] sm:$0xff pattern:$0x75316420]
      %2032 = vrot.lane.b32.xlu0 %v2031, 120
      %v2033 = vpop.permute.xlu0 %2032
      %2034 = vrot.lane.b32.xlu0 %v1088, 120
      %v2035 = vpop.permute.xlu0 %2034
      %v2036 = vsel %vm1124, %v2033, 0
      %v2038 = vsel %vm1124, %v2035, 0
      %2040 = vmatpush.xpose.msra.mxu0 0.0
      %2041 = vmatpush.xpose.msra.mxu0 0.0
      %2042 = vmatpush.xpose.msra.mxu0 0.0
      %2043 = vmatpush.xpose.msra.mxu0 0.0
      %2044 = vmatpush.xpose.msra.mxu0 0.0
      %2045 = vmatpush.xpose.msra.mxu0 0.0
      %2046 = vmatpush.xpose.msra.mxu0 0.0
      %2047 = vmatpush.xpose.msra.mxu0 0.0
      %2048 = vmatpush.xpose.msra.mxu0 0.0
      %2049 = vmatpush.xpose.msra.mxu0 0.0
      %2050 = vmatpush.xpose.msra.mxu0 0.0
      %2051 = vmatpush.xpose.msra.mxu0 0.0
      %2052 = vmatpush.xpose.msra.mxu0 0.0
      %2053 = vmatpush.xpose.msra.mxu0 0.0
      %2054 = vmatpush.xpose.msra.mxu0 0.0
      %2055 = vmatpush.xpose.msra.mxu0 %v2038
      %2056 = vmatmul.f32.gmra.mxu0 %v2036
      %v2057 = vpop.f32.mrf.mxu0
      %v2058 = vadd.f32 0.0, %v2057
      %2059 = vdwg.mxu0
      %2060 = vst [vmem:[#allocation1] ss:$2 sm:$0xff] %v1115
      %v2061 = vld.sshfl [vmem:[#allocation1] sm:$0xff pattern:$0x75316420]
      %2062 = vrot.lane.b32.xlu0 %v2061, 120
      %v2063 = vpop.permute.xlu0 %2062
      %2064 = vrot.lane.b32.xlu0 %v1090, 120
      %v2065 = vpop.permute.xlu0 %2064
      %v2066 = vsel %vm1124, %v2063, 0
      %v2068 = vsel %vm1124, %v2065, 0
      %2070 = vmatpush.xpose.msra.mxu0 0.0
      %2071 = vmatpush.xpose.msra.mxu0 0.0
      %2072 = vmatpush.xpose.msra.mxu0 0.0
      %2073 = vmatpush.xpose.msra.mxu0 0.0
      %2074 = vmatpush.xpose.msra.mxu0 0.0
      %2075 = vmatpush.xpose.msra.mxu0 0.0
      %2076 = vmatpush.xpose.msra.mxu0 0.0
      %2077 = vmatpush.xpose.msra.mxu0 0.0
      %2078 = vmatpush.xpose.msra.mxu0 0.0
      %2079 = vmatpush.xpose.msra.mxu0 0.0
      %2080 = vmatpush.xpose.msra.mxu0 0.0
      %2081 = vmatpush.xpose.msra.mxu0 0.0
      %2082 = vmatpush.xpose.msra.mxu0 0.0
      %2083 = vmatpush.xpose.msra.mxu0 0.0
      %2084 = vmatpush.xpose.msra.mxu0 0.0
      %2085 = vmatpush.xpose.msra.mxu0 %v2068
      %2086 = vmatmul.f32.gmra.mxu0 %v2066
      %v2087 = vpop.f32.mrf.mxu0
      %v2088 = vadd.f32 0.0, %v2087
      %2089 = vdwg.mxu0
      %v2090 = vmul.f32 %v1938, 0.35355338
      %v2091 = vmul.f32 %v1968, 0.35355338
      %v2092 = vmul.f32 %v1998, 0.35355338
      %v2093 = vmul.f32 %v2028, 0.35355338
      %v2094 = vmul.f32 %v2058, 0.35355338
      %v2095 = vmul.f32 %v2088, 0.35355338
      %2096 = vst [vmem:[#allocation1] ss:$2 sm:$0xff] %v1040
      %v2097 = vld.sshfl [vmem:[#allocation1] sm:$0xff pattern:$0x75316420]
      %2098 = vrot.lane.b32.xlu0 %v2097, 120
      %v2099 = vpop.permute.xlu0 %2098
      %2100 = vst [vmem:[#allocation1] ss:$2 sm:$0xff] %v1102
      %v2101 = vld.sshfl [vmem:[#allocation1] sm:$0xff pattern:$0x75316420]
      %2102 = vrot.lane.b32.xlu0 %v2101, 120
      %v2103 = vpop.permute.xlu0 %2102
      %v2104 = vsel %vm1124, %v2099, 0
      %v2106 = vsel %vm1124, %v2103, 0
      %2108 = vmatpush.xpose.msra.mxu0 0.0
      %2109 = vmatpush.xpose.msra.mxu0 0.0
      %2110 = vmatpush.xpose.msra.mxu0 0.0
      %2111 = vmatpush.xpose.msra.mxu0 0.0
      %2112 = vmatpush.xpose.msra.mxu0 0.0
      %2113 = vmatpush.xpose.msra.mxu0 0.0
      %2114 = vmatpush.xpose.msra.mxu0 0.0
      %2115 = vmatpush.xpose.msra.mxu0 0.0
      %2116 = vmatpush.xpose.msra.mxu0 0.0
      %2117 = vmatpush.xpose.msra.mxu0 0.0
      %2118 = vmatpush.xpose.msra.mxu0 0.0
      %2119 = vmatpush.xpose.msra.mxu0 0.0
      %2120 = vmatpush.xpose.msra.mxu0 0.0
      %2121 = vmatpush.xpose.msra.mxu0 0.0
      %2122 = vmatpush.xpose.msra.mxu0 0.0
      %2123 = vmatpush.xpose.msra.mxu0 %v2106
      %2124 = vmatmul.f32.gmra.mxu0 %v2104
      %v2125 = vpop.f32.mrf.mxu0
      %v2126 = vadd.f32 0.0, %v2125
      %2127 = vdwg.mxu0
      %2128 = vst [vmem:[#allocation1] ss:$2 sm:$0xff] %v1113
      %v2129 = vld.sshfl [vmem:[#allocation1] sm:$0xff pattern:$0x75316420]
      %2130 = vrot.lane.b32.xlu0 %v2129, 120
      %v2131 = vpop.permute.xlu0 %2130
      %2132 = vst [vmem:[#allocation1] ss:$2 sm:$0xff] %v1119
      %v2133 = vld.sshfl [vmem:[#allocation1] sm:$0xff pattern:$0x75316420]
      %2134 = vrot.lane.b32.xlu0 %v2133, 120
      %v2135 = vpop.permute.xlu0 %2134
      %v2136 = vsel %vm1124, %v2131, 0
      %v2138 = vsel %vm1124, %v2135, 0
      %2140 = vmatpush.xpose.msra.mxu0 0.0
      %2141 = vmatpush.xpose.msra.mxu0 0.0
      %2142 = vmatpush.xpose.msra.mxu0 0.0
      %2143 = vmatpush.xpose.msra.mxu0 0.0
      %2144 = vmatpush.xpose.msra.mxu0 0.0
      %2145 = vmatpush.xpose.msra.mxu0 0.0
      %2146 = vmatpush.xpose.msra.mxu0 0.0
      %2147 = vmatpush.xpose.msra.mxu0 0.0
      %2148 = vmatpush.xpose.msra.mxu0 0.0
      %2149 = vmatpush.xpose.msra.mxu0 0.0
      %2150 = vmatpush.xpose.msra.mxu0 0.0
      %2151 = vmatpush.xpose.msra.mxu0 0.0
      %2152 = vmatpush.xpose.msra.mxu0 0.0
      %2153 = vmatpush.xpose.msra.mxu0 0.0
      %2154 = vmatpush.xpose.msra.mxu0 0.0
      %2155 = vmatpush.xpose.msra.mxu0 %v2138
      %2156 = vmatmul.f32.gmra.mxu0 %v2136
      %v2157 = vpop.f32.mrf.mxu0
      %v2158 = vadd.f32 0.0, %v2157
      %2159 = vdwg.mxu0
      %2160 = vst [vmem:[#allocation1] ss:$2 sm:$0xff] %v1042
      %v2161 = vld.sshfl [vmem:[#allocation1] sm:$0xff pattern:$0x75316420]
      %2162 = vrot.lane.b32.xlu0 %v2161, 120
      %v2163 = vpop.permute.xlu0 %2162
      %2164 = vst [vmem:[#allocation1] ss:$2 sm:$0xff] %v1104
      %v2165 = vld.sshfl [vmem:[#allocation1] sm:$0xff pattern:$0x75316420]
      %2166 = vrot.lane.b32.xlu0 %v2165, 120
      %v2167 = vpop.permute.xlu0 %2166
      %v2168 = vsel %vm1124, %v2163, 0
      %v2170 = vsel %vm1124, %v2167, 0
      %2172 = vmatpush.xpose.msra.mxu0 0.0
      %2173 = vmatpush.xpose.msra.mxu0 0.0
      %2174 = vmatpush.xpose.msra.mxu0 0.0
      %2175 = vmatpush.xpose.msra.mxu0 0.0
      %2176 = vmatpush.xpose.msra.mxu0 0.0
      %2177 = vmatpush.xpose.msra.mxu0 0.0
      %2178 = vmatpush.xpose.msra.mxu0 0.0
      %2179 = vmatpush.xpose.msra.mxu0 0.0
      %2180 = vmatpush.xpose.msra.mxu0 0.0
      %2181 = vmatpush.xpose.msra.mxu0 0.0
      %2182 = vmatpush.xpose.msra.mxu0 0.0
      %2183 = vmatpush.xpose.msra.mxu0 0.0
      %2184 = vmatpush.xpose.msra.mxu0 0.0
      %2185 = vmatpush.xpose.msra.mxu0 0.0
      %2186 = vmatpush.xpose.msra.mxu0 0.0
      %2187 = vmatpush.xpose.msra.mxu0 %v2170
      %2188 = vmatmul.f32.gmra.mxu0 %v2168
      %v2189 = vpop.f32.mrf.mxu0
      %v2190 = vadd.f32 0.0, %v2189
      %2191 = vdwg.mxu0
      %2192 = vst [vmem:[#allocation1] ss:$2 sm:$0xff] %v1114
      %v2193 = vld.sshfl [vmem:[#allocation1] sm:$0xff pattern:$0x75316420]
      %2194 = vrot.lane.b32.xlu0 %v2193, 120
      %v2195 = vpop.permute.xlu0 %2194
      %2196 = vst [vmem:[#allocation1] ss:$2 sm:$0xff] %v1120
      %v2197 = vld.sshfl [vmem:[#allocation1] sm:$0xff pattern:$0x75316420]
      %2198 = vrot.lane.b32.xlu0 %v2197, 120
      %v2199 = vpop.permute.xlu0 %2198
      %v2200 = vsel %vm1124, %v2195, 0
      %v2202 = vsel %vm1124, %v2199, 0
      %2204 = vmatpush.xpose.msra.mxu0 0.0
      %2205 = vmatpush.xpose.msra.mxu0 0.0
      %2206 = vmatpush.xpose.msra.mxu0 0.0
      %2207 = vmatpush.xpose.msra.mxu0 0.0
      %2208 = vmatpush.xpose.msra.mxu0 0.0
      %2209 = vmatpush.xpose.msra.mxu0 0.0
      %2210 = vmatpush.xpose.msra.mxu0 0.0
      %2211 = vmatpush.xpose.msra.mxu0 0.0
      %2212 = vmatpush.xpose.msra.mxu0 0.0
      %2213 = vmatpush.xpose.msra.mxu0 0.0
      %2214 = vmatpush.xpose.msra.mxu0 0.0
      %2215 = vmatpush.xpose.msra.mxu0 0.0
      %2216 = vmatpush.xpose.msra.mxu0 0.0
      %2217 = vmatpush.xpose.msra.mxu0 0.0
      %2218 = vmatpush.xpose.msra.mxu0 0.0
      %2219 = vmatpush.xpose.msra.mxu0 %v2202
      %2220 = vmatmul.f32.gmra.mxu0 %v2200
      %v2221 = vpop.f32.mrf.mxu0
      %v2222 = vadd.f32 0.0, %v2221
      %2223 = vdwg.mxu0
      %2224 = vst [vmem:[#allocation1] ss:$2 sm:$0xff] %v1045
      %v2225 = vld.sshfl [vmem:[#allocation1] sm:$0xff pattern:$0x75316420]
      %2226 = vrot.lane.b32.xlu0 %v2225, 120
      %v2227 = vpop.permute.xlu0 %2226
      %2228 = vst [vmem:[#allocation1] ss:$2 sm:$0xff] %v1107
      %v2229 = vld.sshfl [vmem:[#allocation1] sm:$0xff pattern:$0x75316420]
      %2230 = vrot.lane.b32.xlu0 %v2229, 120
      %v2231 = vpop.permute.xlu0 %2230
      %v2232 = vsel %vm1124, %v2227, 0
      %v2234 = vsel %vm1124, %v2231, 0
      %2236 = vmatpush.xpose.msra.mxu0 0.0
      %2237 = vmatpush.xpose.msra.mxu0 0.0
      %2238 = vmatpush.xpose.msra.mxu0 0.0
      %2239 = vmatpush.xpose.msra.mxu0 0.0
      %2240 = vmatpush.xpose.msra.mxu0 0.0
      %2241 = vmatpush.xpose.msra.mxu0 0.0
      %2242 = vmatpush.xpose.msra.mxu0 0.0
      %2243 = vmatpush.xpose.msra.mxu0 0.0
      %2244 = vmatpush.xpose.msra.mxu0 0.0
      %2245 = vmatpush.xpose.msra.mxu0 0.0
      %2246 = vmatpush.xpose.msra.mxu0 0.0
      %2247 = vmatpush.xpose.msra.mxu0 0.0
      %2248 = vmatpush.xpose.msra.mxu0 0.0
      %2249 = vmatpush.xpose.msra.mxu0 0.0
      %2250 = vmatpush.xpose.msra.mxu0 0.0
      %2251 = vmatpush.xpose.msra.mxu0 %v2234
      %2252 = vmatmul.f32.gmra.mxu0 %v2232
      %v2253 = vpop.f32.mrf.mxu0
      %v2254 = vadd.f32 0.0, %v2253
      %2255 = vdwg.mxu0
      %2256 = vst [vmem:[#allocation1] ss:$2 sm:$0xff] %v1115
      %v2257 = vld.sshfl [vmem:[#allocation1] sm:$0xff pattern:$0x75316420]
      %2258 = vrot.lane.b32.xlu0 %v2257, 120
      %v2259 = vpop.permute.xlu0 %2258
      %2260 = vst [vmem:[#allocation1] ss:$2 sm:$0xff] %v1121
      %v2261 = vld.sshfl [vmem:[#allocation1] sm:$0xff pattern:$0x75316420]
      %2262 = vrot.lane.b32.xlu0 %v2261, 120
      %v2263 = vpop.permute.xlu0 %2262
      %v2264 = vsel %vm1124, %v2259, 0
      %v2266 = vsel %vm1124, %v2263, 0
      %2268 = vmatpush.xpose.msra.mxu0 0.0
      %2269 = vmatpush.xpose.msra.mxu0 0.0
      %2270 = vmatpush.xpose.msra.mxu0 0.0
      %2271 = vmatpush.xpose.msra.mxu0 0.0
      %2272 = vmatpush.xpose.msra.mxu0 0.0
      %2273 = vmatpush.xpose.msra.mxu0 0.0
      %2274 = vmatpush.xpose.msra.mxu0 0.0
      %2275 = vmatpush.xpose.msra.mxu0 0.0
      %2276 = vmatpush.xpose.msra.mxu0 0.0
      %2277 = vmatpush.xpose.msra.mxu0 0.0
      %2278 = vmatpush.xpose.msra.mxu0 0.0
      %2279 = vmatpush.xpose.msra.mxu0 0.0
      %2280 = vmatpush.xpose.msra.mxu0 0.0
      %2281 = vmatpush.xpose.msra.mxu0 0.0
      %2282 = vmatpush.xpose.msra.mxu0 0.0
      %2283 = vmatpush.xpose.msra.mxu0 %v2266
      %2284 = vmatmul.f32.gmra.mxu0 %v2264
      %v2285 = vpop.f32.mrf.mxu0
      %v2286 = vadd.f32 0.0, %v2285
      %2287 = vdwg.mxu0
      %v2288 = vmul.f32 %v2126, 0.35355338
      %v2289 = vmul.f32 %v2158, 0.35355338
      %v2290 = vmul.f32 %v2190, 0.35355338
      %v2291 = vmul.f32 %v2222, 0.35355338
      %v2292 = vmul.f32 %v2254, 0.35355338
      %v2293 = vmul.f32 %v2286, 0.35355338
      %v2294 = vsel %vm1419, %v2090, -inf
      %2295 = vmax.xlane.f32.xlu0 %v2294
      %v2296 = vpop.xlane.xlu0 %2295
      %v2297 = vsel %vm1419, %v2091, -inf
      %2298 = vmax.xlane.f32.xlu0 %v2297
      %v2299 = vpop.xlane.xlu0 %2298
      %v2300 = vsel %vm1419, %v2092, -inf
      %2301 = vmax.xlane.f32.xlu0 %v2300
      %v2302 = vpop.xlane.xlu0 %2301
      %v2303 = vsel %vm1419, %v2093, -inf
      %2304 = vmax.xlane.f32.xlu0 %v2303
      %v2305 = vpop.xlane.xlu0 %2304
      %v2306 = vsel %vm1419, %v2094, -inf
      %2307 = vmax.xlane.f32.xlu0 %v2306
      %v2308 = vpop.xlane.xlu0 %2307
      %v2309 = vsel %vm1419, %v2095, -inf
      %2310 = vmax.xlane.f32.xlu0 %v2309
      %v2311 = vpop.xlane.xlu0 %2310
      %v2312 = vsel %vm1438, %v2288, -inf
      %2313 = vmax.xlane.f32.xlu0 %v2312
      %v2314 = vpop.xlane.xlu0 %2313
      %v2315 = vsel %vm1438, %v2289, -inf
      %2316 = vmax.xlane.f32.xlu0 %v2315
      %v2317 = vpop.xlane.xlu0 %2316
      %v2318 = vsel %vm1438, %v2290, -inf
      %2319 = vmax.xlane.f32.xlu0 %v2318
      %v2320 = vpop.xlane.xlu0 %2319
      %v2321 = vsel %vm1438, %v2291, -inf
      %2322 = vmax.xlane.f32.xlu0 %v2321
      %v2323 = vpop.xlane.xlu0 %2322
      %v2324 = vsel %vm1438, %v2292, -inf
      %2325 = vmax.xlane.f32.xlu0 %v2324
      %v2326 = vpop.xlane.xlu0 %2325
      %v2327 = vsel %vm1438, %v2293, -inf
      %2328 = vmax.xlane.f32.xlu0 %v2327
      %v2329 = vpop.xlane.xlu0 %2328
      %v2330 = vmax.f32 %v2296, %v2314
      %v2331 = vmax.f32 %v2299, %v2317
      %v2332 = vmax.f32 %v2302, %v2320
      %v2333 = vmax.f32 %v2305, %v2323
      %v2334 = vmax.f32 %v2308, %v2326
      %v2335 = vmax.f32 %v2311, %v2329
      %v2336 = vsub.f32 %v2090, %v2330
      %v2337 = vsub.f32 %v2091, %v2331
      %v2338 = vsub.f32 %v2092, %v2332
      %v2339 = vsub.f32 %v2093, %v2333
      %v2340 = vsub.f32 %v2094, %v2334
      %v2341 = vsub.f32 %v2095, %v2335
      %v2342 = vmul.f32 %v2336, 1.442695
      %v2343 = vpow.pop %v2342
      %v2344 = vmul.f32 %v2337, 1.442695
      %v2345 = vpow.pop %v2344
      %v2346 = vmul.f32 %v2338, 1.442695
      %v2347 = vpow.pop %v2346
      %v2348 = vmul.f32 %v2339, 1.442695
      %v2349 = vpow.pop %v2348
      %v2350 = vmul.f32 %v2340, 1.442695
      %v2351 = vpow.pop %v2350
      %v2352 = vmul.f32 %v2341, 1.442695
      %v2353 = vpow.pop %v2352
      %v2354 = vsub.f32 %v2288, %v2330
      %v2355 = vsub.f32 %v2289, %v2331
      %v2356 = vsub.f32 %v2290, %v2332
      %v2357 = vsub.f32 %v2291, %v2333
      %v2358 = vsub.f32 %v2292, %v2334
      %v2359 = vsub.f32 %v2293, %v2335
      %v2360 = vmul.f32 %v2354, 1.442695
      %v2361 = vpow.pop %v2360
      %v2362 = vmul.f32 %v2355, 1.442695
      %v2363 = vpow.pop %v2362
      %v2364 = vmul.f32 %v2356, 1.442695
      %v2365 = vpow.pop %v2364
      %v2366 = vmul.f32 %v2357, 1.442695
      %v2367 = vpow.pop %v2366
      %v2368 = vmul.f32 %v2358, 1.442695
      %v2369 = vpow.pop %v2368
      %v2370 = vmul.f32 %v2359, 1.442695
      %v2371 = vpow.pop %v2370
      %v2372 = vsel %vm1419, %v2343, 0.0
      %2373 = vadd.xlane.f32.xlu0 %v2372
      %v2374 = vpop.xlane.xlu0 %2373
      %v2375 = vsel %vm1419, %v2345, 0.0
      %2376 = vadd.xlane.f32.xlu0 %v2375
      %v2377 = vpop.xlane.xlu0 %2376
      %v2378 = vsel %vm1419, %v2347, 0.0
      %2379 = vadd.xlane.f32.xlu0 %v2378
      %v2380 = vpop.xlane.xlu0 %2379
      %v2381 = vsel %vm1419, %v2349, 0.0
      %2382 = vadd.xlane.f32.xlu0 %v2381
      %v2383 = vpop.xlane.xlu0 %2382
      %v2384 = vsel %vm1419, %v2351, 0.0
      %2385 = vadd.xlane.f32.xlu0 %v2384
      %v2386 = vpop.xlane.xlu0 %2385
      %v2387 = vsel %vm1419, %v2353, 0.0
      %2388 = vadd.xlane.f32.xlu0 %v2387
      %v2389 = vpop.xlane.xlu0 %2388
      %v2390 = vsel %vm1438, %v2361, 0.0
      %2391 = vadd.xlane.f32.xlu0 %v2390
      %v2392 = vpop.xlane.xlu0 %2391
      %v2393 = vsel %vm1438, %v2363, 0.0
      %2394 = vadd.xlane.f32.xlu0 %v2393
      %v2395 = vpop.xlane.xlu0 %2394
      %v2396 = vsel %vm1438, %v2365, 0.0
      %2397 = vadd.xlane.f32.xlu0 %v2396
      %v2398 = vpop.xlane.xlu0 %2397
      %v2399 = vsel %vm1438, %v2367, 0.0
      %2400 = vadd.xlane.f32.xlu0 %v2399
      %v2401 = vpop.xlane.xlu0 %2400
      %v2402 = vsel %vm1438, %v2369, 0.0
      %2403 = vadd.xlane.f32.xlu0 %v2402
      %v2404 = vpop.xlane.xlu0 %2403
      %v2405 = vsel %vm1438, %v2371, 0.0
      %2406 = vadd.xlane.f32.xlu0 %v2405
      %v2407 = vpop.xlane.xlu0 %2406
      %v2408 = vadd.f32 %v2374, %v2392
      %v2409 = vadd.f32 %v2377, %v2395
      %v2410 = vadd.f32 %v2380, %v2398
      %v2411 = vadd.f32 %v2383, %v2401
      %v2412 = vadd.f32 %v2386, %v2404
      %v2413 = vadd.f32 %v2389, %v2407
      %2414 = vst [vmem:[#allocation1] ss:$2 sm:$0xff] %v1102
      %v2415 = vld.sshfl [vmem:[#allocation1] sm:$0xff pattern:$0x75316420]
      %2416 = vrot.lane.b32.xlu0 %v2415, 104
      %v2417 = vpop.permute.xlu0 %2416
      %v2419 = vsel %vm1545, %v2361, 0
      %v2421 = vsel %vm1549, %v2417, 0
      %2423 = vmatpush.msra.mxu0 0.0
      %2424 = vmatpush.msra.mxu0 0.0
      %2425 = vmatpush.msra.mxu0 0.0
      %2426 = vmatpush.msra.mxu0 0.0
      %2427 = vmatpush.msra.mxu0 0.0
      %2428 = vmatpush.msra.mxu0 0.0
      %2429 = vmatpush.msra.mxu0 0.0
      %2430 = vmatpush.msra.mxu0 0.0
      %2431 = vmatpush.msra.mxu0 0.0
      %2432 = vmatpush.msra.mxu0 0.0
      %2433 = vmatpush.msra.mxu0 0.0
      %2434 = vmatpush.msra.mxu0 0.0
      %2435 = vmatpush.msra.mxu0 0.0
      %2436 = vmatpush.msra.mxu0 0.0
      %2437 = vmatpush.msra.mxu0 0.0
      %2438 = vmatpush.msra.mxu0 %v2421
      %2439 = vmatmul.f32.gmra.mxu0 %v2419
      %v2440 = vpop.f32.mrf.mxu0
      %v2441 = vadd.f32 0.0, %v2440
      %2442 = vdwg.mxu0
      %2443 = vst [vmem:[#allocation1] ss:$2 sm:$0xff] %v1119
      %v2444 = vld.sshfl [vmem:[#allocation1] sm:$0xff pattern:$0x75316420]
      %2445 = vrot.lane.b32.xlu0 %v2444, 104
      %v2446 = vpop.permute.xlu0 %2445
      %v2448 = vsel %vm1545, %v2363, 0
      %v2450 = vsel %vm1549, %v2446, 0
      %2452 = vmatpush.msra.mxu0 0.0
      %2453 = vmatpush.msra.mxu0 0.0
      %2454 = vmatpush.msra.mxu0 0.0
      %2455 = vmatpush.msra.mxu0 0.0
      %2456 = vmatpush.msra.mxu0 0.0
      %2457 = vmatpush.msra.mxu0 0.0
      %2458 = vmatpush.msra.mxu0 0.0
      %2459 = vmatpush.msra.mxu0 0.0
      %2460 = vmatpush.msra.mxu0 0.0
      %2461 = vmatpush.msra.mxu0 0.0
      %2462 = vmatpush.msra.mxu0 0.0
      %2463 = vmatpush.msra.mxu0 0.0
      %2464 = vmatpush.msra.mxu0 0.0
      %2465 = vmatpush.msra.mxu0 0.0
      %2466 = vmatpush.msra.mxu0 0.0
      %2467 = vmatpush.msra.mxu0 %v2450
      %2468 = vmatmul.f32.gmra.mxu0 %v2448
      %v2469 = vpop.f32.mrf.mxu0
      %v2470 = vadd.f32 0.0, %v2469
      %2471 = vdwg.mxu0
      %2472 = vst [vmem:[#allocation1] ss:$2 sm:$0xff] %v1104
      %v2473 = vld.sshfl [vmem:[#allocation1] sm:$0xff pattern:$0x75316420]
      %2474 = vrot.lane.b32.xlu0 %v2473, 104
      %v2475 = vpop.permute.xlu0 %2474
      %v2477 = vsel %vm1545, %v2365, 0
      %v2479 = vsel %vm1549, %v2475, 0
      %2481 = vmatpush.msra.mxu0 0.0
      %2482 = vmatpush.msra.mxu0 0.0
      %2483 = vmatpush.msra.mxu0 0.0
      %2484 = vmatpush.msra.mxu0 0.0
      %2485 = vmatpush.msra.mxu0 0.0
      %2486 = vmatpush.msra.mxu0 0.0
      %2487 = vmatpush.msra.mxu0 0.0
      %2488 = vmatpush.msra.mxu0 0.0
      %2489 = vmatpush.msra.mxu0 0.0
      %2490 = vmatpush.msra.mxu0 0.0
      %2491 = vmatpush.msra.mxu0 0.0
      %2492 = vmatpush.msra.mxu0 0.0
      %2493 = vmatpush.msra.mxu0 0.0
      %2494 = vmatpush.msra.mxu0 0.0
      %2495 = vmatpush.msra.mxu0 0.0
      %2496 = vmatpush.msra.mxu0 %v2479
      %2497 = vmatmul.f32.gmra.mxu0 %v2477
      %v2498 = vpop.f32.mrf.mxu0
      %v2499 = vadd.f32 0.0, %v2498
      %2500 = vdwg.mxu0
      %2501 = vst [vmem:[#allocation1] ss:$2 sm:$0xff] %v1120
      %v2502 = vld.sshfl [vmem:[#allocation1] sm:$0xff pattern:$0x75316420]
      %2503 = vrot.lane.b32.xlu0 %v2502, 104
      %v2504 = vpop.permute.xlu0 %2503
      %v2506 = vsel %vm1545, %v2367, 0
      %v2508 = vsel %vm1549, %v2504, 0
      %2510 = vmatpush.msra.mxu0 0.0
      %2511 = vmatpush.msra.mxu0 0.0
      %2512 = vmatpush.msra.mxu0 0.0
      %2513 = vmatpush.msra.mxu0 0.0
      %2514 = vmatpush.msra.mxu0 0.0
      %2515 = vmatpush.msra.mxu0 0.0
      %2516 = vmatpush.msra.mxu0 0.0
      %2517 = vmatpush.msra.mxu0 0.0
      %2518 = vmatpush.msra.mxu0 0.0
      %2519 = vmatpush.msra.mxu0 0.0
      %2520 = vmatpush.msra.mxu0 0.0
      %2521 = vmatpush.msra.mxu0 0.0
      %2522 = vmatpush.msra.mxu0 0.0
      %2523 = vmatpush.msra.mxu0 0.0
      %2524 = vmatpush.msra.mxu0 0.0
      %2525 = vmatpush.msra.mxu0 %v2508
      %2526 = vmatmul.f32.gmra.mxu0 %v2506
      %v2527 = vpop.f32.mrf.mxu0
      %v2528 = vadd.f32 0.0, %v2527
      %2529 = vdwg.mxu0
      %2530 = vst [vmem:[#allocation1] ss:$2 sm:$0xff] %v1107
      %v2531 = vld.sshfl [vmem:[#allocation1] sm:$0xff pattern:$0x75316420]
      %2532 = vrot.lane.b32.xlu0 %v2531, 104
      %v2533 = vpop.permute.xlu0 %2532
      %v2535 = vsel %vm1545, %v2369, 0
      %v2537 = vsel %vm1549, %v2533, 0
      %2539 = vmatpush.msra.mxu0 0.0
      %2540 = vmatpush.msra.mxu0 0.0
      %2541 = vmatpush.msra.mxu0 0.0
      %2542 = vmatpush.msra.mxu0 0.0
      %2543 = vmatpush.msra.mxu0 0.0
      %2544 = vmatpush.msra.mxu0 0.0
      %2545 = vmatpush.msra.mxu0 0.0
      %2546 = vmatpush.msra.mxu0 0.0
      %2547 = vmatpush.msra.mxu0 0.0
      %2548 = vmatpush.msra.mxu0 0.0
      %2549 = vmatpush.msra.mxu0 0.0
      %2550 = vmatpush.msra.mxu0 0.0
      %2551 = vmatpush.msra.mxu0 0.0
      %2552 = vmatpush.msra.mxu0 0.0
      %2553 = vmatpush.msra.mxu0 0.0
      %2554 = vmatpush.msra.mxu0 %v2537
      %2555 = vmatmul.f32.gmra.mxu0 %v2535
      %v2556 = vpop.f32.mrf.mxu0
      %v2557 = vadd.f32 0.0, %v2556
      %2558 = vdwg.mxu0
      %2559 = vst [vmem:[#allocation1] ss:$2 sm:$0xff] %v1121
      %v2560 = vld.sshfl [vmem:[#allocation1] sm:$0xff pattern:$0x75316420]
      %2561 = vrot.lane.b32.xlu0 %v2560, 104
      %v2562 = vpop.permute.xlu0 %2561
      %v2564 = vsel %vm1545, %v2371, 0
      %v2566 = vsel %vm1549, %v2562, 0
      %2568 = vmatpush.msra.mxu0 0.0
      %2569 = vmatpush.msra.mxu0 0.0
      %2570 = vmatpush.msra.mxu0 0.0
      %2571 = vmatpush.msra.mxu0 0.0
      %2572 = vmatpush.msra.mxu0 0.0
      %2573 = vmatpush.msra.mxu0 0.0
      %2574 = vmatpush.msra.mxu0 0.0
      %2575 = vmatpush.msra.mxu0 0.0
      %2576 = vmatpush.msra.mxu0 0.0
      %2577 = vmatpush.msra.mxu0 0.0
      %2578 = vmatpush.msra.mxu0 0.0
      %2579 = vmatpush.msra.mxu0 0.0
      %2580 = vmatpush.msra.mxu0 0.0
      %2581 = vmatpush.msra.mxu0 0.0
      %2582 = vmatpush.msra.mxu0 0.0
      %2583 = vmatpush.msra.mxu0 %v2566
      %2584 = vmatmul.f32.gmra.mxu0 %v2564
      %v2585 = vpop.f32.mrf.mxu0
      %v2586 = vadd.f32 0.0, %v2585
      %2587 = vdwg.mxu0
      %2588 = vrot.lane.b32.xlu0 %v1078, 104
      %v2589 = vpop.permute.xlu0 %2588
      %v2592 = vsel %vm1124, %v2343, 0
      %2594 = vmatpush.msra.mxu0 0.0
      %2595 = vmatpush.msra.mxu0 0.0
      %2596 = vmatpush.msra.mxu0 0.0
      %2597 = vmatpush.msra.mxu0 0.0
      %2598 = vmatpush.msra.mxu0 0.0
      %2599 = vmatpush.msra.mxu0 0.0
      %2600 = vmatpush.msra.mxu0 0.0
      %2601 = vmatpush.msra.mxu0 0.0
      %2602 = vmatpush.msra.mxu0 0.0
      %2603 = vmatpush.msra.mxu0 0.0
      %2604 = vmatpush.msra.mxu0 0.0
      %2605 = vmatpush.msra.mxu0 0.0
      %2606 = vmatpush.msra.mxu0 0.0
      %2607 = vmatpush.msra.mxu0 0.0
      %2608 = vmatpush.msra.mxu0 0.0
      %2609 = vmatpush.msra.mxu0 %v2589
      %2610 = vmatmul.f32.gmra.mxu0 %v2592
      %v2611 = vpop.f32.mrf.mxu0
      %v2612 = vadd.f32 %v2441, %v2611
      %2613 = vdwg.mxu0
      %2614 = vrot.lane.b32.xlu0 %v1080, 104
      %v2615 = vpop.permute.xlu0 %2614
      %v2618 = vsel %vm1124, %v2345, 0
      %2620 = vmatpush.msra.mxu0 0.0
      %2621 = vmatpush.msra.mxu0 0.0
      %2622 = vmatpush.msra.mxu0 0.0
      %2623 = vmatpush.msra.mxu0 0.0
      %2624 = vmatpush.msra.mxu0 0.0
      %2625 = vmatpush.msra.mxu0 0.0
      %2626 = vmatpush.msra.mxu0 0.0
      %2627 = vmatpush.msra.mxu0 0.0
      %2628 = vmatpush.msra.mxu0 0.0
      %2629 = vmatpush.msra.mxu0 0.0
      %2630 = vmatpush.msra.mxu0 0.0
      %2631 = vmatpush.msra.mxu0 0.0
      %2632 = vmatpush.msra.mxu0 0.0
      %2633 = vmatpush.msra.mxu0 0.0
      %2634 = vmatpush.msra.mxu0 0.0
      %2635 = vmatpush.msra.mxu0 %v2615
      %2636 = vmatmul.f32.gmra.mxu0 %v2618
      %v2637 = vpop.f32.mrf.mxu0
      %v2638 = vadd.f32 %v2470, %v2637
      %2639 = vdwg.mxu0
      %2640 = vrot.lane.b32.xlu0 %v1083, 104
      %v2641 = vpop.permute.xlu0 %2640
      %v2644 = vsel %vm1124, %v2347, 0
      %2646 = vmatpush.msra.mxu0 0.0
      %2647 = vmatpush.msra.mxu0 0.0
      %2648 = vmatpush.msra.mxu0 0.0
      %2649 = vmatpush.msra.mxu0 0.0
      %2650 = vmatpush.msra.mxu0 0.0
      %2651 = vmatpush.msra.mxu0 0.0
      %2652 = vmatpush.msra.mxu0 0.0
      %2653 = vmatpush.msra.mxu0 0.0
      %2654 = vmatpush.msra.mxu0 0.0
      %2655 = vmatpush.msra.mxu0 0.0
      %2656 = vmatpush.msra.mxu0 0.0
      %2657 = vmatpush.msra.mxu0 0.0
      %2658 = vmatpush.msra.mxu0 0.0
      %2659 = vmatpush.msra.mxu0 0.0
      %2660 = vmatpush.msra.mxu0 0.0
      %2661 = vmatpush.msra.mxu0 %v2641
      %2662 = vmatmul.f32.gmra.mxu0 %v2644
      %v2663 = vpop.f32.mrf.mxu0
      %v2664 = vadd.f32 %v2499, %v2663
      %2665 = vdwg.mxu0
      %2666 = vrot.lane.b32.xlu0 %v1085, 104
      %v2667 = vpop.permute.xlu0 %2666
      %v2670 = vsel %vm1124, %v2349, 0
      %2672 = vmatpush.msra.mxu0 0.0
      %2673 = vmatpush.msra.mxu0 0.0
      %2674 = vmatpush.msra.mxu0 0.0
      %2675 = vmatpush.msra.mxu0 0.0
      %2676 = vmatpush.msra.mxu0 0.0
      %2677 = vmatpush.msra.mxu0 0.0
      %2678 = vmatpush.msra.mxu0 0.0
      %2679 = vmatpush.msra.mxu0 0.0
      %2680 = vmatpush.msra.mxu0 0.0
      %2681 = vmatpush.msra.mxu0 0.0
      %2682 = vmatpush.msra.mxu0 0.0
      %2683 = vmatpush.msra.mxu0 0.0
      %2684 = vmatpush.msra.mxu0 0.0
      %2685 = vmatpush.msra.mxu0 0.0
      %2686 = vmatpush.msra.mxu0 0.0
      %2687 = vmatpush.msra.mxu0 %v2667
      %2688 = vmatmul.f32.gmra.mxu0 %v2670
      %v2689 = vpop.f32.mrf.mxu0
      %v2690 = vadd.f32 %v2528, %v2689
      %2691 = vdwg.mxu0
      %2692 = vrot.lane.b32.xlu0 %v1088, 104
      %v2693 = vpop.permute.xlu0 %2692
      %v2696 = vsel %vm1124, %v2351, 0
      %2698 = vmatpush.msra.mxu0 0.0
      %2699 = vmatpush.msra.mxu0 0.0
      %2700 = vmatpush.msra.mxu0 0.0
      %2701 = vmatpush.msra.mxu0 0.0
      %2702 = vmatpush.msra.mxu0 0.0
      %2703 = vmatpush.msra.mxu0 0.0
      %2704 = vmatpush.msra.mxu0 0.0
      %2705 = vmatpush.msra.mxu0 0.0
      %2706 = vmatpush.msra.mxu0 0.0
      %2707 = vmatpush.msra.mxu0 0.0
      %2708 = vmatpush.msra.mxu0 0.0
      %2709 = vmatpush.msra.mxu0 0.0
      %2710 = vmatpush.msra.mxu0 0.0
      %2711 = vmatpush.msra.mxu0 0.0
      %2712 = vmatpush.msra.mxu0 0.0
      %2713 = vmatpush.msra.mxu0 %v2693
      %2714 = vmatmul.f32.gmra.mxu0 %v2696
      %v2715 = vpop.f32.mrf.mxu0
      %v2716 = vadd.f32 %v2557, %v2715
      %2717 = vdwg.mxu0
      %2718 = vrot.lane.b32.xlu0 %v1090, 104
      %v2719 = vpop.permute.xlu0 %2718
      %v2722 = vsel %vm1124, %v2353, 0
      %2724 = vmatpush.msra.mxu0 0.0
      %2725 = vmatpush.msra.mxu0 0.0
      %2726 = vmatpush.msra.mxu0 0.0
      %2727 = vmatpush.msra.mxu0 0.0
      %2728 = vmatpush.msra.mxu0 0.0
      %2729 = vmatpush.msra.mxu0 0.0
      %2730 = vmatpush.msra.mxu0 0.0
      %2731 = vmatpush.msra.mxu0 0.0
      %2732 = vmatpush.msra.mxu0 0.0
      %2733 = vmatpush.msra.mxu0 0.0
      %2734 = vmatpush.msra.mxu0 0.0
      %2735 = vmatpush.msra.mxu0 0.0
      %2736 = vmatpush.msra.mxu0 0.0
      %2737 = vmatpush.msra.mxu0 0.0
      %2738 = vmatpush.msra.mxu0 0.0
      %2739 = vmatpush.msra.mxu0 %v2719
      %2740 = vmatmul.f32.gmra.mxu0 %v2722
      %v2741 = vpop.f32.mrf.mxu0
      %v2742 = vadd.f32 %v2586, %v2741
      %2743 = vdwg.mxu0
      %v2744 = vrcp.pop %v2408
      %v2745 = vrcp.pop %v2409
      %v2746 = vrcp.pop %v2410
      %v2747 = vrcp.pop %v2411
      %v2748 = vrcp.pop %v2412
      %v2749 = vrcp.pop %v2413
      %v2750 = vmul.f32 %v2612, %v2744
      %v2751 = vmul.f32 %v2638, %v2745
      %v2752 = vmul.f32 %v2664, %v2746
      %v2753 = vmul.f32 %v2690, %v2747
      %v2754 = vmul.f32 %v2716, %v2748
      %v2755 = vmul.f32 %v2742, %v2749
      %2762 = vst [vmem:[#allocation1] ss:$2 sm:$0xff] %v2750
      %s2763 = scalar_lea.vmem [#allocation1], 1
      %2764 = vst [vmem:[%s2763] ss:$2 sm:$0xff] %v2751
      %s2765 = scalar_lea.vmem [#allocation1], 16
      %2766 = vst [vmem:[%s2765] ss:$2 sm:$0xff] %v2752
      %s2767 = scalar_lea.vmem [#allocation1], 17
      %2768 = vst [vmem:[%s2767] ss:$2 sm:$0xff] %v2753
      %s2769 = scalar_lea.vmem [#allocation1], 32
      %2770 = vst [vmem:[%s2769] ss:$2 sm:$0xff] %v2754
      %s2771 = scalar_lea.vmem [#allocation1], 33
      %2772 = vst [vmem:[%s2771] ss:$2 sm:$0xff] %v2755
      %v2773 = vld.sshfl [vmem:[#allocation1] sm:$0xff pattern:$0x75316420]
      %v2774 = vld.sshfl [vmem:[#allocation1 + $0x10] sm:$0xff pattern:$0x75316420]
      %v2775 = vld.sshfl [vmem:[#allocation1 + $0x20] sm:$0xff pattern:$0x75316420]
      %v2779 = vpack.c.bf16 %v2774, %v2773
      %v2780 = vpack.c.bf16 %v2775, %v2775
      %v2782 = vsel %vm1124, %v2779, 0
      %v2785 = vsel %vm1124, %v2780, 0
      %v2788 = vsel %vm1549, %v1123, 0
      %2790 = vmatpush.bf16.msra.mxu0 0
      %2791 = vmatpush.bf16.msra.mxu0 0
      %2792 = vmatpush.bf16.msra.mxu0 0
      %2793 = vmatpush.bf16.msra.mxu0 0
      %2794 = vmatpush.bf16.msra.mxu0 0
      %2795 = vmatpush.bf16.msra.mxu0 0
      %2796 = vmatpush.bf16.msra.mxu0 0
      %2797 = vmatpush.bf16.msra.mxu0 %v2788
      %2798 = vmatmul.bf16.gmra.mxu0 %v2782
      %v2799 = vpop.f32.mrf.mxu0
      %v2800 = vadd.f32 0.0, %v2799
      %v2801 = vpop.f32.mrf.mxu0
      %v2802 = vadd.f32 0.0, %v2801
      %2803 = vmatmul.bf16.gmra.mxu0 %v2785
      %v2804 = vpop.f32.mrf.mxu0
      %v2805 = vadd.f32 0.0, %v2804
      %v2806 = vpop.f32.mrf.mxu0
      %2807 = vdwg.mxu0
      %v2809 = vsel %vm1124, %v1908, 0
      %v2812 = vsel %vm1124, %v1909, 0
      %v2815 = vsel %vm1549, %v1122, 0
      %2817 = vmatpush.bf16.msra.mxu0 0
      %2818 = vmatpush.bf16.msra.mxu0 0
      %2819 = vmatpush.bf16.msra.mxu0 0
      %2820 = vmatpush.bf16.msra.mxu0 0
      %2821 = vmatpush.bf16.msra.mxu0 0
      %2822 = vmatpush.bf16.msra.mxu0 0
      %2823 = vmatpush.bf16.msra.mxu0 0
      %2824 = vmatpush.bf16.msra.mxu0 %v2815
      %2825 = vmatmul.bf16.gmra.mxu0 %v2809
      %v2826 = vpop.f32.mrf.mxu0
      %v2827 = vadd.f32 %v2800, %v2826
      %v2828 = vpop.f32.mrf.mxu0
      %v2829 = vadd.f32 %v2802, %v2828
      %2830 = vmatmul.bf16.gmra.mxu0 %v2812
      %v2831 = vpop.f32.mrf.mxu0
      %v2832 = vadd.f32 %v2805, %v2831
      %v2833 = vpop.f32.mrf.mxu0
      %2834 = vdwg.mxu0
      %v2835 = vadd.f32 %v765, %v2827
      %v2836 = vadd.f32 %v766, %v2829
      %v2837 = vadd.f32 %v767, %v2832
      %v2838 = vld [vmem:[%s733] sm:$0x1]
      %v2839 = vld [vmem:[%s736] sm:$0x1]
      %v2840 = vsel %vm776, %v2835, 0.0
      %2841 = vadd.xlane.f32.xlu0 %v2840
      %v2842 = vpop.xlane.xlu0 %2841
      %v2843 = vsel %vm776, %v2836, 0.0
      %2844 = vadd.xlane.f32.xlu0 %v2843
      %v2845 = vpop.xlane.xlu0 %2844
      %v2846 = vsel %vm776, %v2837, 0.0
      %2847 = vadd.xlane.f32.xlu0 %v2846
      %v2848 = vpop.xlane.xlu0 %2847
      %v2849 = vmul.f32 %v2842, %v801
      %v2850 = vmul.f32 %v2845, %v801
      %v2851 = vmul.f32 %v2848, %v801
      %v2852 = vsub.f32 %v2835, %v2849
      %v2853 = vsub.f32 %v2836, %v2850
      %v2854 = vsub.f32 %v2837, %v2851
      %v2855 = vmul.f32 %v2852, %v2852
      %v2856 = vmul.f32 %v2853, %v2853
      %v2857 = vmul.f32 %v2854, %v2854
      %v2858 = vsel %vm776, %v2855, 0.0
      %2859 = vadd.xlane.f32.xlu0 %v2858
      %v2860 = vpop.xlane.xlu0 %2859
      %v2861 = vsel %vm776, %v2856, 0.0
      %2862 = vadd.xlane.f32.xlu0 %v2861
      %v2863 = vpop.xlane.xlu0 %2862
      %v2864 = vsel %vm776, %v2857, 0.0
      %2865 = vadd.xlane.f32.xlu0 %v2864
      %v2866 = vpop.xlane.xlu0 %2865
      %v2867 = vmul.f32 %v2860, %v801
      %v2868 = vmul.f32 %v2863, %v801
      %v2869 = vmul.f32 %v2866, %v801
      %v2870 = vadd.f32 %v2867, 1e-05
      %v2871 = vadd.f32 %v2868, 1e-05
      %v2872 = vadd.f32 %v2869, 1e-05
      %v2873 = vrsqrt.pop %v2870
      %v2874 = vmul.f32 %v2873, %v2870
      %v2875 = vmul.f32 %v2874, %v2873
      %v2876 = vmul.f32 0.5, %v2875
      %v2877 = vsub.f32 1.5, %v2876
      %v2878 = vmul.f32 %v2873, %v2877
      %vm2879 = vweird.f32 %v2870
      %vm2880 = vweird.f32 %v2873
      %vm2881 = vmor %vm2879, %vm2880
      %v2882 = vsel %vm2881, %v2873, %v2878
      %v2883 = vrsqrt.pop %v2871
      %v2884 = vmul.f32 %v2883, %v2871
      %v2885 = vmul.f32 %v2884, %v2883
      %v2886 = vmul.f32 0.5, %v2885
      %v2887 = vsub.f32 1.5, %v2886
      %v2888 = vmul.f32 %v2883, %v2887
      %vm2889 = vweird.f32 %v2871
      %vm2890 = vweird.f32 %v2883
      %vm2891 = vmor %vm2889, %vm2890
      %v2892 = vsel %vm2891, %v2883, %v2888
      %v2893 = vrsqrt.pop %v2872
      %v2894 = vmul.f32 %v2893, %v2872
      %v2895 = vmul.f32 %v2894, %v2893
      %v2896 = vmul.f32 0.5, %v2895
      %v2897 = vsub.f32 1.5, %v2896
      %v2898 = vmul.f32 %v2893, %v2897
      %vm2899 = vweird.f32 %v2872
      %vm2900 = vweird.f32 %v2893
      %vm2901 = vmor %vm2899, %vm2900
      %v2902 = vsel %vm2901, %v2893, %v2898
      %v2903 = vmul.f32 %v2852, %v2882
      %v2904 = vmul.f32 %v2853, %v2892
      %v2905 = vmul.f32 %v2854, %v2902
      %v2907 = vperm.slane %v2838, 0
      %v2909 = vmul.f32 %v2903, %v2907
      %v2910 = vmul.f32 %v2904, %v2907
      %v2911 = vmul.f32 %v2905, %v2907
      %v2913 = vperm.slane %v2839, 0
      %v2915 = vadd.f32 %v2909, %v2913
      %v2916 = vadd.f32 %v2910, %v2913
      %v2917 = vadd.f32 %v2911, %v2913
      %v2918 = vpack.c.bf16 %v2916, %v2915
      %v2919 = vpack.c.bf16 %v2917, %v2917
      %v2920 = vld [vmem:[%s741] sm:$0xf]
      %v2921 = vld [vmem:[%s741 + $0x4] sm:$0xf]
      %v2922 = vld [vmem:[%s744] sm:$0x1]
      %v2924 = vperm.slane %v2922, 0
      %v2928 = vunpack.c.l.b16 %v2920
      %v2929 = vunpack.c.l.b16 %v2921
      %v2930 = vpack.c.b16 %v2929, %v2928
      %v2933 = vsel %vm776, %v2918, 0
      %v2936 = vsel %vm776, %v2919, 0
      %2938 = vmatpush.bf16.msra.mxu0 0
      %2939 = vmatpush.bf16.msra.mxu0 0
      %2940 = vmatpush.bf16.msra.mxu0 0
      %2941 = vmatpush.bf16.msra.mxu0 0
      %2942 = vmatpush.bf16.msra.mxu0 0
      %2943 = vmatpush.bf16.msra.mxu0 0
      %2944 = vmatpush.bf16.msra.mxu0 0
      %2945 = vmatpush.bf16.msra.mxu0 %v2930
      %2946 = vmatmul.bf16.gmra.mxu0 %v2933
      %v2947 = vpop.f32.mrf.mxu0
      %v2948 = vadd.f32 %v2924, %v2947
      %v2949 = vpop.f32.mrf.mxu0
      %v2950 = vadd.f32 %v2924, %v2949
      %2951 = vmatmul.bf16.gmra.mxu0 %v2936
      %v2952 = vpop.f32.mrf.mxu0
      %v2953 = vadd.f32 %v2924, %v2952
      %v2954 = vpop.f32.mrf.mxu0
      %2955 = vdwg.mxu0
      %v2956 = vmul.f32 %v2948, %v2948
      %v2957 = vmul.f32 %v2950, %v2950
      %v2958 = vmul.f32 %v2953, %v2953
      %v2959 = vmul.f32 %v2948, %v2956
      %v2960 = vmul.f32 %v2950, %v2957
      %v2961 = vmul.f32 %v2953, %v2958
      %v2962 = vmul.f32 %v2959, 0.044715
      %v2963 = vmul.f32 %v2960, 0.044715
      %v2964 = vmul.f32 %v2961, 0.044715
      %v2965 = vadd.f32 %v2948, %v2962
      %v2966 = vadd.f32 %v2950, %v2963
      %v2967 = vadd.f32 %v2953, %v2964
      %v2968 = vmul.f32 %v2965, 0.7978846
      %v2969 = vmul.f32 %v2966, 0.7978846
      %v2970 = vmul.f32 %v2967, 0.7978846
      %v2971 = vtanh.pop %v2968
      %v2972 = vtanh.pop %v2969
      %v2973 = vtanh.pop %v2970
      %v2974 = vadd.f32 %v2971, 1.0
      %v2975 = vadd.f32 %v2972, 1.0
      %v2976 = vadd.f32 %v2973, 1.0
      %v2977 = vmul.f32 %v2974, 0.5
      %v2978 = vmul.f32 %v2975, 0.5
      %v2979 = vmul.f32 %v2976, 0.5
      %v2980 = vmul.f32 %v2948, %v2977
      %v2981 = vmul.f32 %v2950, %v2978
      %v2982 = vmul.f32 %v2953, %v2979
      %v2983 = vpack.c.bf16 %v2981, %v2980
      %v2984 = vpack.c.bf16 %v2982, %v2982
      %v2985 = vld [vmem:[%s749] sm:$0xf]
      %v2986 = vld [vmem:[%s749 + $0x4] sm:$0xf]
      %v2987 = vld [vmem:[%s749 + $0x8] sm:$0xf]
      %v2988 = vld [vmem:[%s749 + $0xc] sm:$0xf]
      %v2989 = vld [vmem:[%s749 + $0x10] sm:$0xf]
      %v2990 = vld [vmem:[%s749 + $0x14] sm:$0xf]
      %v2991 = vld [vmem:[%s749 + $0x18] sm:$0xf]
      %v2992 = vld [vmem:[%s749 + $0x1c] sm:$0xf]
      %v3001 = vunpack.c.l.b16 %v2985
      %v3002 = vunpack.c.l.b16 %v2986
      %v3003 = vunpack.c.l.b16 %v2987
      %v3004 = vunpack.c.l.b16 %v2988
      %v3005 = vunpack.c.l.b16 %v2989
      %v3006 = vunpack.c.l.b16 %v2990
      %v3007 = vunpack.c.l.b16 %v2991
      %v3008 = vunpack.c.l.b16 %v2992
      %v3009 = vpack.c.b16 %v3002, %v3001
      %v3010 = vpack.c.b16 %v3004, %v3003
      %v3011 = vpack.c.b16 %v3006, %v3005
      %v3012 = vpack.c.b16 %v3008, %v3007
      %vm3017 = vcmask 523264
      %v3019 = vsel %vm3017, %v2983, 0
      %v3022 = vsel %vm3017, %v2984, 0
      %3024 = vmatpush.bf16.msra.mxu0 0
      %3025 = vmatpush.bf16.msra.mxu0 0
      %3026 = vmatpush.bf16.msra.mxu0 0
      %3027 = vmatpush.bf16.msra.mxu0 0
      %3028 = vmatpush.bf16.msra.mxu0 %v3012
      %3029 = vmatpush.bf16.msra.mxu0 %v3011
      %3030 = vmatpush.bf16.msra.mxu0 %v3010
      %3031 = vmatpush.bf16.msra.mxu0 %v3009
      %3032 = vmatmul.bf16.gmra.mxu0 %v3019
      %v3033 = vpop.f32.mrf.mxu0
      %v3034 = vadd.f32 0.0, %v3033
      %v3035 = vpop.f32.mrf.mxu0
      %v3036 = vadd.f32 0.0, %v3035
      %3037 = vmatmul.bf16.gmra.mxu0 %v3022
      %v3038 = vpop.f32.mrf.mxu0
      %v3039 = vadd.f32 0.0, %v3038
      %v3040 = vpop.f32.mrf.mxu0
      %3041 = vdwg.mxu0
      %v3042 = vadd.f32 %v2835, %v3034
      %v3043 = vadd.f32 %v2836, %v3036
      %v3044 = vadd.f32 %v2837, %v3039
      %v3045 = vld [vmem:[%s752] sm:$0x1]
      %v3047 = vperm.slane %v3045, 0
      %v3049 = vadd.f32 %v3042, %v3047
      %v3050 = vadd.f32 %v3043, %v3047
      %v3051 = vadd.f32 %v3044, %v3047
      %3052 = vst.msk [vmem:[#allocation2] sm:$0xff] %vm776, %v3049
      %3053 = vst.msk [vmem:[#allocation2 + $0x8] sm:$0xff] %vm776, %v3050
      %3054 = vst.msk [vmem:[#allocation2 + $0x10] sm:$0xff] %vm776, %v3051
      %p3055 = scmp.eq.s32.totalorder %s29, 1
      // Predicated region
      $region97: #{palme_forward.4} parent=91 // pred_check
        %p3056 = pneg %p3055
      $region98: #{palme_forward.4} parent=91 // pred_check_branch
        %3058 = sbr.rel (%p3056) target = $region100
      $region99: #{palme_forward.4} parent=91 // pred_region
        %v3059 = vld [vmem:[%s15] sm:$0x1]
        %v3060 = vld [vmem:[%s16] sm:$0x1]
        %v3061 = vsel %vm776, %v3049, 0.0
        %3062 = vadd.xlane.f32.xlu0 %v3061
        %v3063 = vpop.xlane.xlu0 %3062
        %v3064 = vsel %vm776, %v3050, 0.0
        %3065 = vadd.xlane.f32.xlu0 %v3064
        %v3066 = vpop.xlane.xlu0 %3065
        %v3067 = vsel %vm776, %v3051, 0.0
        %3068 = vadd.xlane.f32.xlu0 %v3067
        %v3069 = vpop.xlane.xlu0 %3068
        %v3070 = vmul.f32 %v3063, %v801
        %v3071 = vmul.f32 %v3066, %v801
        %v3072 = vmul.f32 %v3069, %v801
        %v3073 = vsub.f32 %v3049, %v3070
        %v3074 = vsub.f32 %v3050, %v3071
        %v3075 = vsub.f32 %v3051, %v3072
        %v3076 = vmul.f32 %v3073, %v3073
        %v3077 = vmul.f32 %v3074, %v3074
        %v3078 = vmul.f32 %v3075, %v3075
        %v3079 = vsel %vm776, %v3076, 0.0
        %3080 = vadd.xlane.f32.xlu0 %v3079
        %v3081 = vpop.xlane.xlu0 %3080
        %v3082 = vsel %vm776, %v3077, 0.0
        %3083 = vadd.xlane.f32.xlu0 %v3082
        %v3084 = vpop.xlane.xlu0 %3083
        %v3085 = vsel %vm776, %v3078, 0.0
        %3086 = vadd.xlane.f32.xlu0 %v3085
        %v3087 = vpop.xlane.xlu0 %3086
        %v3088 = vmul.f32 %v3081, %v801
        %v3089 = vmul.f32 %v3084, %v801
        %v3090 = vmul.f32 %v3087, %v801
        %v3091 = vadd.f32 %v3088, 1e-05
        %v3092 = vadd.f32 %v3089, 1e-05
        %v3093 = vadd.f32 %v3090, 1e-05
        %v3094 = vrsqrt.pop %v3091
        %v3095 = vmul.f32 %v3094, %v3091
        %v3096 = vmul.f32 %v3095, %v3094
        %v3097 = vmul.f32 0.5, %v3096
        %v3098 = vsub.f32 1.5, %v3097
        %v3099 = vmul.f32 %v3094, %v3098
        %vm3100 = vweird.f32 %v3091
        %vm3101 = vweird.f32 %v3094
        %vm3102 = vmor %vm3100, %vm3101
        %v3103 = vsel %vm3102, %v3094, %v3099
        %v3104 = vrsqrt.pop %v3092
        %v3105 = vmul.f32 %v3104, %v3092
        %v3106 = vmul.f32 %v3105, %v3104
        %v3107 = vmul.f32 0.5, %v3106
        %v3108 = vsub.f32 1.5, %v3107
        %v3109 = vmul.f32 %v3104, %v3108
        %vm3110 = vweird.f32 %v3092
        %vm3111 = vweird.f32 %v3104
        %vm3112 = vmor %vm3110, %vm3111
        %v3113 = vsel %vm3112, %v3104, %v3109
        %v3114 = vrsqrt.pop %v3093
        %v3115 = vmul.f32 %v3114, %v3093
        %v3116 = vmul.f32 %v3115, %v3114
        %v3117 = vmul.f32 0.5, %v3116
        %v3118 = vsub.f32 1.5, %v3117
        %v3119 = vmul.f32 %v3114, %v3118
        %vm3120 = vweird.f32 %v3093
        %vm3121 = vweird.f32 %v3114
        %vm3122 = vmor %vm3120, %vm3121
        %v3123 = vsel %vm3122, %v3114, %v3119
        %v3124 = vmul.f32 %v3073, %v3103
        %v3125 = vmul.f32 %v3074, %v3113
        %v3126 = vmul.f32 %v3075, %v3123
        %v3128 = vperm.slane %v3059, 0
        %v3130 = vmul.f32 %v3124, %v3128
        %v3131 = vmul.f32 %v3125, %v3128
        %v3132 = vmul.f32 %v3126, %v3128
        %v3134 = vperm.slane %v3060, 0
        %v3136 = vadd.f32 %v3130, %v3134
        %v3137 = vadd.f32 %v3131, %v3134
        %v3138 = vadd.f32 %v3132, %v3134
        %v3139 = vpack.c.bf16 %v3137, %v3136
        %v3140 = vpack.c.bf16 %v3138, %v3138
        %v3141 = vld [vmem:[%s17] sm:$0xf]
        %v3142 = vld [vmem:[%s17 + $0x4] sm:$0xf]
        %v3145 = vunpack.c.l.b16 %v3141
        %v3146 = vunpack.c.l.b16 %v3142
        %v3147 = vpack.c.b16 %v3146, %v3145
        %v3150 = vsel %vm776, %v3139, 0
        %v3153 = vsel %vm776, %v3140, 0
        %3155 = vmatpush.bf16.msra.mxu0 0
        %3156 = vmatpush.bf16.msra.mxu0 0
        %3157 = vmatpush.bf16.msra.mxu0 0
        %3158 = vmatpush.bf16.msra.mxu0 0
        %3159 = vmatpush.bf16.msra.mxu0 0
        %3160 = vmatpush.bf16.msra.mxu0 0
        %3161 = vmatpush.bf16.msra.mxu0 0
        %3162 = vmatpush.bf16.msra.mxu0 %v3147
        %3163 = vmatmul.bf16.gmra.mxu0 %v3150
        %v3164 = vpop.f32.mrf.mxu0
        %v3165 = vadd.f32 0.0, %v3164
        %v3166 = vpop.f32.mrf.mxu0
        %v3167 = vadd.f32 0.0, %v3166
        %3168 = vmatmul.bf16.gmra.mxu0 %v3153
        %v3169 = vpop.f32.mrf.mxu0
        %v3170 = vadd.f32 0.0, %v3169
        %v3171 = vpop.f32.mrf.mxu0
        %3172 = vdwg.mxu0
        %vm3173 = vcmask 261120
        %3174 = vst.msk [vmem:[%s18] sm:$0xff] %vm3173, %v3165
        %3175 = vst.msk [vmem:[%s18 + $0x8] sm:$0xff] %vm3173, %v3167
        %3176 = vst.msk [vmem:[%s18 + $0x10] sm:$0xff] %vm3173, %v3170
      $region100: #{palme_forward.4} parent=91 // pred_fallthru
        _
      // Predicated region
      $region101: #{palme_forward.4} parent=91 // pred_check
        %p3177 = pneg %p485
      $region102: #{palme_forward.4} parent=91 // pred_check_branch
        %3179 = sbr.rel (%p3177) target = $region104
      $region103: #{palme_forward.4} parent=91 // pred_region
        _
      $region104: #{palme_forward.4} parent=91 // pred_fallthru
        _
      // Predicated region
      $region105: #{palme_forward.4} parent=91 // pred_check
        %p3180 = pneg %p485
      $region106: #{palme_forward.4} parent=91 // pred_check_branch
        %3182 = sbr.rel (%p3180) target = $region108
      $region107: #{palme_forward.4} parent=91 // pred_region
        _
      $region108: #{palme_forward.4} parent=91 // pred_fallthru
        _
    $region92: #{palme_forward.4} parent=5 // pred_fallthru
      _
    %p3183 = scmp.le.s32.totalorder 2, %s24
    // Predicated region
    $region109: #{palme_forward.4} parent=5 // pred_check
      %p3184 = pneg %p3183
    $region110: #{palme_forward.4} parent=5 // pred_check_branch
      %3186 = sbr.rel (%p3184) target = $region112
    $region111: #{palme_forward.4} parent=5 // pred_region
      %s3187 = ssub.s32 %s24, 2
    $region112: #{palme_forward.4} parent=5 // pred_fallthru
      _
  $region6: #{palme_forward.4} parent=0 // loop_footer
    %s28 = sadd.s32 1, %s24
  $region7: #{palme_forward.4} parent=0 // loop_footer_branch
    %23 = sbr.rel target = $region3
  $region8: #{palme_forward.4} parent=0 // loop_exit
    _

</llo_original>
